<compile_context>
chip_gen: v7x
topology: tpu7x:2x2x1
jax: 0.10.0
libtpu: 0.0.40
codegen_flags: <defaults>
</compile_context>

<pallas_src>
import functools

import jax
import jax.numpy as jnp
from jax.experimental import pallas as pl
from jax.experimental.pallas import tpu as pltpu

NUM_HEADS = 3       # num_heads = 3 in the source script
OUT_DIM = 39        # hard-coded in GAT.__init__ -> MultiHeadGATLayer(..., 39, num_heads)
FEAT_DIM = 39       # n_dim == e_dim == out_dim == G.edata['h'].shape[1] in the source script
LEAKY_SLOPE = 0.2   # TODO(synk): EdgeGATConv is not defined in the provided source; a standard
                    #             edge-attention GAT head (LeakyReLU(0.2), softmax over in-edges,
                    #             node-message aggregation) is implemented instead.
PAD = 128           # lane padding for node-feature / per-head output columns
ATT_PAD = 8         # padded column count for the stacked per-head attention dot vectors
NEG_INF = -1e30


def _head_aggregate(s_e, s_dst_col, s_src_row, adj, zn_h, slope):
    """One attention head: score -> leaky_relu -> masked softmax over src -> alpha @ zn."""
    score = s_dst_col + s_src_row + s_e                       # (TI, N)
    score = jnp.where(score > 0, score, slope * score)        # leaky relu (VPU)
    masked = jnp.where(adj > 0, score, jnp.full_like(score, NEG_INF))
    mx = jnp.max(masked, axis=-1, keepdims=True)
    p = jnp.exp(masked - mx) * adj                            # exact zeros off-graph / isolated
    denom = jnp.sum(p, axis=-1, keepdims=True)
    alpha = p * pl.reciprocal(denom + 1e-30, approx=True)     # EUP reciprocal, 0-in-degree safe
    return jnp.dot(alpha, zn_h, preferred_element_type=jnp.float32)   # (TI, PAD)  MXU


def _gat_layer1_kernel(e_ref, adj_ref, x_ref, wn_ref, was_ref, wad_ref, wea_ref,
                       z_ref, se2_ref, *, num_heads, slope, tile_i):
    """Layer 1 (encoder) for a tile of destination rows + layer-2 edge-score pre-pass."""
    i0 = pl.multiple_of(pl.program_id(0) * tile_i, tile_i)

    e_blk = e_ref[...]                                        # (TI, N, De)
    adj = adj_ref[...]                                        # (TI, N)
    x = x_ref[...]                                            # (N, PAD)
    wea = wea_ref[...]                                        # (2H, De)  rows 0..H-1: layer 1

    # Head-batched MXU matmuls (one matmul each, all heads at once).
    zn_all = jnp.dot(x, wn_ref[...], preferred_element_type=jnp.float32)       # (N, H*PAD)
    s_src_all = jnp.dot(x, was_ref[...], preferred_element_type=jnp.float32)   # (N, ATT_PAD)
    x_dst = x_ref[pl.ds(i0, tile_i), :]                                        # (TI, PAD)
    s_dst_all = jnp.dot(x_dst, wad_ref[...], preferred_element_type=jnp.float32)  # (TI, ATT_PAD)

    acc = jnp.zeros(z_ref.shape, jnp.float32)                 # (TI, PAD)
    for h in range(num_heads):                                # static unroll (3 heads)
        # Folded edge scores for this head (layer-1 column h).
        w1 = wea[h:h + 1, :]                                  # (1, De)
        s_e1 = jnp.sum(e_blk * w1[None, :, :], axis=-1)       # (TI, N)
        # Layer-2's edge scores -- computed here so `e` is DMA'd from HBM exactly once.
        w2 = wea[num_heads + h:num_heads + h + 1, :]
        se2_ref[h] = jnp.sum(e_blk * w2[None, :, :], axis=-1)

        zn_h = zn_all[:, h * PAD:(h + 1) * PAD]               # (N, PAD) 128-aligned lane slice
        s_src_row = jnp.transpose(s_src_all[:, h:h + 1])      # (1, N)
        s_dst_col = s_dst_all[:, h:h + 1]                     # (TI, 1)
        acc = acc + _head_aggregate(s_e1, s_dst_col, s_src_row, adj, zn_h, slope)

    z_ref[...] = acc * (1.0 / num_heads)                      # mean over heads, lane-dense store


def _gat_layer2_kernel(se_ref, adj_ref, x_ref, wn_ref, was_ref, wad_ref,
                       out_ref, *, num_heads, slope, tile_i):
    """Layer 2 (gene) for a tile of destination rows; edge scores come from the pre-pass."""
    i0 = pl.multiple_of(pl.program_id(0) * tile_i, tile_i)

    adj = adj_ref[...]                                        # (TI, N)
    x = x_ref[...]                                            # (N, PAD)

    zn_all = jnp.dot(x, wn_ref[...], preferred_element_type=jnp.float32)       # (N, H*PAD)
    s_src_all = jnp.dot(x, was_ref[...], preferred_element_type=jnp.float32)   # (N, ATT_PAD)
    x_dst = x_ref[pl.ds(i0, tile_i), :]
    s_dst_all = jnp.dot(x_dst, wad_ref[...], preferred_element_type=jnp.float32)

    acc = jnp.zeros(out_ref.shape, jnp.float32)
    for h in range(num_heads):
        s_e = se_ref[h]                                       # (TI, N)
        zn_h = zn_all[:, h * PAD:(h + 1) * PAD]
        s_src_row = jnp.transpose(s_src_all[:, h:h + 1])
        s_dst_col = s_dst_all[:, h:h + 1]
        acc = acc + _head_aggregate(s_e, s_dst_col, s_src_row, adj, zn_h, slope)

    out_ref[...] = acc * (1.0 / num_heads)


def _pack_layer_params(params, in_dim, out_dim, num_heads):
    """Fold + pad weights (weight-only work, done once in the wrapper).

    Returns:
      wn_cat : (PAD, H*PAD)   per-head Wn, zero-padded, 128-aligned per head
      wa_src : (PAD, ATT_PAD) column h = Wn_h @ a_src_h   (so x @ wa_src = s_src for all heads)
      wa_dst : (PAD, ATT_PAD) column h = Wn_h @ a_dst_h
      wea    : (H, De)        row h = We_h @ a_e_h        (folded edge-attention vector)
    """
    wn, we, a_src, a_e, a_dst = params
    wn_cat = jnp.zeros((PAD, num_heads * PAD), jnp.float32)
    wa_src = jnp.zeros((PAD, ATT_PAD), jnp.float32)
    wa_dst = jnp.zeros((PAD, ATT_PAD), jnp.float32)
    wea_rows = []
    for h in range(num_heads):
        wn_cat = wn_cat.at[:in_dim, h * PAD:h * PAD + out_dim].set(wn[h])
        wa_src = wa_src.at[:in_dim, h].set(wn[h] @ a_src[h, 0])
        wa_dst = wa_dst.at[:in_dim, h].set(wn[h] @ a_dst[h, 0])
        wea_rows.append(we[h] @ a_e[h, 0])
    wea = jnp.stack(wea_rows, axis=0)
    return wn_cat, wa_src, wa_dst, wea


def model_forward(h, adj, e, enc_params, gene_params):
    """Model.forward: z = Encoder(g, h, e);  z_g = gene(g, z, e)."""
    n, dn = h.shape
    de = e.shape[-1]
    hp = NUM_HEADS

    # Destination-row tile (grid axis is 'parallel' -> megacore / v7x 2nd TC can take tiles).
    tile_i = 8 if n % 8 == 0 else n
    grid = (n // tile_i,)

    wn1, was1, wad1, wea1 = _pack_layer_params(enc_params, dn, OUT_DIM, hp)
    wn2, was2, wad2, wea2 = _pack_layer_params(gene_params, OUT_DIM, OUT_DIM, hp)
    wea6 = jnp.concatenate([wea1, wea2], axis=0)               # (2H, De): both layers' folds

    x1 = jnp.zeros((n, PAD), jnp.float32).at[:, :dn].set(h)    # lane-pad node features

    # ---- layer 1 (reads e once, also emits layer-2 edge scores) ----
    cost1 = pl.CostEstimate(
        flops=int(2 * n * PAD * (hp * PAD) + 4 * n * PAD * ATT_PAD
                  + 2 * 2 * hp * n * n * de + 2 * hp * n * n * PAD),
        transcendentals=int(hp * n * n + hp * n),
        bytes_accessed=int(4 * (n * n * de + n * n + n * PAD + PAD * hp * PAD
                                + 2 * PAD * ATT_PAD + 2 * hp * de + n * PAD + hp * n * n)),
    )
    z_pad, se2 = pl.pallas_call(
        functools.partial(_gat_layer1_kernel, num_heads=hp, slope=LEAKY_SLOPE, tile_i=tile_i),
        grid=grid,
        in_specs=[
            pl.BlockSpec((tile_i, n, de), lambda i: (i, 0, 0)),     # e (dst-row tile)
            pl.BlockSpec((tile_i, n), lambda i: (i, 0)),            # adj (dst-row tile)
            pl.BlockSpec((n, PAD), lambda i: (0, 0)),               # x (all nodes)
            pl.BlockSpec((PAD, hp * PAD), lambda i: (0, 0)),        # Wn (all heads)
            pl.BlockSpec((PAD, ATT_PAD), lambda i: (0, 0)),         # WA_src
            pl.BlockSpec((PAD, ATT_PAD), lambda i: (0, 0)),         # WA_dst
            pl.BlockSpec((2 * hp, de), lambda i: (0, 0)),           # folded edge vectors
        ],
        out_specs=(
            pl.BlockSpec((tile_i, PAD), lambda i: (i, 0)),          # z
            pl.BlockSpec((hp, tile_i, n), lambda i: (0, i, 0)),     # layer-2 edge scores
        ),
        out_shape=(
            jax.ShapeDtypeStruct((n, PAD), jnp.float32),
            jax.ShapeDtypeStruct((hp, n, n), jnp.float32),
        ),
        compiler_params=pltpu.CompilerParams(dimension_semantics=("parallel",)),
        cost_estimate=cost1,
    )(e, adj, x1, wn1, was1, wad1, wea6)

    # ---- layer 2 (never touches e) ----
    cost2 = pl.CostEstimate(
        flops=int(2 * n * PAD * (hp * PAD) + 4 * n * PAD * ATT_PAD + 2 * hp * n * n * PAD),
        transcendentals=int(hp * n * n + hp * n),
        bytes_accessed=int(4 * (hp * n * n + n * n + n * PAD + PAD * hp * PAD
                                + 2 * PAD * ATT_PAD + n * PAD)),
    )
    z_g_pad = pl.pallas_call(
        functools.partial(_gat_layer2_kernel, num_heads=hp, slope=LEAKY_SLOPE, tile_i=tile_i),
        grid=grid,
        in_specs=[
            pl.BlockSpec((hp, tile_i, n), lambda i: (0, i, 0)),     # precomputed edge scores
            pl.BlockSpec((tile_i, n), lambda i: (i, 0)),            # adj
            pl.BlockSpec((n, PAD), lambda i: (0, 0)),               # z (all nodes)
            pl.BlockSpec((PAD, hp * PAD), lambda i: (0, 0)),
            pl.BlockSpec((PAD, ATT_PAD), lambda i: (0, 0)),
            pl.BlockSpec((PAD, ATT_PAD), lambda i: (0, 0)),
        ],
        out_specs=pl.BlockSpec((tile_i, PAD), lambda i: (i, 0)),
        out_shape=jax.ShapeDtypeStruct((n, PAD), jnp.float32),
        compiler_params=pltpu.CompilerParams(dimension_semantics=("parallel",)),
        cost_estimate=cost2,
    )(se2, adj, z_pad, wn2, was2, wad2)

    # TODO(synk): for very large N (v7x 64 MiB VMEM), stream `e` in bf16 and tile N_src as well.
    return z_pad[:, :OUT_DIM], z_g_pad[:, :OUT_DIM]


def init_gat_params(key, in_dim, e_dim, out_dim, num_heads):
    ks = jax.random.split(key, 5)
    wn = jax.random.normal(ks[0], (num_heads, in_dim, out_dim), jnp.float32) / jnp.sqrt(in_dim)
    we = jax.random.normal(ks[1], (num_heads, e_dim, out_dim), jnp.float32) / jnp.sqrt(e_dim)
    a_src = jax.random.normal(ks[2], (num_heads, 1, out_dim), jnp.float32) / jnp.sqrt(out_dim)
    a_e = jax.random.normal(ks[3], (num_heads, 1, out_dim), jnp.float32) / jnp.sqrt(out_dim)
    a_dst = jax.random.normal(ks[4], (num_heads, 1, out_dim), jnp.float32) / jnp.sqrt(out_dim)
    return wn, we, a_src, a_e, a_dst


if __name__ == "__main__":
    key = jax.random.PRNGKey(0)
    k_h, k_e, k_enc, k_gene = jax.random.split(key, 4)

    N = 16  # small synthetic graph

    # Ring graph + self loops: every node has in-degree >= 1 (safe softmax).
    idx = jnp.arange(N)
    adj = jnp.zeros((N, N), jnp.float32)
    adj = adj.at[idx, idx].set(1.0)
    adj = adj.at[idx, (idx + 1) % N].set(1.0)
    adj = adj.at[idx, (idx - 1) % N].set(1.0)

    node_feats = jax.random.normal(k_h, (N, FEAT_DIM), jnp.float32)
    edge_feats = jax.random.normal(k_e, (N, N, FEAT_DIM), jnp.float32) * adj[:, :, None]

    enc_params = init_gat_params(k_enc, FEAT_DIM, FEAT_DIM, OUT_DIM, NUM_HEADS)
    gene_params = init_gat_params(k_gene, OUT_DIM, FEAT_DIM, OUT_DIM, NUM_HEADS)

    z, z_g = jax.jit(model_forward)(node_feats, adj, edge_feats, enc_params, gene_params)
    jax.block_until_ready((z, z_g))

    assert z.shape == (N, OUT_DIM) and z_g.shape == (N, OUT_DIM)
    assert bool(jnp.all(jnp.isfinite(z))) and bool(jnp.all(jnp.isfinite(z_g)))
    print("KERNEL_OK")
</pallas_src>

<mosaic_0001>
module attributes {stable_mosaic.version = 11 : i64} {
  func.func @_gat_layer1_kernel(%arg0: i32, %arg1: memref<8x16x39xf32, #tpu.memory_space<vmem>>, %arg2: memref<8x16xf32, #tpu.memory_space<vmem>>, %arg3: memref<16x128xf32, #tpu.memory_space<vmem>>, %arg4: memref<128x384xf32, #tpu.memory_space<vmem>>, %arg5: memref<128x8xf32, #tpu.memory_space<vmem>>, %arg6: memref<128x8xf32, #tpu.memory_space<vmem>>, %arg7: memref<6x39xf32, #tpu.memory_space<vmem>>, %arg8: memref<8x128xf32, #tpu.memory_space<vmem>>, %arg9: memref<3x8x16xf32, #tpu.memory_space<vmem>>) attributes {dimension_semantics = [#tpu.dimension_semantics<parallel>], iteration_bounds = array<i64: 2>, scalar_prefetch = 0 : i64, scratch_operands = 0 : i64, tpu.core_type = #tpu.core_type<tc>, window_params = [{transform_indices = @transform_0, window_bounds = array<i64: 8, 16, 39>}, {transform_indices = @transform_1, window_bounds = array<i64: 8, 16>}, {pipeline_mode = #tpu.pipeline_mode<synchronous>, transform_indices = @transform_2, window_bounds = array<i64: 16, 128>}, {pipeline_mode = #tpu.pipeline_mode<synchronous>, transform_indices = @transform_3, window_bounds = array<i64: 128, 384>}, {pipeline_mode = #tpu.pipeline_mode<synchronous>, transform_indices = @transform_4, window_bounds = array<i64: 128, 8>}, {pipeline_mode = #tpu.pipeline_mode<synchronous>, transform_indices = @transform_5, window_bounds = array<i64: 128, 8>}, {pipeline_mode = #tpu.pipeline_mode<synchronous>, transform_indices = @transform_6, window_bounds = array<i64: 6, 39>}, {transform_indices = @transform_7, window_bounds = array<i64: 8, 128>}, {transform_indices = @transform_8, window_bounds = array<i64: 3, 8, 16>}]} {
    %c8_i32 = arith.constant 8 : i32
    %0 = arith.muli %arg0, %c8_i32 : i32
    %1 = tpu.assume_multiple %0, 8 : i32
    %c0 = arith.constant 0 : index
    %c0_0 = arith.constant 0 : index
    %c0_1 = arith.constant 0 : index
    %2 = vector.load %arg1[%c0, %c0_0, %c0_1] : memref<8x16x39xf32, #tpu.memory_space<vmem>>, vector<8x16x39xf32>
    %c0_2 = arith.constant 0 : index
    %c0_3 = arith.constant 0 : index
    %3 = vector.load %arg2[%c0_2, %c0_3] : memref<8x16xf32, #tpu.memory_space<vmem>>, vector<8x16xf32>
    %c0_4 = arith.constant 0 : index
    %c0_5 = arith.constant 0 : index
    %4 = vector.load %arg3[%c0_4, %c0_5] : memref<16x128xf32, #tpu.memory_space<vmem>>, vector<16x128xf32>
    %c0_6 = arith.constant 0 : index
    %c0_7 = arith.constant 0 : index
    %5 = vector.load %arg7[%c0_6, %c0_7] : memref<6x39xf32, #tpu.memory_space<vmem>>, vector<6x39xf32>
    %c0_8 = arith.constant 0 : index
    %c0_9 = arith.constant 0 : index
    %6 = vector.load %arg4[%c0_8, %c0_9] : memref<128x384xf32, #tpu.memory_space<vmem>>, vector<128x384xf32>
    %cst = arith.constant dense<0.000000e+00> : vector<16x384xf32>
    %7 = tpu.matmul %4, %6, %cst {dimension_numbers = #tpu.dot_dimension_numbers<[1], [0], [0], [1], [0, 0, 1, 1], [], []>} : vector<16x128xf32>, vector<128x384xf32>, vector<16x384xf32> -> vector<16x384xf32>
    %c0_10 = arith.constant 0 : index
    %c0_11 = arith.constant 0 : index
    %8 = vector.load %arg5[%c0_10, %c0_11] : memref<128x8xf32, #tpu.memory_space<vmem>>, vector<128x8xf32>
    %cst_12 = arith.constant dense<0.000000e+00> : vector<16x8xf32>
    %9 = tpu.matmul %4, %8, %cst_12 {dimension_numbers = #tpu.dot_dimension_numbers<[1], [0], [0], [1], [0, 0, 1, 1], [], []>} : vector<16x128xf32>, vector<128x8xf32>, vector<16x8xf32> -> vector<16x8xf32>
    %10 = arith.index_cast %1 : i32 to index
    %c0_13 = arith.constant 0 : index
    %11 = vector.load %arg3[%10, %c0_13] : memref<16x128xf32, #tpu.memory_space<vmem>>, vector<8x128xf32>
    %c0_14 = arith.constant 0 : index
    %c0_15 = arith.constant 0 : index
    %12 = vector.load %arg6[%c0_14, %c0_15] : memref<128x8xf32, #tpu.memory_space<vmem>>, vector<128x8xf32>
    %cst_16 = arith.constant dense<0.000000e+00> : vector<8x8xf32>
    %13 = tpu.matmul %11, %12, %cst_16 {dimension_numbers = #tpu.dot_dimension_numbers<[1], [0], [0], [1], [0, 0, 1, 1], [], []>} : vector<8x128xf32>, vector<128x8xf32>, vector<8x8xf32> -> vector<8x8xf32>
    %cst_17 = arith.constant 0.000000e+00 : f32
    %14 = vector.broadcast %cst_17 : f32 to vector<8x128xf32>
    %15 = vector.extract_strided_slice %5 {offsets = [0, 0], sizes = [1, 39], strides = [1, 1]} : vector<6x39xf32> to vector<1x39xf32>
    %16 = vector.shape_cast %15 : vector<1x39xf32> to vector<1x1x39xf32>
    %17 = vector.broadcast %16 : vector<1x1x39xf32> to vector<8x16x39xf32>
    %18 = arith.mulf %2, %17 : vector<8x16x39xf32>
    %cst_18 = arith.constant dense<0.000000e+00> : vector<8x16xf32>
    %19 = vector.multi_reduction <add>, %18, %cst_18 [2] : vector<8x16x39xf32> to vector<8x16xf32>
    %20 = vector.extract_strided_slice %5 {offsets = [3, 0], sizes = [1, 39], strides = [1, 1]} : vector<6x39xf32> to vector<1x39xf32>
    %21 = vector.shape_cast %20 : vector<1x39xf32> to vector<1x1x39xf32>
    %22 = vector.broadcast %21 : vector<1x1x39xf32> to vector<8x16x39xf32>
    %23 = arith.mulf %2, %22 : vector<8x16x39xf32>
    %cst_19 = arith.constant dense<0.000000e+00> : vector<8x16xf32>
    %24 = vector.multi_reduction <add>, %23, %cst_19 [2] : vector<8x16x39xf32> to vector<8x16xf32>
    %c0_20 = arith.constant 0 : index
    %c0_21 = arith.constant 0 : index
    %c0_22 = arith.constant 0 : index
    %25 = vector.load %arg9[%c0_20, %c0_21, %c0_22] : memref<3x8x16xf32, #tpu.memory_space<vmem>>, vector<1x8x16xf32>
    %26 = vector.shape_cast %25 : vector<1x8x16xf32> to vector<8x16xf32>
    %27 = vector.shape_cast %24 : vector<8x16xf32> to vector<1x8x16xf32>
    tpu.vector_store %arg9[%c0_20, %c0_21, %c0_22], %27 {strides = array<i32>} : memref<3x8x16xf32, #tpu.memory_space<vmem>>, vector<1x8x16xf32>,
    %28 = vector.extract_strided_slice %7 {offsets = [0, 0], sizes = [16, 128], strides = [1, 1]} : vector<16x384xf32> to vector<16x128xf32>
    %29 = vector.extract_strided_slice %9 {offsets = [0, 0], sizes = [16, 1], strides = [1, 1]} : vector<16x8xf32> to vector<16x1xf32>
    %30 = tpu.transpose %29, [1, 0] : vector<16x1xf32> -> vector<1x16xf32>
    %31 = vector.extract_strided_slice %13 {offsets = [0, 0], sizes = [8, 1], strides = [1, 1]} : vector<8x8xf32> to vector<8x1xf32>
    %32 = vector.broadcast %31 : vector<8x1xf32> to vector<8x16xf32>
    %33 = vector.broadcast %30 : vector<1x16xf32> to vector<8x16xf32>
    %34 = arith.addf %32, %33 : vector<8x16xf32>
    %35 = arith.addf %34, %19 : vector<8x16xf32>
    %cst_23 = arith.constant 0.000000e+00 : f32
    %36 = vector.broadcast %cst_23 : f32 to vector<8x16xf32>
    %37 = arith.cmpf ogt, %35, %36 : vector<8x16xf32>
    %cst_24 = arith.constant 2.000000e-01 : f32
    %38 = vector.broadcast %cst_24 : f32 to vector<8x16xf32>
    %39 = arith.mulf %38, %35 : vector<8x16xf32>
    %40 = arith.select %37, %35, %39 : vector<8x16xi1>, vector<8x16xf32>
    %cst_25 = arith.constant 0.000000e+00 : f32
    %41 = vector.broadcast %cst_25 : f32 to vector<8x16xf32>
    %42 = arith.cmpf ogt, %3, %41 : vector<8x16xf32>
    %cst_26 = arith.constant -1.000000e+30 : f32
    %43 = vector.broadcast %cst_26 : f32 to vector<8x16xf32>
    %44 = arith.select %42, %40, %43 : vector<8x16xi1>, vector<8x16xf32>
    %cst_27 = arith.constant dense<0xFF800000> : vector<8xf32>
    %45 = vector.multi_reduction <maximumf>, %44, %cst_27 [1] : vector<8x16xf32> to vector<8xf32>
    %46 = vector.shape_cast %45 : vector<8xf32> to vector<8x1xf32>
    %47 = vector.broadcast %46 : vector<8x1xf32> to vector<8x16xf32>
    %48 = arith.subf %44, %47 : vector<8x16xf32>
    %49 = math.exp %48 : vector<8x16xf32>
    %50 = arith.mulf %49, %3 : vector<8x16xf32>
    %cst_28 = arith.constant dense<0.000000e+00> : vector<8xf32>
    %51 = vector.multi_reduction <add>, %50, %cst_28 [1] : vector<8x16xf32> to vector<8xf32>
    %52 = vector.shape_cast %51 : vector<8xf32> to vector<8x1xf32>
    %cst_29 = arith.constant 1.000000e-30 : f32
    %53 = vector.broadcast %cst_29 : f32 to vector<8x1xf32>
    %54 = arith.addf %52, %53 : vector<8x1xf32>
    %55 = tpu.reciprocal %54 {approx = true} : vector<8x1xf32> -> vector<8x1xf32>
    %56 = vector.broadcast %55 : vector<8x1xf32> to vector<8x16xf32>
    %57 = arith.mulf %50, %56 : vector<8x16xf32>
    %cst_30 = arith.constant dense<0.000000e+00> : vector<8x128xf32>
    %58 = tpu.matmul %57, %28, %cst_30 {dimension_numbers = #tpu.dot_dimension_numbers<[1], [0], [0], [1], [0, 0, 1, 1], [], []>} : vector<8x16xf32>, vector<16x128xf32>, vector<8x128xf32> -> vector<8x128xf32>
    %59 = arith.addf %14, %58 : vector<8x128xf32>
    %60 = vector.extract_strided_slice %5 {offsets = [1, 0], sizes = [1, 39], strides = [1, 1]} : vector<6x39xf32> to vector<1x39xf32>
    %61 = vector.shape_cast %60 : vector<1x39xf32> to vector<1x1x39xf32>
    %62 = vector.broadcast %61 : vector<1x1x39xf32> to vector<8x16x39xf32>
    %63 = arith.mulf %2, %62 : vector<8x16x39xf32>
    %cst_31 = arith.constant dense<0.000000e+00> : vector<8x16xf32>
    %64 = vector.multi_reduction <add>, %63, %cst_31 [2] : vector<8x16x39xf32> to vector<8x16xf32>
    %65 = vector.extract_strided_slice %5 {offsets = [4, 0], sizes = [1, 39], strides = [1, 1]} : vector<6x39xf32> to vector<1x39xf32>
    %66 = vector.shape_cast %65 : vector<1x39xf32> to vector<1x1x39xf32>
    %67 = vector.broadcast %66 : vector<1x1x39xf32> to vector<8x16x39xf32>
    %68 = arith.mulf %2, %67 : vector<8x16x39xf32>
    %cst_32 = arith.constant dense<0.000000e+00> : vector<8x16xf32>
    %69 = vector.multi_reduction <add>, %68, %cst_32 [2] : vector<8x16x39xf32> to vector<8x16xf32>
    %c1 = arith.constant 1 : index
    %c0_33 = arith.constant 0 : index
    %c0_34 = arith.constant 0 : index
    %70 = vector.load %arg9[%c1, %c0_33, %c0_34] : memref<3x8x16xf32, #tpu.memory_space<vmem>>, vector<1x8x16xf32>
    %71 = vector.shape_cast %70 : vector<1x8x16xf32> to vector<8x16xf32>
    %72 = vector.shape_cast %69 : vector<8x16xf32> to vector<1x8x16xf32>
    tpu.vector_store %arg9[%c1, %c0_33, %c0_34], %72 {strides = array<i32>} : memref<3x8x16xf32, #tpu.memory_space<vmem>>, vector<1x8x16xf32>,
    %73 = vector.extract_strided_slice %7 {offsets = [0, 128], sizes = [16, 128], strides = [1, 1]} : vector<16x384xf32> to vector<16x128xf32>
    %74 = vector.extract_strided_slice %9 {offsets = [0, 1], sizes = [16, 1], strides = [1, 1]} : vector<16x8xf32> to vector<16x1xf32>
    %75 = tpu.transpose %74, [1, 0] : vector<16x1xf32> -> vector<1x16xf32>
    %76 = vector.extract_strided_slice %13 {offsets = [0, 1], sizes = [8, 1], strides = [1, 1]} : vector<8x8xf32> to vector<8x1xf32>
    %77 = vector.broadcast %76 : vector<8x1xf32> to vector<8x16xf32>
    %78 = vector.broadcast %75 : vector<1x16xf32> to vector<8x16xf32>
    %79 = arith.addf %77, %78 : vector<8x16xf32>
    %80 = arith.addf %79, %64 : vector<8x16xf32>
    %cst_35 = arith.constant 0.000000e+00 : f32
    %81 = vector.broadcast %cst_35 : f32 to vector<8x16xf32>
    %82 = arith.cmpf ogt, %80, %81 : vector<8x16xf32>
    %cst_36 = arith.constant 2.000000e-01 : f32
    %83 = vector.broadcast %cst_36 : f32 to vector<8x16xf32>
    %84 = arith.mulf %83, %80 : vector<8x16xf32>
    %85 = arith.select %82, %80, %84 : vector<8x16xi1>, vector<8x16xf32>
    %cst_37 = arith.constant 0.000000e+00 : f32
    %86 = vector.broadcast %cst_37 : f32 to vector<8x16xf32>
    %87 = arith.cmpf ogt, %3, %86 : vector<8x16xf32>
    %cst_38 = arith.constant -1.000000e+30 : f32
    %88 = vector.broadcast %cst_38 : f32 to vector<8x16xf32>
    %89 = arith.select %87, %85, %88 : vector<8x16xi1>, vector<8x16xf32>
    %cst_39 = arith.constant dense<0xFF800000> : vector<8xf32>
    %90 = vector.multi_reduction <maximumf>, %89, %cst_39 [1] : vector<8x16xf32> to vector<8xf32>
    %91 = vector.shape_cast %90 : vector<8xf32> to vector<8x1xf32>
    %92 = vector.broadcast %91 : vector<8x1xf32> to vector<8x16xf32>
    %93 = arith.subf %89, %92 : vector<8x16xf32>
    %94 = math.exp %93 : vector<8x16xf32>
    %95 = arith.mulf %94, %3 : vector<8x16xf32>
    %cst_40 = arith.constant dense<0.000000e+00> : vector<8xf32>
    %96 = vector.multi_reduction <add>, %95, %cst_40 [1] : vector<8x16xf32> to vector<8xf32>
    %97 = vector.shape_cast %96 : vector<8xf32> to vector<8x1xf32>
    %cst_41 = arith.constant 1.000000e-30 : f32
    %98 = vector.broadcast %cst_41 : f32 to vector<8x1xf32>
    %99 = arith.addf %97, %98 : vector<8x1xf32>
    %100 = tpu.reciprocal %99 {approx = true} : vector<8x1xf32> -> vector<8x1xf32>
    %101 = vector.broadcast %100 : vector<8x1xf32> to vector<8x16xf32>
    %102 = arith.mulf %95, %101 : vector<8x16xf32>
    %cst_42 = arith.constant dense<0.000000e+00> : vector<8x128xf32>
    %103 = tpu.matmul %102, %73, %cst_42 {dimension_numbers = #tpu.dot_dimension_numbers<[1], [0], [0], [1], [0, 0, 1, 1], [], []>} : vector<8x16xf32>, vector<16x128xf32>, vector<8x128xf32> -> vector<8x128xf32>
    %104 = arith.addf %59, %103 : vector<8x128xf32>
    %105 = vector.extract_strided_slice %5 {offsets = [2, 0], sizes = [1, 39], strides = [1, 1]} : vector<6x39xf32> to vector<1x39xf32>
    %106 = vector.shape_cast %105 : vector<1x39xf32> to vector<1x1x39xf32>
    %107 = vector.broadcast %106 : vector<1x1x39xf32> to vector<8x16x39xf32>
    %108 = arith.mulf %2, %107 : vector<8x16x39xf32>
    %cst_43 = arith.constant dense<0.000000e+00> : vector<8x16xf32>
    %109 = vector.multi_reduction <add>, %108, %cst_43 [2] : vector<8x16x39xf32> to vector<8x16xf32>
    %110 = vector.extract_strided_slice %5 {offsets = [5, 0], sizes = [1, 39], strides = [1, 1]} : vector<6x39xf32> to vector<1x39xf32>
    %111 = vector.shape_cast %110 : vector<1x39xf32> to vector<1x1x39xf32>
    %112 = vector.broadcast %111 : vector<1x1x39xf32> to vector<8x16x39xf32>
    %113 = arith.mulf %2, %112 : vector<8x16x39xf32>
    %cst_44 = arith.constant dense<0.000000e+00> : vector<8x16xf32>
    %114 = vector.multi_reduction <add>, %113, %cst_44 [2] : vector<8x16x39xf32> to vector<8x16xf32>
    %c2 = arith.constant 2 : index
    %c0_45 = arith.constant 0 : index
    %c0_46 = arith.constant 0 : index
    %115 = vector.load %arg9[%c2, %c0_45, %c0_46] : memref<3x8x16xf32, #tpu.memory_space<vmem>>, vector<1x8x16xf32>
    %116 = vector.shape_cast %115 : vector<1x8x16xf32> to vector<8x16xf32>
    %117 = vector.shape_cast %114 : vector<8x16xf32> to vector<1x8x16xf32>
    tpu.vector_store %arg9[%c2, %c0_45, %c0_46], %117 {strides = array<i32>} : memref<3x8x16xf32, #tpu.memory_space<vmem>>, vector<1x8x16xf32>,
    %118 = vector.extract_strided_slice %7 {offsets = [0, 256], sizes = [16, 128], strides = [1, 1]} : vector<16x384xf32> to vector<16x128xf32>
    %119 = vector.extract_strided_slice %9 {offsets = [0, 2], sizes = [16, 1], strides = [1, 1]} : vector<16x8xf32> to vector<16x1xf32>
    %120 = tpu.transpose %119, [1, 0] : vector<16x1xf32> -> vector<1x16xf32>
    %121 = vector.extract_strided_slice %13 {offsets = [0, 2], sizes = [8, 1], strides = [1, 1]} : vector<8x8xf32> to vector<8x1xf32>
    %122 = vector.broadcast %121 : vector<8x1xf32> to vector<8x16xf32>
    %123 = vector.broadcast %120 : vector<1x16xf32> to vector<8x16xf32>
    %124 = arith.addf %122, %123 : vector<8x16xf32>
    %125 = arith.addf %124, %109 : vector<8x16xf32>
    %cst_47 = arith.constant 0.000000e+00 : f32
    %126 = vector.broadcast %cst_47 : f32 to vector<8x16xf32>
    %127 = arith.cmpf ogt, %125, %126 : vector<8x16xf32>
    %cst_48 = arith.constant 2.000000e-01 : f32
    %128 = vector.broadcast %cst_48 : f32 to vector<8x16xf32>
    %129 = arith.mulf %128, %125 : vector<8x16xf32>
    %130 = arith.select %127, %125, %129 : vector<8x16xi1>, vector<8x16xf32>
    %cst_49 = arith.constant 0.000000e+00 : f32
    %131 = vector.broadcast %cst_49 : f32 to vector<8x16xf32>
    %132 = arith.cmpf ogt, %3, %131 : vector<8x16xf32>
    %cst_50 = arith.constant -1.000000e+30 : f32
    %133 = vector.broadcast %cst_50 : f32 to vector<8x16xf32>
    %134 = arith.select %132, %130, %133 : vector<8x16xi1>, vector<8x16xf32>
    %cst_51 = arith.constant dense<0xFF800000> : vector<8xf32>
    %135 = vector.multi_reduction <maximumf>, %134, %cst_51 [1] : vector<8x16xf32> to vector<8xf32>
    %136 = vector.shape_cast %135 : vector<8xf32> to vector<8x1xf32>
    %137 = vector.broadcast %136 : vector<8x1xf32> to vector<8x16xf32>
    %138 = arith.subf %134, %137 : vector<8x16xf32>
    %139 = math.exp %138 : vector<8x16xf32>
    %140 = arith.mulf %139, %3 : vector<8x16xf32>
    %cst_52 = arith.constant dense<0.000000e+00> : vector<8xf32>
    %141 = vector.multi_reduction <add>, %140, %cst_52 [1] : vector<8x16xf32> to vector<8xf32>
    %142 = vector.shape_cast %141 : vector<8xf32> to vector<8x1xf32>
    %cst_53 = arith.constant 1.000000e-30 : f32
    %143 = vector.broadcast %cst_53 : f32 to vector<8x1xf32>
    %144 = arith.addf %142, %143 : vector<8x1xf32>
    %145 = tpu.reciprocal %144 {approx = true} : vector<8x1xf32> -> vector<8x1xf32>
    %146 = vector.broadcast %145 : vector<8x1xf32> to vector<8x16xf32>
    %147 = arith.mulf %140, %146 : vector<8x16xf32>
    %cst_54 = arith.constant dense<0.000000e+00> : vector<8x128xf32>
    %148 = tpu.matmul %147, %118, %cst_54 {dimension_numbers = #tpu.dot_dimension_numbers<[1], [0], [0], [1], [0, 0, 1, 1], [], []>} : vector<8x16xf32>, vector<16x128xf32>, vector<8x128xf32> -> vector<8x128xf32>
    %149 = arith.addf %104, %148 : vector<8x128xf32>
    %cst_55 = arith.constant 0.333333343 : f32
    %150 = vector.broadcast %cst_55 : f32 to vector<8x128xf32>
    %151 = arith.mulf %149, %150 : vector<8x128xf32>
    %c0_56 = arith.constant 0 : index
    %c0_57 = arith.constant 0 : index
    %152 = vector.load %arg8[%c0_56, %c0_57] : memref<8x128xf32, #tpu.memory_space<vmem>>, vector<8x128xf32>
    tpu.vector_store %arg8[%c0_56, %c0_57], %151 {strides = array<i32>} : memref<8x128xf32, #tpu.memory_space<vmem>>, vector<8x128xf32>,
    return
  }
  func.func @transform_0(%arg0: i32) -> (i32, i32, i32) {
    %c0_i32 = arith.constant 0 : i32
    %c0_i32_0 = arith.constant 0 : i32
    %c0_i32_1 = arith.constant 0 : i32
    return %arg0, %c0_i32, %c0_i32_0 : i32, i32, i32
  }
  func.func @transform_1(%arg0: i32) -> (i32, i32) {
    %c0_i32 = arith.constant 0 : i32
    %c0_i32_0 = arith.constant 0 : i32
    return %arg0, %c0_i32 : i32, i32
  }
  func.func @transform_2(%arg0: i32) -> (i32, i32) {
    %c0_i32 = arith.constant 0 : i32
    %c0_i32_0 = arith.constant 0 : i32
    %c0_i32_1 = arith.constant 0 : i32
    return %c0_i32, %c0_i32_0 : i32, i32
  }
  func.func @transform_3(%arg0: i32) -> (i32, i32) {
    %c0_i32 = arith.constant 0 : i32
    %c0_i32_0 = arith.constant 0 : i32
    %c0_i32_1 = arith.constant 0 : i32
    return %c0_i32, %c0_i32_0 : i32, i32
  }
  func.func @transform_4(%arg0: i32) -> (i32, i32) {
    %c0_i32 = arith.constant 0 : i32
    %c0_i32_0 = arith.constant 0 : i32
    %c0_i32_1 = arith.constant 0 : i32
    return %c0_i32, %c0_i32_0 : i32, i32
  }
  func.func @transform_5(%arg0: i32) -> (i32, i32) {
    %c0_i32 = arith.constant 0 : i32
    %c0_i32_0 = arith.constant 0 : i32
    %c0_i32_1 = arith.constant 0 : i32
    return %c0_i32, %c0_i32_0 : i32, i32
  }
  func.func @transform_6(%arg0: i32) -> (i32, i32) {
    %c0_i32 = arith.constant 0 : i32
    %c0_i32_0 = arith.constant 0 : i32
    %c0_i32_1 = arith.constant 0 : i32
    return %c0_i32, %c0_i32_0 : i32, i32
  }
  func.func @transform_7(%arg0: i32) -> (i32, i32) {
    %c0_i32 = arith.constant 0 : i32
    %c0_i32_0 = arith.constant 0 : i32
    return %arg0, %c0_i32 : i32, i32
  }
  func.func @transform_8(%arg0: i32) -> (i32, i32, i32) {
    %c0_i32 = arith.constant 0 : i32
    %c0_i32_0 = arith.constant 0 : i32
    %c0_i32_1 = arith.constant 0 : i32
    return %c0_i32, %arg0, %c0_i32_0 : i32, i32, i32
  }
}

module attributes {stable_mosaic.version = 11 : i64} {
  func.func @_gat_layer2_kernel(%arg0: i32, %arg1: memref<3x8x16xf32, #tpu.memory_space<vmem>>, %arg2: memref<8x16xf32, #tpu.memory_space<vmem>>, %arg3: memref<16x128xf32, #tpu.memory_space<vmem>>, %arg4: memref<128x384xf32, #tpu.memory_space<vmem>>, %arg5: memref<128x8xf32, #tpu.memory_space<vmem>>, %arg6: memref<128x8xf32, #tpu.memory_space<vmem>>, %arg7: memref<8x128xf32, #tpu.memory_space<vmem>>) attributes {dimension_semantics = [#tpu.dimension_semantics<parallel>], iteration_bounds = array<i64: 2>, scalar_prefetch = 0 : i64, scratch_operands = 0 : i64, tpu.core_type = #tpu.core_type<tc>, window_params = [{transform_indices = @transform_0, window_bounds = array<i64: 3, 8, 16>}, {transform_indices = @transform_1, window_bounds = array<i64: 8, 16>}, {pipeline_mode = #tpu.pipeline_mode<synchronous>, transform_indices = @transform_2, window_bounds = array<i64: 16, 128>}, {pipeline_mode = #tpu.pipeline_mode<synchronous>, transform_indices = @transform_3, window_bounds = array<i64: 128, 384>}, {pipeline_mode = #tpu.pipeline_mode<synchronous>, transform_indices = @transform_4, window_bounds = array<i64: 128, 8>}, {pipeline_mode = #tpu.pipeline_mode<synchronous>, transform_indices = @transform_5, window_bounds = array<i64: 128, 8>}, {transform_indices = @transform_6, window_bounds = array<i64: 8, 128>}]} {
    %c8_i32 = arith.constant 8 : i32
    %0 = arith.muli %arg0, %c8_i32 : i32
    %1 = tpu.assume_multiple %0, 8 : i32
    %c0 = arith.constant 0 : index
    %c0_0 = arith.constant 0 : index
    %2 = vector.load %arg2[%c0, %c0_0] : memref<8x16xf32, #tpu.memory_space<vmem>>, vector<8x16xf32>
    %c0_1 = arith.constant 0 : index
    %c0_2 = arith.constant 0 : index
    %3 = vector.load %arg3[%c0_1, %c0_2] : memref<16x128xf32, #tpu.memory_space<vmem>>, vector<16x128xf32>
    %c0_3 = arith.constant 0 : index
    %c0_4 = arith.constant 0 : index
    %4 = vector.load %arg4[%c0_3, %c0_4] : memref<128x384xf32, #tpu.memory_space<vmem>>, vector<128x384xf32>
    %cst = arith.constant dense<0.000000e+00> : vector<16x384xf32>
    %5 = tpu.matmul %3, %4, %cst {dimension_numbers = #tpu.dot_dimension_numbers<[1], [0], [0], [1], [0, 0, 1, 1], [], []>} : vector<16x128xf32>, vector<128x384xf32>, vector<16x384xf32> -> vector<16x384xf32>
    %c0_5 = arith.constant 0 : index
    %c0_6 = arith.constant 0 : index
    %6 = vector.load %arg5[%c0_5, %c0_6] : memref<128x8xf32, #tpu.memory_space<vmem>>, vector<128x8xf32>
    %cst_7 = arith.constant dense<0.000000e+00> : vector<16x8xf32>
    %7 = tpu.matmul %3, %6, %cst_7 {dimension_numbers = #tpu.dot_dimension_numbers<[1], [0], [0], [1], [0, 0, 1, 1], [], []>} : vector<16x128xf32>, vector<128x8xf32>, vector<16x8xf32> -> vector<16x8xf32>
    %8 = arith.index_cast %1 : i32 to index
    %c0_8 = arith.constant 0 : index
    %9 = vector.load %arg3[%8, %c0_8] : memref<16x128xf32, #tpu.memory_space<vmem>>, vector<8x128xf32>
    %c0_9 = arith.constant 0 : index
    %c0_10 = arith.constant 0 : index
    %10 = vector.load %arg6[%c0_9, %c0_10] : memref<128x8xf32, #tpu.memory_space<vmem>>, vector<128x8xf32>
    %cst_11 = arith.constant dense<0.000000e+00> : vector<8x8xf32>
    %11 = tpu.matmul %9, %10, %cst_11 {dimension_numbers = #tpu.dot_dimension_numbers<[1], [0], [0], [1], [0, 0, 1, 1], [], []>} : vector<8x128xf32>, vector<128x8xf32>, vector<8x8xf32> -> vector<8x8xf32>
    %cst_12 = arith.constant 0.000000e+00 : f32
    %12 = vector.broadcast %cst_12 : f32 to vector<8x128xf32>
    %c0_13 = arith.constant 0 : index
    %c0_14 = arith.constant 0 : index
    %c0_15 = arith.constant 0 : index
    %13 = vector.load %arg1[%c0_13, %c0_14, %c0_15] : memref<3x8x16xf32, #tpu.memory_space<vmem>>, vector<1x8x16xf32>
    %14 = vector.shape_cast %13 : vector<1x8x16xf32> to vector<8x16xf32>
    %15 = vector.extract_strided_slice %5 {offsets = [0, 0], sizes = [16, 128], strides = [1, 1]} : vector<16x384xf32> to vector<16x128xf32>
    %16 = vector.extract_strided_slice %7 {offsets = [0, 0], sizes = [16, 1], strides = [1, 1]} : vector<16x8xf32> to vector<16x1xf32>
    %17 = tpu.transpose %16, [1, 0] : vector<16x1xf32> -> vector<1x16xf32>
    %18 = vector.extract_strided_slice %11 {offsets = [0, 0], sizes = [8, 1], strides = [1, 1]} : vector<8x8xf32> to vector<8x1xf32>
    %19 = vector.broadcast %18 : vector<8x1xf32> to vector<8x16xf32>
    %20 = vector.broadcast %17 : vector<1x16xf32> to vector<8x16xf32>
    %21 = arith.addf %19, %20 : vector<8x16xf32>
    %22 = arith.addf %21, %14 : vector<8x16xf32>
    %cst_16 = arith.constant 0.000000e+00 : f32
    %23 = vector.broadcast %cst_16 : f32 to vector<8x16xf32>
    %24 = arith.cmpf ogt, %22, %23 : vector<8x16xf32>
    %cst_17 = arith.constant 2.000000e-01 : f32
    %25 = vector.broadcast %cst_17 : f32 to vector<8x16xf32>
    %26 = arith.mulf %25, %22 : vector<8x16xf32>
    %27 = arith.select %24, %22, %26 : vector<8x16xi1>, vector<8x16xf32>
    %cst_18 = arith.constant 0.000000e+00 : f32
    %28 = vector.broadcast %cst_18 : f32 to vector<8x16xf32>
    %29 = arith.cmpf ogt, %2, %28 : vector<8x16xf32>
    %cst_19 = arith.constant -1.000000e+30 : f32
    %30 = vector.broadcast %cst_19 : f32 to vector<8x16xf32>
    %31 = arith.select %29, %27, %30 : vector<8x16xi1>, vector<8x16xf32>
    %cst_20 = arith.constant dense<0xFF800000> : vector<8xf32>
    %32 = vector.multi_reduction <maximumf>, %31, %cst_20 [1] : vector<8x16xf32> to vector<8xf32>
    %33 = vector.shape_cast %32 : vector<8xf32> to vector<8x1xf32>
    %34 = vector.broadcast %33 : vector<8x1xf32> to vector<8x16xf32>
    %35 = arith.subf %31, %34 : vector<8x16xf32>
    %36 = math.exp %35 : vector<8x16xf32>
    %37 = arith.mulf %36, %2 : vector<8x16xf32>
    %cst_21 = arith.constant dense<0.000000e+00> : vector<8xf32>
    %38 = vector.multi_reduction <add>, %37, %cst_21 [1] : vector<8x16xf32> to vector<8xf32>
    %39 = vector.shape_cast %38 : vector<8xf32> to vector<8x1xf32>
    %cst_22 = arith.constant 1.000000e-30 : f32
    %40 = vector.broadcast %cst_22 : f32 to vector<8x1xf32>
    %41 = arith.addf %39, %40 : vector<8x1xf32>
    %42 = tpu.reciprocal %41 {approx = true} : vector<8x1xf32> -> vector<8x1xf32>
    %43 = vector.broadcast %42 : vector<8x1xf32> to vector<8x16xf32>
    %44 = arith.mulf %37, %43 : vector<8x16xf32>
    %cst_23 = arith.constant dense<0.000000e+00> : vector<8x128xf32>
    %45 = tpu.matmul %44, %15, %cst_23 {dimension_numbers = #tpu.dot_dimension_numbers<[1], [0], [0], [1], [0, 0, 1, 1], [], []>} : vector<8x16xf32>, vector<16x128xf32>, vector<8x128xf32> -> vector<8x128xf32>
    %46 = arith.addf %12, %45 : vector<8x128xf32>
    %c1 = arith.constant 1 : index
    %c0_24 = arith.constant 0 : index
    %c0_25 = arith.constant 0 : index
    %47 = vector.load %arg1[%c1, %c0_24, %c0_25] : memref<3x8x16xf32, #tpu.memory_space<vmem>>, vector<1x8x16xf32>
    %48 = vector.shape_cast %47 : vector<1x8x16xf32> to vector<8x16xf32>
    %49 = vector.extract_strided_slice %5 {offsets = [0, 128], sizes = [16, 128], strides = [1, 1]} : vector<16x384xf32> to vector<16x128xf32>
    %50 = vector.extract_strided_slice %7 {offsets = [0, 1], sizes = [16, 1], strides = [1, 1]} : vector<16x8xf32> to vector<16x1xf32>
    %51 = tpu.transpose %50, [1, 0] : vector<16x1xf32> -> vector<1x16xf32>
    %52 = vector.extract_strided_slice %11 {offsets = [0, 1], sizes = [8, 1], strides = [1, 1]} : vector<8x8xf32> to vector<8x1xf32>
    %53 = vector.broadcast %52 : vector<8x1xf32> to vector<8x16xf32>
    %54 = vector.broadcast %51 : vector<1x16xf32> to vector<8x16xf32>
    %55 = arith.addf %53, %54 : vector<8x16xf32>
    %56 = arith.addf %55, %48 : vector<8x16xf32>
    %cst_26 = arith.constant 0.000000e+00 : f32
    %57 = vector.broadcast %cst_26 : f32 to vector<8x16xf32>
    %58 = arith.cmpf ogt, %56, %57 : vector<8x16xf32>
    %cst_27 = arith.constant 2.000000e-01 : f32
    %59 = vector.broadcast %cst_27 : f32 to vector<8x16xf32>
    %60 = arith.mulf %59, %56 : vector<8x16xf32>
    %61 = arith.select %58, %56, %60 : vector<8x16xi1>, vector<8x16xf32>
    %cst_28 = arith.constant 0.000000e+00 : f32
    %62 = vector.broadcast %cst_28 : f32 to vector<8x16xf32>
    %63 = arith.cmpf ogt, %2, %62 : vector<8x16xf32>
    %cst_29 = arith.constant -1.000000e+30 : f32
    %64 = vector.broadcast %cst_29 : f32 to vector<8x16xf32>
    %65 = arith.select %63, %61, %64 : vector<8x16xi1>, vector<8x16xf32>
    %cst_30 = arith.constant dense<0xFF800000> : vector<8xf32>
    %66 = vector.multi_reduction <maximumf>, %65, %cst_30 [1] : vector<8x16xf32> to vector<8xf32>
    %67 = vector.shape_cast %66 : vector<8xf32> to vector<8x1xf32>
    %68 = vector.broadcast %67 : vector<8x1xf32> to vector<8x16xf32>
    %69 = arith.subf %65, %68 : vector<8x16xf32>
    %70 = math.exp %69 : vector<8x16xf32>
    %71 = arith.mulf %70, %2 : vector<8x16xf32>
    %cst_31 = arith.constant dense<0.000000e+00> : vector<8xf32>
    %72 = vector.multi_reduction <add>, %71, %cst_31 [1] : vector<8x16xf32> to vector<8xf32>
    %73 = vector.shape_cast %72 : vector<8xf32> to vector<8x1xf32>
    %cst_32 = arith.constant 1.000000e-30 : f32
    %74 = vector.broadcast %cst_32 : f32 to vector<8x1xf32>
    %75 = arith.addf %73, %74 : vector<8x1xf32>
    %76 = tpu.reciprocal %75 {approx = true} : vector<8x1xf32> -> vector<8x1xf32>
    %77 = vector.broadcast %76 : vector<8x1xf32> to vector<8x16xf32>
    %78 = arith.mulf %71, %77 : vector<8x16xf32>
    %cst_33 = arith.constant dense<0.000000e+00> : vector<8x128xf32>
    %79 = tpu.matmul %78, %49, %cst_33 {dimension_numbers = #tpu.dot_dimension_numbers<[1], [0], [0], [1], [0, 0, 1, 1], [], []>} : vector<8x16xf32>, vector<16x128xf32>, vector<8x128xf32> -> vector<8x128xf32>
    %80 = arith.addf %46, %79 : vector<8x128xf32>
    %c2 = arith.constant 2 : index
    %c0_34 = arith.constant 0 : index
    %c0_35 = arith.constant 0 : index
    %81 = vector.load %arg1[%c2, %c0_34, %c0_35] : memref<3x8x16xf32, #tpu.memory_space<vmem>>, vector<1x8x16xf32>
    %82 = vector.shape_cast %81 : vector<1x8x16xf32> to vector<8x16xf32>
    %83 = vector.extract_strided_slice %5 {offsets = [0, 256], sizes = [16, 128], strides = [1, 1]} : vector<16x384xf32> to vector<16x128xf32>
    %84 = vector.extract_strided_slice %7 {offsets = [0, 2], sizes = [16, 1], strides = [1, 1]} : vector<16x8xf32> to vector<16x1xf32>
    %85 = tpu.transpose %84, [1, 0] : vector<16x1xf32> -> vector<1x16xf32>
    %86 = vector.extract_strided_slice %11 {offsets = [0, 2], sizes = [8, 1], strides = [1, 1]} : vector<8x8xf32> to vector<8x1xf32>
    %87 = vector.broadcast %86 : vector<8x1xf32> to vector<8x16xf32>
    %88 = vector.broadcast %85 : vector<1x16xf32> to vector<8x16xf32>
    %89 = arith.addf %87, %88 : vector<8x16xf32>
    %90 = arith.addf %89, %82 : vector<8x16xf32>
    %cst_36 = arith.constant 0.000000e+00 : f32
    %91 = vector.broadcast %cst_36 : f32 to vector<8x16xf32>
    %92 = arith.cmpf ogt, %90, %91 : vector<8x16xf32>
    %cst_37 = arith.constant 2.000000e-01 : f32
    %93 = vector.broadcast %cst_37 : f32 to vector<8x16xf32>
    %94 = arith.mulf %93, %90 : vector<8x16xf32>
    %95 = arith.select %92, %90, %94 : vector<8x16xi1>, vector<8x16xf32>
    %cst_38 = arith.constant 0.000000e+00 : f32
    %96 = vector.broadcast %cst_38 : f32 to vector<8x16xf32>
    %97 = arith.cmpf ogt, %2, %96 : vector<8x16xf32>
    %cst_39 = arith.constant -1.000000e+30 : f32
    %98 = vector.broadcast %cst_39 : f32 to vector<8x16xf32>
    %99 = arith.select %97, %95, %98 : vector<8x16xi1>, vector<8x16xf32>
    %cst_40 = arith.constant dense<0xFF800000> : vector<8xf32>
    %100 = vector.multi_reduction <maximumf>, %99, %cst_40 [1] : vector<8x16xf32> to vector<8xf32>
    %101 = vector.shape_cast %100 : vector<8xf32> to vector<8x1xf32>
    %102 = vector.broadcast %101 : vector<8x1xf32> to vector<8x16xf32>
    %103 = arith.subf %99, %102 : vector<8x16xf32>
    %104 = math.exp %103 : vector<8x16xf32>
    %105 = arith.mulf %104, %2 : vector<8x16xf32>
    %cst_41 = arith.constant dense<0.000000e+00> : vector<8xf32>
    %106 = vector.multi_reduction <add>, %105, %cst_41 [1] : vector<8x16xf32> to vector<8xf32>
    %107 = vector.shape_cast %106 : vector<8xf32> to vector<8x1xf32>
    %cst_42 = arith.constant 1.000000e-30 : f32
    %108 = vector.broadcast %cst_42 : f32 to vector<8x1xf32>
    %109 = arith.addf %107, %108 : vector<8x1xf32>
    %110 = tpu.reciprocal %109 {approx = true} : vector<8x1xf32> -> vector<8x1xf32>
    %111 = vector.broadcast %110 : vector<8x1xf32> to vector<8x16xf32>
    %112 = arith.mulf %105, %111 : vector<8x16xf32>
    %cst_43 = arith.constant dense<0.000000e+00> : vector<8x128xf32>
    %113 = tpu.matmul %112, %83, %cst_43 {dimension_numbers = #tpu.dot_dimension_numbers<[1], [0], [0], [1], [0, 0, 1, 1], [], []>} : vector<8x16xf32>, vector<16x128xf32>, vector<8x128xf32> -> vector<8x128xf32>
    %114 = arith.addf %80, %113 : vector<8x128xf32>
    %cst_44 = arith.constant 0.333333343 : f32
    %115 = vector.broadcast %cst_44 : f32 to vector<8x128xf32>
    %116 = arith.mulf %114, %115 : vector<8x128xf32>
    %c0_45 = arith.constant 0 : index
    %c0_46 = arith.constant 0 : index
    %117 = vector.load %arg7[%c0_45, %c0_46] : memref<8x128xf32, #tpu.memory_space<vmem>>, vector<8x128xf32>
    tpu.vector_store %arg7[%c0_45, %c0_46], %116 {strides = array<i32>} : memref<8x128xf32, #tpu.memory_space<vmem>>, vector<8x128xf32>,
    return
  }
  func.func @transform_0(%arg0: i32) -> (i32, i32, i32) {
    %c0_i32 = arith.constant 0 : i32
    %c0_i32_0 = arith.constant 0 : i32
    %c0_i32_1 = arith.constant 0 : i32
    return %c0_i32, %arg0, %c0_i32_0 : i32, i32, i32
  }
  func.func @transform_1(%arg0: i32) -> (i32, i32) {
    %c0_i32 = arith.constant 0 : i32
    %c0_i32_0 = arith.constant 0 : i32
    return %arg0, %c0_i32 : i32, i32
  }
  func.func @transform_2(%arg0: i32) -> (i32, i32) {
    %c0_i32 = arith.constant 0 : i32
    %c0_i32_0 = arith.constant 0 : i32
    %c0_i32_1 = arith.constant 0 : i32
    return %c0_i32, %c0_i32_0 : i32, i32
  }
  func.func @transform_3(%arg0: i32) -> (i32, i32) {
    %c0_i32 = arith.constant 0 : i32
    %c0_i32_0 = arith.constant 0 : i32
    %c0_i32_1 = arith.constant 0 : i32
    return %c0_i32, %c0_i32_0 : i32, i32
  }
  func.func @transform_4(%arg0: i32) -> (i32, i32) {
    %c0_i32 = arith.constant 0 : i32
    %c0_i32_0 = arith.constant 0 : i32
    %c0_i32_1 = arith.constant 0 : i32
    return %c0_i32, %c0_i32_0 : i32, i32
  }
  func.func @transform_5(%arg0: i32) -> (i32, i32) {
    %c0_i32 = arith.constant 0 : i32
    %c0_i32_0 = arith.constant 0 : i32
    %c0_i32_1 = arith.constant 0 : i32
    return %c0_i32, %c0_i32_0 : i32, i32
  }
  func.func @transform_6(%arg0: i32) -> (i32, i32) {
    %c0_i32 = arith.constant 0 : i32
    %c0_i32_0 = arith.constant 0 : i32
    return %arg0, %c0_i32 : i32, i32
  }
}

</mosaic_0001>

<llo_original>
// kernel: model_forward.3
$region0: #{model_forward.3}
  #allocation0 [shape = 'u32[]', space=smem, size = 0x4, offset = 0x4, fixed_abs, tag = 'smem constant byte address 0x4 - core index']
  #allocation1 [shape = 'u32[144,128]{1,0:T(1,128)}', space=vmem, size = 0x12000, scoped, tag = 'internal scratch']
  %s0 = inlined_call_operand.vmem [shape: f32[3,16,16], index: 0, kind: input, shape index: {}]
  %s1 = inlined_call_operand.vmem [shape: f32[16,16], index: 1, kind: input, shape index: {}]
  %s2 = inlined_call_operand.vmem [shape: f32[16,128], index: 2, kind: input, shape index: {}]
  %s3 = inlined_call_operand.vmem [shape: f32[128,384], index: 3, kind: input, shape index: {}]
  %s4 = inlined_call_operand.vmem [shape: f32[128,8], index: 4, kind: input, shape index: {}]
  %s5 = inlined_call_operand.vmem [shape: f32[128,8], index: 5, kind: input, shape index: {}]
  %s6 = inlined_call_operand.hbm [shape: f32[16,128], index: 6, kind: output, shape index: {}]
  %s7 = sld [smem:[#allocation0]]
  $region95: #{model_forward.3} parent=0
    _
  %s9 = ssub.s32 1, %s7
  %s10 = scalar_select 0, %s9, %s7
  $region1: #{model_forward.3} parent=0
    #allocation2 [shape = 'u8[24576]{0}', space=vmem, size = 0x6000, scoped, tag = 'input window, operand 0']
    #allocation3 [shape = 'u8[8192]{0}', space=vmem, size = 0x2000, scoped, tag = 'output window, operand 0']
    #allocation4 [shape = 's32[2]{0}', space=sflag, size = 0x8, scoped, tag = 'scoped memory for model_forward.3']
    %11 = vsyncpa [#allocation4], 0
    %s12 = scalar_lea.sflag [#allocation4], 1
    %13 = vsyncpa %s12, 0
    loop: start=0, step=1, limit=4
    $region2: #{model_forward.3} parent=1 // loop_pre_header
      _
    $region3: #{model_forward.3} parent=1 // loop_header
      %s15 = sphi 0, %s19
      %p16 = scmp.ge.s32.totalorder %s15, 4
      %s25 = sphi 0, %s27
      %s28 = sphi 0, %s25
      %s29 = sphi 0, %s28
      %s45 = sphi 0, %s29
      %s51 = sphi 0, %s53
      %s54 = sphi 0, %s51
      %s55 = sphi 0, %s54
      %s71 = sphi 0, %s55
      %s75 = sphi 0, %s75
      %s77 = sphi 0, %s75
      %s78 = sphi 0, %s77
      %s92 = sphi 0, %s78
      %s96 = sphi 0, %s96
      %s98 = sphi 0, %s96
      %s99 = sphi 0, %s98
      %s113 = sphi 0, %s99
      %s117 = sphi 0, %s117
      %s119 = sphi 0, %s117
      %s120 = sphi 0, %s119
      %s134 = sphi 0, %s120
      %s138 = sphi 0, %s138
      %s140 = sphi 0, %s138
      %s141 = sphi 0, %s140
      %s155 = sphi 0, %s141
      %s161 = sphi 0, %s163
      %s164 = sphi 0, %s161
      %s165 = sphi 0, %s164
      %s181 = sphi 0, %s165
    $region4: #{model_forward.3} parent=1 // loop_header_branch
      %18 = sbr.rel (%p16) target = $region8
    $region5: #{model_forward.3} parent=1 // loop_body
      %s20 = ssub.s32 %s15, 1
      %s21 = ssub.s32 %s15, 2
      %s22 = sadd.s32 %s15, 1
      %s23 = ssub.s32 %s15, %s22
      %p24 = scmp.eq.s32.totalorder %s23, 0
      %s26 = sadd.s32 %s25, 1
      %s27 = scalar_select %p24, %s25, %s26
      %p30 = pneg %p24
      %p31 = scmp.eq.s32.totalorder %s15, 1
      %p32 = por %p30, %p31
      %p33 = scmp.ne.s32.totalorder %s25, %s28
      %p34 = scmp.eq.s32.totalorder %s15, 0
      %p35 = por %p33, %p34
      %p36 = scmp.ne.s32.totalorder %s25, %s28
      %p37 = scmp.eq.s32.totalorder %s20, 1
      %p38 = por %p36, %p37
      %p39 = scmp.ne.s32.totalorder %s28, %s29
      %p40 = scmp.eq.s32.totalorder %s20, 0
      %p41 = por %p39, %p40
      %p42 = scmp.ne.s32.totalorder %s28, %s29
      %p43 = scmp.eq.s32.totalorder %s21, 1
      %p44 = por %p42, %p43
      %p46 = scmp.ne.s32.totalorder %s29, %s45
      %p47 = scmp.eq.s32.totalorder %s21, 0
      %p48 = por %p46, %p47
      %s49 = ssub.s32 %s15, %s22
      %p50 = scmp.eq.s32.totalorder %s49, 0
      %s52 = sadd.s32 %s51, 1
      %s53 = scalar_select %p50, %s51, %s52
      %p56 = pneg %p50
      %p57 = scmp.eq.s32.totalorder %s15, 1
      %p58 = por %p56, %p57
      %p59 = scmp.ne.s32.totalorder %s51, %s54
      %p60 = scmp.eq.s32.totalorder %s15, 0
      %p61 = por %p59, %p60
      %p62 = scmp.ne.s32.totalorder %s51, %s54
      %p63 = scmp.eq.s32.totalorder %s20, 1
      %p64 = por %p62, %p63
      %p65 = scmp.ne.s32.totalorder %s54, %s55
      %p66 = scmp.eq.s32.totalorder %s20, 0
      %p67 = por %p65, %p66
      %p68 = scmp.ne.s32.totalorder %s54, %s55
      %p69 = scmp.eq.s32.totalorder %s21, 1
      %p70 = por %p68, %p69
      %p72 = scmp.ne.s32.totalorder %s55, %s71
      %p73 = scmp.eq.s32.totalorder %s21, 0
      %p74 = por %p72, %p73
      %s76 = sadd.s32 %s75, 1
      %p79 = scmp.eq.s32.totalorder %s15, 1
      %p80 = scmp.ne.s32.totalorder %s75, %s77
      %p81 = scmp.eq.s32.totalorder %s15, 0
      %p82 = por %p80, %p81
      %p83 = scmp.ne.s32.totalorder %s75, %s77
      %p84 = scmp.eq.s32.totalorder %s20, 1
      %p85 = por %p83, %p84
      %p86 = scmp.ne.s32.totalorder %s77, %s78
      %p87 = scmp.eq.s32.totalorder %s20, 0
      %p88 = por %p86, %p87
      %p89 = scmp.ne.s32.totalorder %s77, %s78
      %p90 = scmp.eq.s32.totalorder %s21, 1
      %p91 = por %p89, %p90
      %p93 = scmp.ne.s32.totalorder %s78, %s92
      %p94 = scmp.eq.s32.totalorder %s21, 0
      %p95 = por %p93, %p94
      %s97 = sadd.s32 %s96, 1
      %p100 = scmp.eq.s32.totalorder %s15, 1
      %p101 = scmp.ne.s32.totalorder %s96, %s98
      %p102 = scmp.eq.s32.totalorder %s15, 0
      %p103 = por %p101, %p102
      %p104 = scmp.ne.s32.totalorder %s96, %s98
      %p105 = scmp.eq.s32.totalorder %s20, 1
      %p106 = por %p104, %p105
      %p107 = scmp.ne.s32.totalorder %s98, %s99
      %p108 = scmp.eq.s32.totalorder %s20, 0
      %p109 = por %p107, %p108
      %p110 = scmp.ne.s32.totalorder %s98, %s99
      %p111 = scmp.eq.s32.totalorder %s21, 1
      %p112 = por %p110, %p111
      %p114 = scmp.ne.s32.totalorder %s99, %s113
      %p115 = scmp.eq.s32.totalorder %s21, 0
      %p116 = por %p114, %p115
      %s118 = sadd.s32 %s117, 1
      %p121 = scmp.eq.s32.totalorder %s15, 1
      %p122 = scmp.ne.s32.totalorder %s117, %s119
      %p123 = scmp.eq.s32.totalorder %s15, 0
      %p124 = por %p122, %p123
      %p125 = scmp.ne.s32.totalorder %s117, %s119
      %p126 = scmp.eq.s32.totalorder %s20, 1
      %p127 = por %p125, %p126
      %p128 = scmp.ne.s32.totalorder %s119, %s120
      %p129 = scmp.eq.s32.totalorder %s20, 0
      %p130 = por %p128, %p129
      %p131 = scmp.ne.s32.totalorder %s119, %s120
      %p132 = scmp.eq.s32.totalorder %s21, 1
      %p133 = por %p131, %p132
      %p135 = scmp.ne.s32.totalorder %s120, %s134
      %p136 = scmp.eq.s32.totalorder %s21, 0
      %p137 = por %p135, %p136
      %s139 = sadd.s32 %s138, 1
      %p142 = scmp.eq.s32.totalorder %s15, 1
      %p143 = scmp.ne.s32.totalorder %s138, %s140
      %p144 = scmp.eq.s32.totalorder %s15, 0
      %p145 = por %p143, %p144
      %p146 = scmp.ne.s32.totalorder %s138, %s140
      %p147 = scmp.eq.s32.totalorder %s20, 1
      %p148 = por %p146, %p147
      %p149 = scmp.ne.s32.totalorder %s140, %s141
      %p150 = scmp.eq.s32.totalorder %s20, 0
      %p151 = por %p149, %p150
      %p152 = scmp.ne.s32.totalorder %s140, %s141
      %p153 = scmp.eq.s32.totalorder %s21, 1
      %p154 = por %p152, %p153
      %p156 = scmp.ne.s32.totalorder %s141, %s155
      %p157 = scmp.eq.s32.totalorder %s21, 0
      %p158 = por %p156, %p157
      %s159 = ssub.s32 %s15, %s22
      %p160 = scmp.eq.s32.totalorder %s159, 0
      %s162 = sadd.s32 %s161, 1
      %s163 = scalar_select %p160, %s161, %s162
      %p166 = pneg %p160
      %p167 = scmp.eq.s32.totalorder %s15, 1
      %p168 = por %p166, %p167
      %p169 = scmp.ne.s32.totalorder %s161, %s164
      %p170 = scmp.eq.s32.totalorder %s15, 0
      %p171 = por %p169, %p170
      %p172 = scmp.ne.s32.totalorder %s161, %s164
      %p173 = scmp.eq.s32.totalorder %s20, 1
      %p174 = por %p172, %p173
      %p175 = scmp.ne.s32.totalorder %s164, %s165
      %p176 = scmp.eq.s32.totalorder %s20, 0
      %p177 = por %p175, %p176
      %p178 = scmp.ne.s32.totalorder %s164, %s165
      %p179 = scmp.eq.s32.totalorder %s21, 1
      %p180 = por %p178, %p179
      %p182 = scmp.ne.s32.totalorder %s165, %s181
      %p183 = scmp.eq.s32.totalorder %s21, 0
      %p184 = por %p182, %p183
      %p185 = scmp.le.s32.totalorder 1, %s15
      %p186 = scmp.lt.s32.totalorder %s15, 3
      %p187 = pnand %p185, %p186
      %p188 = pneg %p187
      // Predicated region
      $region9: #{model_forward.3} parent=5 // pred_check
        _
      $region10: #{model_forward.3} parent=5 // pred_check_branch
        %190 = sbr.rel (%p187) target = $region12
      $region11: #{model_forward.3} parent=5 // pred_region
        %s191 = ssub.s32 %s15, 1
        // Predicated region
        $region13: #{model_forward.3} parent=11 // pred_check
          %p192 = pneg %p88
        $region14: #{model_forward.3} parent=11 // pred_check_branch
          %194 = sbr.rel (%p192) target = $region16
        $region15: #{model_forward.3} parent=11 // pred_region
          _
        $region16: #{model_forward.3} parent=11 // pred_fallthru
          _
        // Predicated region
        $region17: #{model_forward.3} parent=11 // pred_check
          %p195 = pneg %p109
        $region18: #{model_forward.3} parent=11 // pred_check_branch
          %197 = sbr.rel (%p195) target = $region20
        $region19: #{model_forward.3} parent=11 // pred_region
          _
        $region20: #{model_forward.3} parent=11 // pred_fallthru
          _
        // Predicated region
        $region21: #{model_forward.3} parent=11 // pred_check
          %p198 = pneg %p130
        $region22: #{model_forward.3} parent=11 // pred_check_branch
          %200 = sbr.rel (%p198) target = $region24
        $region23: #{model_forward.3} parent=11 // pred_region
          _
        $region24: #{model_forward.3} parent=11 // pred_fallthru
          _
        // Predicated region
        $region25: #{model_forward.3} parent=11 // pred_check
          %p201 = pneg %p151
        $region26: #{model_forward.3} parent=11 // pred_check_branch
          %203 = sbr.rel (%p201) target = $region28
        $region27: #{model_forward.3} parent=11 // pred_region
          _
        $region28: #{model_forward.3} parent=11 // pred_fallthru
          _
      $region12: #{model_forward.3} parent=5 // pred_fallthru
        _
      %p204 = scmp.lt.s32.totalorder %s15, 2
      // Predicated region
      $region29: #{model_forward.3} parent=5 // pred_check
        %p205 = pneg %p204
      $region30: #{model_forward.3} parent=5 // pred_check_branch
        %207 = sbr.rel (%p205) target = $region32
      $region31: #{model_forward.3} parent=5 // pred_region
        // Predicated region
        $region33: #{model_forward.3} parent=31 // pred_check
          %p208 = pneg %p35
        $region34: #{model_forward.3} parent=31 // pred_check_branch
          %210 = sbr.rel (%p208) target = $region36
        $region35: #{model_forward.3} parent=31 // pred_region
          %s211 = sand.u32 %s25, 1
          %s212 = sand.u32 %s25, 1
          %s213 = smul.addr %s212, 24
          %s214 = scalar_lea.vmem [#allocation2], %s213
          %s215 = smul.addr %s15, 8
          %s216 = scalar_lea.vmem %s0, %s215
          // Predicated region
          $region37: #{model_forward.3} parent=35 // pred_check
            _
          $region38: #{model_forward.3} parent=35 // pred_check_branch
            %218 = sbr.rel (0) target = $region40
          $region39: #{model_forward.3} parent=35 // pred_region
            // Predicated region
            $region41: #{model_forward.3} parent=39 // pred_check
              _
            $region42: #{model_forward.3} parent=39 // pred_check_branch
              %220 = sbr.rel (0) target = $region44
            $region43: #{model_forward.3} parent=39 // pred_region
              // Predicated region
              $region56: #{model_forward.3} parent=43 // pred_check
                _
              $region57: #{model_forward.3} parent=43 // pred_check_branch
                %239 = sbr.rel (0) target = $region59
              $region58: #{model_forward.3} parent=43 // pred_region
                loop: start=0, step=1, limit=1
                $region60: #{model_forward.3} parent=58 // loop_pre_header
                  _
                $region61: #{model_forward.3} parent=58 // loop_header
                  %s241 = sphi 0, %s245
                  %p242 = scmp.ge.s32.totalorder %s241, 1
                  %s246 = sphi %s216, %s216
                  %s247 = sphi %s214, %s214
                $region62: #{model_forward.3} parent=58 // loop_header_branch
                  %244 = sbr.rel (%p242) target = $region66
                $region63: #{model_forward.3} parent=58 // loop_body
                  %v248 = vld [vmem:[%s246] sm:$0xff]
                  %249 = vst [vmem:[%s247] sm:$0xff] %v248
                  %v250 = vld [vmem:[%s246 + $0x10] sm:$0xff]
                  %251 = vst [vmem:[%s247 + $0x8] sm:$0xff] %v250
                  %v252 = vld [vmem:[%s246 + $0x20] sm:$0xff]
                  %253 = vst [vmem:[%s247 + $0x10] sm:$0xff] %v252
                $region64: #{model_forward.3} parent=58 // loop_footer
                  %s245 = sadd.s32 1, %s241
                $region65: #{model_forward.3} parent=58 // loop_footer_branch
                  %240 = sbr.rel target = $region61
                $region66: #{model_forward.3} parent=58 // loop_exit
                  _
              $region59: #{model_forward.3} parent=43 // pred_fallthru
                _
              // Predicated region
              $region67: #{model_forward.3} parent=43 // pred_check
                _
              $region68: #{model_forward.3} parent=43 // pred_check_branch
                %255 = sbr.rel target = $region70
              $region69: #{model_forward.3} parent=43 // pred_region
                _
              $region70: #{model_forward.3} parent=43 // pred_fallthru
                _
            $region44: #{model_forward.3} parent=39 // pred_fallthru
              _
            // Predicated region
            $region45: #{model_forward.3} parent=39 // pred_check
              _
            $region46: #{model_forward.3} parent=39 // pred_check_branch
              %222 = sbr.rel target = $region48
            $region47: #{model_forward.3} parent=39 // pred_region
              loop: start=0, step=1, limit=1
              $region49: #{model_forward.3} parent=47 // loop_pre_header
                _
              $region50: #{model_forward.3} parent=47 // loop_header
                %s225 = sphi 0, %s229
                %p226 = scmp.ge.s32.totalorder %s225, 1
                %s230 = sphi %s216, %s216
                %s231 = sphi %s214, %s214
              $region51: #{model_forward.3} parent=47 // loop_header_branch
                %228 = sbr.rel (%p226) target = $region55
              $region52: #{model_forward.3} parent=47 // loop_body
                %v232 = vld [vmem:[%s230] sm:$0xff]
                %233 = vst [vmem:[%s231] sm:$0xff] %v232
                %v234 = vld [vmem:[%s230 + $0x10] sm:$0xff]
                %235 = vst [vmem:[%s231 + $0x8] sm:$0xff] %v234
                %v236 = vld [vmem:[%s230 + $0x20] sm:$0xff]
                %237 = vst [vmem:[%s231 + $0x10] sm:$0xff] %v236
              $region53: #{model_forward.3} parent=47 // loop_footer
                %s229 = sadd.s32 1, %s225
              $region54: #{model_forward.3} parent=47 // loop_footer_branch
                %224 = sbr.rel target = $region50
              $region55: #{model_forward.3} parent=47 // loop_exit
                _
            $region48: #{model_forward.3} parent=39 // pred_fallthru
              _
          $region40: #{model_forward.3} parent=35 // pred_fallthru
            _
          %256 = vnop
        $region36: #{model_forward.3} parent=31 // pred_fallthru
          _
        // Predicated region
        $region71: #{model_forward.3} parent=31 // pred_check
          %p257 = pneg %p61
        $region72: #{model_forward.3} parent=31 // pred_check_branch
          %259 = sbr.rel (%p257) target = $region74
        $region73: #{model_forward.3} parent=31 // pred_region
          %p260 = scmp.lt.s32.totalorder %s15, 1
          %s261 = scalar_select %p260, %s15, 1
          %s262 = smul.addr %s261, 8
          %s263 = scalar_lea.vmem %s1, %s262
        $region74: #{model_forward.3} parent=31 // pred_fallthru
          _
      $region32: #{model_forward.3} parent=5 // pred_fallthru
        _
      %p264 = scmp.le.s32.totalorder 1, %s15
      %p265 = scmp.lt.s32.totalorder %s15, 3
      %p266 = pnand %p264, %p265
      %p267 = pneg %p266
      // Predicated region
      $region75: #{model_forward.3} parent=5 // pred_check
        _
      $region76: #{model_forward.3} parent=5 // pred_check_branch
        %269 = sbr.rel (%p266) target = $region78
      $region77: #{model_forward.3} parent=5 // pred_region
        %s270 = ssub.s32 %s15, 1
        %s271 = sand.u32 %s28, 1
        %s272 = sand.u32 %s28, 1
        %s273 = smul.addr %s272, 24
        %s274 = scalar_lea.vmem [#allocation2], %s273
        // Predicated region
        $region79: #{model_forward.3} parent=77 // pred_check
          %p275 = pneg %p41
        $region80: #{model_forward.3} parent=77 // pred_check_branch
          %277 = sbr.rel (%p275) target = $region82
        $region81: #{model_forward.3} parent=77 // pred_region
          _
        $region82: #{model_forward.3} parent=77 // pred_fallthru
          _
        %s278 = sand.u32 %s28, 1
        %s279 = sand.u32 %s28, 1
        %s280 = smul.addr %s279, 24
        %s281 = scalar_lea.vmem [#allocation2], %s280
        %p282 = pneg %p41
        %p283 = pneg %p38
        %p284 = scmp.lt.s32.totalorder %s20, 1
        %s285 = scalar_select %p284, %s20, 1
        %s286 = smul.addr %s285, 8
        %s287 = scalar_lea.vmem %s1, %s286
        %p288 = pneg %p67
        %p289 = pneg %p64
        %p290 = pneg %p88
        %p291 = pneg %p85
        %p292 = pneg %p109
        %p293 = pneg %p106
        %p294 = pneg %p130
        %p295 = pneg %p127
        %p296 = pneg %p151
        %p297 = pneg %p148
        %p298 = pneg %p177
        %p299 = pneg %p174
        %s300 = sand.u32 %s164, 1
        %s301 = scalar_lea.sflag [#allocation4], %s300
        %s302 = sand.u32 %s164, 1
        %s303 = smul.addr %s302, 8
        %s304 = scalar_lea.vmem [#allocation3], %s303
        %p305 = scmp.lt.s32.totalorder %s20, 1
        %s306 = scalar_select %p305, %s20, 1
        %s307 = smul.addr %s306, 8
        %s308 = scalar_lea.vmem %s1, %s307
        %s309 = smul.u32 %s20, 8
        %v310 = vld [vmem:[%s308] sm:$0xff]
        %v311 = vld [vmem:[%s2] sm:$0xff]
        %v312 = vld [vmem:[%s2 + $0x8] sm:$0xff]
        %v313 = vld [vmem:[%s3] sm:$0xff]
        %v314 = vld [vmem:[%s3 + $0x8] sm:$0xff]
        %v315 = vld [vmem:[%s3 + $0x10] sm:$0xff]
        %v316 = vld [vmem:[%s3 + $0x18] sm:$0xff]
        %v317 = vld [vmem:[%s3 + $0x20] sm:$0xff]
        %v318 = vld [vmem:[%s3 + $0x28] sm:$0xff]
        %v319 = vld [vmem:[%s3 + $0x30] sm:$0xff]
        %v320 = vld [vmem:[%s3 + $0x38] sm:$0xff]
        %v321 = vld [vmem:[%s3 + $0x40] sm:$0xff]
        %v322 = vld [vmem:[%s3 + $0x48] sm:$0xff]
        %v323 = vld [vmem:[%s3 + $0x50] sm:$0xff]
        %v324 = vld [vmem:[%s3 + $0x58] sm:$0xff]
        %v325 = vld [vmem:[%s3 + $0x60] sm:$0xff]
        %v326 = vld [vmem:[%s3 + $0x68] sm:$0xff]
        %v327 = vld [vmem:[%s3 + $0x70] sm:$0xff]
        %v328 = vld [vmem:[%s3 + $0x78] sm:$0xff]
        %v329 = vld [vmem:[%s3 + $0x80] sm:$0xff]
        %v330 = vld [vmem:[%s3 + $0x88] sm:$0xff]
        %v331 = vld [vmem:[%s3 + $0x90] sm:$0xff]
        %v332 = vld [vmem:[%s3 + $0x98] sm:$0xff]
        %v333 = vld [vmem:[%s3 + $0xa0] sm:$0xff]
        %v334 = vld [vmem:[%s3 + $0xa8] sm:$0xff]
        %v335 = vld [vmem:[%s3 + $0xb0] sm:$0xff]
        %v336 = vld [vmem:[%s3 + $0xb8] sm:$0xff]
        %v337 = vld [vmem:[%s3 + $0xc0] sm:$0xff]
        %v338 = vld [vmem:[%s3 + $0xc8] sm:$0xff]
        %v339 = vld [vmem:[%s3 + $0xd0] sm:$0xff]
        %v340 = vld [vmem:[%s3 + $0xd8] sm:$0xff]
        %v341 = vld [vmem:[%s3 + $0xe0] sm:$0xff]
        %v342 = vld [vmem:[%s3 + $0xe8] sm:$0xff]
        %v343 = vld [vmem:[%s3 + $0xf0] sm:$0xff]
        %v344 = vld [vmem:[%s3 + $0xf8] sm:$0xff]
        %v345 = vld [vmem:[%s3 + $0x100] sm:$0xff]
        %v346 = vld [vmem:[%s3 + $0x108] sm:$0xff]
        %v347 = vld [vmem:[%s3 + $0x110] sm:$0xff]
        %v348 = vld [vmem:[%s3 + $0x118] sm:$0xff]
        %v349 = vld [vmem:[%s3 + $0x120] sm:$0xff]
        %v350 = vld [vmem:[%s3 + $0x128] sm:$0xff]
        %v351 = vld [vmem:[%s3 + $0x130] sm:$0xff]
        %v352 = vld [vmem:[%s3 + $0x138] sm:$0xff]
        %v353 = vld [vmem:[%s3 + $0x140] sm:$0xff]
        %v354 = vld [vmem:[%s3 + $0x148] sm:$0xff]
        %v355 = vld [vmem:[%s3 + $0x150] sm:$0xff]
        %v356 = vld [vmem:[%s3 + $0x158] sm:$0xff]
        %v357 = vld [vmem:[%s3 + $0x160] sm:$0xff]
        %v358 = vld [vmem:[%s3 + $0x168] sm:$0xff]
        %v359 = vld [vmem:[%s3 + $0x170] sm:$0xff]
        %v360 = vld [vmem:[%s3 + $0x178] sm:$0xff]
        %361 = vmatprep.subr.mxu0 %v314
        %362 = vmatpush1.msra.mxu0 %v313
        %363 = vmatprep.subr.mxu0 %v317
        %364 = vmatpush1.msra.mxu0 %v316
        %365 = vmatprep.subr.mxu0 %v320
        %366 = vmatpush1.msra.mxu0 %v319
        %367 = vmatprep.subr.mxu0 %v323
        %368 = vmatpush1.msra.mxu0 %v322
        %369 = vmatprep.subr.mxu0 %v326
        %370 = vmatpush1.msra.mxu0 %v325
        %371 = vmatprep.subr.mxu0 %v329
        %372 = vmatpush1.msra.mxu0 %v328
        %373 = vmatprep.subr.mxu0 %v332
        %374 = vmatpush1.msra.mxu0 %v331
        %375 = vmatprep.subr.mxu0 %v335
        %376 = vmatpush1.msra.mxu0 %v334
        %377 = vmatprep.subr.mxu0 %v338
        %378 = vmatpush1.msra.mxu0 %v337
        %379 = vmatprep.subr.mxu0 %v341
        %380 = vmatpush1.msra.mxu0 %v340
        %381 = vmatprep.subr.mxu0 %v344
        %382 = vmatpush1.msra.mxu0 %v343
        %383 = vmatprep.subr.mxu0 %v347
        %384 = vmatpush1.msra.mxu0 %v346
        %385 = vmatprep.subr.mxu0 %v350
        %386 = vmatpush1.msra.mxu0 %v349
        %387 = vmatprep.subr.mxu0 %v353
        %388 = vmatpush1.msra.mxu0 %v352
        %389 = vmatprep.subr.mxu0 %v356
        %390 = vmatpush1.msra.mxu0 %v355
        %391 = vmatprep.subr.mxu0 %v359
        %392 = vmatpush1.msra.mxu0 %v358
        %393 = vmatprep.subr.mxu0 0.0
        %394 = vmatpush1.msra.mxu0 0.0
        %395 = vmatprep.subr.mxu0 0.0
        %396 = vmatpush1.msra.mxu0 0.0
        %397 = vmatprep.subr.mxu0 0.0
        %398 = vmatpush1.msra.mxu0 0.0
        %399 = vmatprep.subr.mxu0 0.0
        %400 = vmatpush1.msra.mxu0 0.0
        %401 = vmatprep.subr.mxu0 0.0
        %402 = vmatpush1.msra.mxu0 0.0
        %403 = vmatprep.subr.mxu0 0.0
        %404 = vmatpush1.msra.mxu0 0.0
        %405 = vmatprep.subr.mxu0 0.0
        %406 = vmatpush1.msra.mxu0 0.0
        %407 = vmatprep.subr.mxu0 0.0
        %408 = vmatpush1.msra.mxu0 0.0
        %409 = vmatprep.subr.mxu0 0.0
        %410 = vmatpush1.msra.mxu0 0.0
        %411 = vmatprep.subr.mxu0 0.0
        %412 = vmatpush1.msra.mxu0 0.0
        %413 = vmatprep.subr.mxu0 0.0
        %414 = vmatpush1.msra.mxu0 0.0
        %415 = vmatprep.subr.mxu0 0.0
        %416 = vmatpush1.msra.mxu0 0.0
        %417 = vmatprep.subr.mxu0 0.0
        %418 = vmatpush1.msra.mxu0 0.0
        %419 = vmatprep.subr.mxu0 0.0
        %420 = vmatpush1.msra.mxu0 0.0
        %421 = vmatprep.subr.mxu0 0.0
        %422 = vmatpush1.msra.mxu0 0.0
        %423 = vmatprep.subr.mxu0 0.0
        %424 = vmatpush1.msra.mxu0 0.0
        %425 = vmatprep.mubr.f32.mxu0 0.0
        %426 = vmatmul.mubr.f32.gmra.mrb[0].mxu0 %v311
        %v427 = vpop.f32.mrb[0].mxu0
        %v428 = vadd.f32 0.0, %v427
        %v429 = vpop.f32.mrb[0].mxu0
        %v430 = vadd.f32 0.0, %v429
        %431 = vmatprep.mubr.f32.mxu0 0.0
        %432 = vmatmul.mubr.f32.gmra.mrb[0].mxu0 %v312
        %v433 = vpop.f32.mrb[0].mxu0
        %v434 = vadd.f32 0.0, %v433
        %v435 = vpop.f32.mrb[0].mxu0
        %v436 = vadd.f32 0.0, %v435
        %437 = vdwg.mxu0
        %438 = vmatprep.subr.mxu0 0.0
        %439 = vmatpush1.msra.mxu0 %v315
        %440 = vmatprep.subr.mxu0 0.0
        %441 = vmatpush1.msra.mxu0 %v318
        %442 = vmatprep.subr.mxu0 0.0
        %443 = vmatpush1.msra.mxu0 %v321
        %444 = vmatprep.subr.mxu0 0.0
        %445 = vmatpush1.msra.mxu0 %v324
        %446 = vmatprep.subr.mxu0 0.0
        %447 = vmatpush1.msra.mxu0 %v327
        %448 = vmatprep.subr.mxu0 0.0
        %449 = vmatpush1.msra.mxu0 %v330
        %450 = vmatprep.subr.mxu0 0.0
        %451 = vmatpush1.msra.mxu0 %v333
        %452 = vmatprep.subr.mxu0 0.0
        %453 = vmatpush1.msra.mxu0 %v336
        %454 = vmatprep.subr.mxu0 0.0
        %455 = vmatpush1.msra.mxu0 %v339
        %456 = vmatprep.subr.mxu0 0.0
        %457 = vmatpush1.msra.mxu0 %v342
        %458 = vmatprep.subr.mxu0 0.0
        %459 = vmatpush1.msra.mxu0 %v345
        %460 = vmatprep.subr.mxu0 0.0
        %461 = vmatpush1.msra.mxu0 %v348
        %462 = vmatprep.subr.mxu0 0.0
        %463 = vmatpush1.msra.mxu0 %v351
        %464 = vmatprep.subr.mxu0 0.0
        %465 = vmatpush1.msra.mxu0 %v354
        %466 = vmatprep.subr.mxu0 0.0
        %467 = vmatpush1.msra.mxu0 %v357
        %468 = vmatprep.subr.mxu0 0.0
        %469 = vmatpush1.msra.mxu0 %v360
        %470 = vmatprep.subr.mxu0 0.0
        %471 = vmatpush1.msra.mxu0 0.0
        %472 = vmatprep.subr.mxu0 0.0
        %473 = vmatpush1.msra.mxu0 0.0
        %474 = vmatprep.subr.mxu0 0.0
        %475 = vmatpush1.msra.mxu0 0.0
        %476 = vmatprep.subr.mxu0 0.0
        %477 = vmatpush1.msra.mxu0 0.0
        %478 = vmatprep.subr.mxu0 0.0
        %479 = vmatpush1.msra.mxu0 0.0
        %480 = vmatprep.subr.mxu0 0.0
        %481 = vmatpush1.msra.mxu0 0.0
        %482 = vmatprep.subr.mxu0 0.0
        %483 = vmatpush1.msra.mxu0 0.0
        %484 = vmatprep.subr.mxu0 0.0
        %485 = vmatpush1.msra.mxu0 0.0
        %486 = vmatprep.subr.mxu0 0.0
        %487 = vmatpush1.msra.mxu0 0.0
        %488 = vmatprep.subr.mxu0 0.0
        %489 = vmatpush1.msra.mxu0 0.0
        %490 = vmatprep.subr.mxu0 0.0
        %491 = vmatpush1.msra.mxu0 0.0
        %492 = vmatprep.subr.mxu0 0.0
        %493 = vmatpush1.msra.mxu0 0.0
        %494 = vmatprep.subr.mxu0 0.0
        %495 = vmatpush1.msra.mxu0 0.0
        %496 = vmatprep.subr.mxu0 0.0
        %497 = vmatpush1.msra.mxu0 0.0
        %498 = vmatprep.subr.mxu0 0.0
        %499 = vmatpush1.msra.mxu0 0.0
        %500 = vmatprep.subr.mxu0 0.0
        %501 = vmatpush1.msra.mxu0 0.0
        %502 = vmatprep.mubr.f32.mxu0 0.0
        %503 = vmatmul.mubr.f32.gmra.mrb[0].mxu0 %v311
        %v504 = vpop.f32.mrb[0].mxu0
        %v505 = vadd.f32 0.0, %v504
        %v506 = vpop.f32.mrb[0].mxu0
        %507 = vmatprep.mubr.f32.mxu0 0.0
        %508 = vmatmul.mubr.f32.gmra.mrb[0].mxu0 %v312
        %v509 = vpop.f32.mrb[0].mxu0
        %v510 = vadd.f32 0.0, %v509
        %v511 = vpop.f32.mrb[0].mxu0
        %512 = vdwg.mxu0
        %v513 = vld [vmem:[%s4] sm:$0xff]
        %v514 = vld [vmem:[%s4 + $0x8] sm:$0xff]
        %v515 = vld [vmem:[%s4 + $0x10] sm:$0xff]
        %v516 = vld [vmem:[%s4 + $0x18] sm:$0xff]
        %v517 = vld [vmem:[%s4 + $0x20] sm:$0xff]
        %v518 = vld [vmem:[%s4 + $0x28] sm:$0xff]
        %v519 = vld [vmem:[%s4 + $0x30] sm:$0xff]
        %v520 = vld [vmem:[%s4 + $0x38] sm:$0xff]
        %v521 = vld [vmem:[%s4 + $0x40] sm:$0xff]
        %v522 = vld [vmem:[%s4 + $0x48] sm:$0xff]
        %v523 = vld [vmem:[%s4 + $0x50] sm:$0xff]
        %v524 = vld [vmem:[%s4 + $0x58] sm:$0xff]
        %v525 = vld [vmem:[%s4 + $0x60] sm:$0xff]
        %v526 = vld [vmem:[%s4 + $0x68] sm:$0xff]
        %v527 = vld [vmem:[%s4 + $0x70] sm:$0xff]
        %v528 = vld [vmem:[%s4 + $0x78] sm:$0xff]
        %529 = vmatprep.subr.mxu0 0.0
        %530 = vmatpush1.msra.mxu0 %v513
        %531 = vmatprep.subr.mxu0 0.0
        %532 = vmatpush1.msra.mxu0 %v514
        %533 = vmatprep.subr.mxu0 0.0
        %534 = vmatpush1.msra.mxu0 %v515
        %535 = vmatprep.subr.mxu0 0.0
        %536 = vmatpush1.msra.mxu0 %v516
        %537 = vmatprep.subr.mxu0 0.0
        %538 = vmatpush1.msra.mxu0 %v517
        %539 = vmatprep.subr.mxu0 0.0
        %540 = vmatpush1.msra.mxu0 %v518
        %541 = vmatprep.subr.mxu0 0.0
        %542 = vmatpush1.msra.mxu0 %v519
        %543 = vmatprep.subr.mxu0 0.0
        %544 = vmatpush1.msra.mxu0 %v520
        %545 = vmatprep.subr.mxu0 0.0
        %546 = vmatpush1.msra.mxu0 %v521
        %547 = vmatprep.subr.mxu0 0.0
        %548 = vmatpush1.msra.mxu0 %v522
        %549 = vmatprep.subr.mxu0 0.0
        %550 = vmatpush1.msra.mxu0 %v523
        %551 = vmatprep.subr.mxu0 0.0
        %552 = vmatpush1.msra.mxu0 %v524
        %553 = vmatprep.subr.mxu0 0.0
        %554 = vmatpush1.msra.mxu0 %v525
        %555 = vmatprep.subr.mxu0 0.0
        %556 = vmatpush1.msra.mxu0 %v526
        %557 = vmatprep.subr.mxu0 0.0
        %558 = vmatpush1.msra.mxu0 %v527
        %559 = vmatprep.subr.mxu0 0.0
        %560 = vmatpush1.msra.mxu0 %v528
        %561 = vmatprep.subr.mxu0 0.0
        %562 = vmatpush1.msra.mxu0 0.0
        %563 = vmatprep.subr.mxu0 0.0
        %564 = vmatpush1.msra.mxu0 0.0
        %565 = vmatprep.subr.mxu0 0.0
        %566 = vmatpush1.msra.mxu0 0.0
        %567 = vmatprep.subr.mxu0 0.0
        %568 = vmatpush1.msra.mxu0 0.0
        %569 = vmatprep.subr.mxu0 0.0
        %570 = vmatpush1.msra.mxu0 0.0
        %571 = vmatprep.subr.mxu0 0.0
        %572 = vmatpush1.msra.mxu0 0.0
        %573 = vmatprep.subr.mxu0 0.0
        %574 = vmatpush1.msra.mxu0 0.0
        %575 = vmatprep.subr.mxu0 0.0
        %576 = vmatpush1.msra.mxu0 0.0
        %577 = vmatprep.subr.mxu0 0.0
        %578 = vmatpush1.msra.mxu0 0.0
        %579 = vmatprep.subr.mxu0 0.0
        %580 = vmatpush1.msra.mxu0 0.0
        %581 = vmatprep.subr.mxu0 0.0
        %582 = vmatpush1.msra.mxu0 0.0
        %583 = vmatprep.subr.mxu0 0.0
        %584 = vmatpush1.msra.mxu0 0.0
        %585 = vmatprep.subr.mxu0 0.0
        %586 = vmatpush1.msra.mxu0 0.0
        %587 = vmatprep.subr.mxu0 0.0
        %588 = vmatpush1.msra.mxu0 0.0
        %589 = vmatprep.subr.mxu0 0.0
        %590 = vmatpush1.msra.mxu0 0.0
        %591 = vmatprep.subr.mxu0 0.0
        %592 = vmatpush1.msra.mxu0 0.0
        %593 = vmatprep.mubr.f32.mxu0 0.0
        %594 = vmatmul.mubr.f32.gmra.mrb[0].mxu0 %v311
        %v595 = vpop.f32.mrb[0].mxu0
        %v596 = vadd.f32 0.0, %v595
        %v597 = vpop.f32.mrb[0].mxu0
        %598 = vmatprep.mubr.f32.mxu0 0.0
        %599 = vmatmul.mubr.f32.gmra.mrb[0].mxu0 %v312
        %v600 = vpop.f32.mrb[0].mxu0
        %v601 = vadd.f32 0.0, %v600
        %v602 = vpop.f32.mrb[0].mxu0
        %603 = vdwg.mxu0
        %s604 = scalar_lea.vmem %s2, %s309
        %v605 = vld [vmem:[%s604] sm:$0xff]
        %v606 = vld [vmem:[%s5] sm:$0xff]
        %v607 = vld [vmem:[%s5 + $0x8] sm:$0xff]
        %v608 = vld [vmem:[%s5 + $0x10] sm:$0xff]
        %v609 = vld [vmem:[%s5 + $0x18] sm:$0xff]
        %v610 = vld [vmem:[%s5 + $0x20] sm:$0xff]
        %v611 = vld [vmem:[%s5 + $0x28] sm:$0xff]
        %v612 = vld [vmem:[%s5 + $0x30] sm:$0xff]
        %v613 = vld [vmem:[%s5 + $0x38] sm:$0xff]
        %v614 = vld [vmem:[%s5 + $0x40] sm:$0xff]
        %v615 = vld [vmem:[%s5 + $0x48] sm:$0xff]
        %v616 = vld [vmem:[%s5 + $0x50] sm:$0xff]
        %v617 = vld [vmem:[%s5 + $0x58] sm:$0xff]
        %v618 = vld [vmem:[%s5 + $0x60] sm:$0xff]
        %v619 = vld [vmem:[%s5 + $0x68] sm:$0xff]
        %v620 = vld [vmem:[%s5 + $0x70] sm:$0xff]
        %v621 = vld [vmem:[%s5 + $0x78] sm:$0xff]
        %622 = vmatprep.subr.mxu0 0.0
        %623 = vmatpush1.msra.mxu0 %v606
        %624 = vmatprep.subr.mxu0 0.0
        %625 = vmatpush1.msra.mxu0 %v607
        %626 = vmatprep.subr.mxu0 0.0
        %627 = vmatpush1.msra.mxu0 %v608
        %628 = vmatprep.subr.mxu0 0.0
        %629 = vmatpush1.msra.mxu0 %v609
        %630 = vmatprep.subr.mxu0 0.0
        %631 = vmatpush1.msra.mxu0 %v610
        %632 = vmatprep.subr.mxu0 0.0
        %633 = vmatpush1.msra.mxu0 %v611
        %634 = vmatprep.subr.mxu0 0.0
        %635 = vmatpush1.msra.mxu0 %v612
        %636 = vmatprep.subr.mxu0 0.0
        %637 = vmatpush1.msra.mxu0 %v613
        %638 = vmatprep.subr.mxu0 0.0
        %639 = vmatpush1.msra.mxu0 %v614
        %640 = vmatprep.subr.mxu0 0.0
        %641 = vmatpush1.msra.mxu0 %v615
        %642 = vmatprep.subr.mxu0 0.0
        %643 = vmatpush1.msra.mxu0 %v616
        %644 = vmatprep.subr.mxu0 0.0
        %645 = vmatpush1.msra.mxu0 %v617
        %646 = vmatprep.subr.mxu0 0.0
        %647 = vmatpush1.msra.mxu0 %v618
        %648 = vmatprep.subr.mxu0 0.0
        %649 = vmatpush1.msra.mxu0 %v619
        %650 = vmatprep.subr.mxu0 0.0
        %651 = vmatpush1.msra.mxu0 %v620
        %652 = vmatprep.subr.mxu0 0.0
        %653 = vmatpush1.msra.mxu0 %v621
        %654 = vmatprep.subr.mxu0 0.0
        %655 = vmatpush1.msra.mxu0 0.0
        %656 = vmatprep.subr.mxu0 0.0
        %657 = vmatpush1.msra.mxu0 0.0
        %658 = vmatprep.subr.mxu0 0.0
        %659 = vmatpush1.msra.mxu0 0.0
        %660 = vmatprep.subr.mxu0 0.0
        %661 = vmatpush1.msra.mxu0 0.0
        %662 = vmatprep.subr.mxu0 0.0
        %663 = vmatpush1.msra.mxu0 0.0
        %664 = vmatprep.subr.mxu0 0.0
        %665 = vmatpush1.msra.mxu0 0.0
        %666 = vmatprep.subr.mxu0 0.0
        %667 = vmatpush1.msra.mxu0 0.0
        %668 = vmatprep.subr.mxu0 0.0
        %669 = vmatpush1.msra.mxu0 0.0
        %670 = vmatprep.subr.mxu0 0.0
        %671 = vmatpush1.msra.mxu0 0.0
        %672 = vmatprep.subr.mxu0 0.0
        %673 = vmatpush1.msra.mxu0 0.0
        %674 = vmatprep.subr.mxu0 0.0
        %675 = vmatpush1.msra.mxu0 0.0
        %676 = vmatprep.subr.mxu0 0.0
        %677 = vmatpush1.msra.mxu0 0.0
        %678 = vmatprep.subr.mxu0 0.0
        %679 = vmatpush1.msra.mxu0 0.0
        %680 = vmatprep.subr.mxu0 0.0
        %681 = vmatpush1.msra.mxu0 0.0
        %682 = vmatprep.subr.mxu0 0.0
        %683 = vmatpush1.msra.mxu0 0.0
        %684 = vmatprep.subr.mxu0 0.0
        %685 = vmatpush1.msra.mxu0 0.0
        %686 = vmatprep.mubr.f32.mxu0 0.0
        %687 = vmatmul.mubr.f32.gmra.mrb[0].mxu0 %v605
        %v688 = vpop.f32.mrb[0].mxu0
        %v689 = vadd.f32 0.0, %v688
        %v690 = vpop.f32.mrb[0].mxu0
        %691 = vdwg.mxu0
        %v692 = vld [vmem:[%s274] sm:$0xff]
        %693 = vxpose.xlu0.b32.start [1/16] %v596, 128
        %694 = vxpose.xlu0.b32.cont [2/16] %v601, 128
        %695 = vxpose.xlu0.b32.cont [3/16] 0.0, 128
        %696 = vxpose.xlu0.b32.cont [4/16] 0.0, 128
        %697 = vxpose.xlu0.b32.cont [5/16] 0.0, 128
        %698 = vxpose.xlu0.b32.cont [6/16] 0.0, 128
        %699 = vxpose.xlu0.b32.cont [7/16] 0.0, 128
        %700 = vxpose.xlu0.b32.cont [8/16] 0.0, 128
        %701 = vxpose.xlu0.b32.cont [9/16] 0.0, 128
        %702 = vxpose.xlu0.b32.cont [10/16] 0.0, 128
        %703 = vxpose.xlu0.b32.cont [11/16] 0.0, 128
        %704 = vxpose.xlu0.b32.cont [12/16] 0.0, 128
        %705 = vxpose.xlu0.b32.cont [13/16] 0.0, 128
        %706 = vxpose.xlu0.b32.cont [14/16] 0.0, 128
        %707 = vxpose.xlu0.b32.cont [15/16] 0.0, 128
        %708 = vxpose.xlu0.b32.end [16/16] 0.0, 128
        %v709 = vpop.trf.xlu0
        %v710 = vpop.trf.xlu0
        %v711 = vpop.trf.xlu0
        %v712 = vpop.trf.xlu0
        %v713 = vpop.trf.xlu0
        %v714 = vpop.trf.xlu0
        %v715 = vpop.trf.xlu0
        %v716 = vpop.trf.xlu0
        %v717 = vpop.trf.xlu0
        %v718 = vpop.trf.xlu0
        %v719 = vpop.trf.xlu0
        %v720 = vpop.trf.xlu0
        %v721 = vpop.trf.xlu0
        %v722 = vpop.trf.xlu0
        %v723 = vpop.trf.xlu0
        %v724 = vpop.trf.xlu0
        %726 = vset.pattern.permute.xlu0 0
        %727 = vperm.xlu0 %726, %v689
        %v728 = vpop.permute.xlu0 %727
        %v730 = vlaneseq
        %v731 = vshrl.u32 %v730, 7
        %v732 = vsub.s32 0, %v731
        %v733 = vrot.slane %v709, %v732
        %v734 = vadd.f32 %v728, %v733
        %v735 = vadd.f32 %v734, %v692
        %vm736 = vcmp.gt.f32.partialorder %v735, 0.0
        %v737 = vmul.f32 %v735, 0.2
        %v738 = vsel %vm736, %v735, %v737
        %vm739 = vcmp.gt.f32.partialorder %v310, 0.0
        %v740 = vsel %vm739, %v738, -1e+30
        %vm741 = vcmask 130048
        %v742 = vsel %vm741, %v740, -inf
        %743 = vmax.xlane.f32.xlu0 %v742
        %v744 = vpop.xlane.xlu0 %743
        %v745 = vsub.f32 %v740, %v744
        %v746 = vmul.f32 %v745, 1.442695
        %v747 = vpow.pop %v746
        %v748 = vmul.f32 %v747, %v310
        %v749 = vsel %vm741, %v748, 0.0
        %750 = vadd.xlane.f32.xlu0 %v749
        %v751 = vpop.xlane.xlu0 %750
        %v752 = vadd.f32 %v751, 1e-30
        %v753 = vrcp.pop %v752
        %v754 = vmul.f32 %v748, %v753
        %s755 = scalar_lea.vmem %s274, 8 [#allocation2]
        %v756 = vld [vmem:[%s755] sm:$0xff]
        %759 = vrot.lane.b32.xlu0 %v596, 127
        %v760 = vpop.permute.xlu0 %759
        %761 = vrot.lane.b32.xlu0 %v601, 127
        %v762 = vpop.permute.xlu0 %761
        %765 = vxpose.xlu0.b32.start [1/16] %v760, 128
        %766 = vxpose.xlu0.b32.cont [2/16] %v762, 128
        %767 = vxpose.xlu0.b32.cont [3/16] 0.0, 128
        %768 = vxpose.xlu0.b32.cont [4/16] 0.0, 128
        %769 = vxpose.xlu0.b32.cont [5/16] 0.0, 128
        %770 = vxpose.xlu0.b32.cont [6/16] 0.0, 128
        %771 = vxpose.xlu0.b32.cont [7/16] 0.0, 128
        %772 = vxpose.xlu0.b32.cont [8/16] 0.0, 128
        %773 = vxpose.xlu0.b32.cont [9/16] 0.0, 128
        %774 = vxpose.xlu0.b32.cont [10/16] 0.0, 128
        %775 = vxpose.xlu0.b32.cont [11/16] 0.0, 128
        %776 = vxpose.xlu0.b32.cont [12/16] 0.0, 128
        %777 = vxpose.xlu0.b32.cont [13/16] 0.0, 128
        %778 = vxpose.xlu0.b32.cont [14/16] 0.0, 128
        %779 = vxpose.xlu0.b32.cont [15/16] 0.0, 128
        %780 = vxpose.xlu0.b32.end [16/16] 0.0, 128
        %v781 = vpop.trf.xlu0
        %v782 = vpop.trf.xlu0
        %v783 = vpop.trf.xlu0
        %v784 = vpop.trf.xlu0
        %v785 = vpop.trf.xlu0
        %v786 = vpop.trf.xlu0
        %v787 = vpop.trf.xlu0
        %v788 = vpop.trf.xlu0
        %v789 = vpop.trf.xlu0
        %v790 = vpop.trf.xlu0
        %v791 = vpop.trf.xlu0
        %v792 = vpop.trf.xlu0
        %v793 = vpop.trf.xlu0
        %v794 = vpop.trf.xlu0
        %v795 = vpop.trf.xlu0
        %v796 = vpop.trf.xlu0
        %797 = vset.pattern.permute.xlu0 1
        %798 = vperm.xlu0 %797, %v689
        %v799 = vpop.permute.xlu0 %798
        %v801 = vlaneseq
        %v802 = vshrl.u32 %v801, 7
        %v803 = vsub.s32 0, %v802
        %v804 = vrot.slane %v781, %v803
        %v805 = vadd.f32 %v799, %v804
        %v806 = vadd.f32 %v805, %v756
        %vm807 = vcmp.gt.f32.partialorder %v806, 0.0
        %v808 = vmul.f32 %v806, 0.2
        %v809 = vsel %vm807, %v806, %v808
        %v810 = vsel %vm739, %v809, -1e+30
        %v811 = vsel %vm741, %v810, -inf
        %812 = vmax.xlane.f32.xlu0 %v811
        %v813 = vpop.xlane.xlu0 %812
        %v814 = vsub.f32 %v810, %v813
        %v815 = vmul.f32 %v814, 1.442695
        %v816 = vpow.pop %v815
        %v817 = vmul.f32 %v816, %v310
        %v818 = vsel %vm741, %v817, 0.0
        %819 = vadd.xlane.f32.xlu0 %v818
        %v820 = vpop.xlane.xlu0 %819
        %v821 = vadd.f32 %v820, 1e-30
        %v822 = vrcp.pop %v821
        %v823 = vmul.f32 %v817, %v822
        %v825 = vsel %vm741, %v823, 0
        %827 = vmatprep.subr.mxu0 0.0
        %828 = vmatpush1.msra.mxu0 %v430
        %829 = vmatprep.subr.mxu0 0.0
        %830 = vmatpush1.msra.mxu0 %v436
        %831 = vmatprep.subr.mxu0 0.0
        %832 = vmatpush1.msra.mxu0 0.0
        %833 = vmatprep.subr.mxu0 0.0
        %834 = vmatpush1.msra.mxu0 0.0
        %835 = vmatprep.subr.mxu0 0.0
        %836 = vmatpush1.msra.mxu0 0.0
        %837 = vmatprep.subr.mxu0 0.0
        %838 = vmatpush1.msra.mxu0 0.0
        %839 = vmatprep.subr.mxu0 0.0
        %840 = vmatpush1.msra.mxu0 0.0
        %841 = vmatprep.subr.mxu0 0.0
        %842 = vmatpush1.msra.mxu0 0.0
        %843 = vmatprep.subr.mxu0 0.0
        %844 = vmatpush1.msra.mxu0 0.0
        %845 = vmatprep.subr.mxu0 0.0
        %846 = vmatpush1.msra.mxu0 0.0
        %847 = vmatprep.subr.mxu0 0.0
        %848 = vmatpush1.msra.mxu0 0.0
        %849 = vmatprep.subr.mxu0 0.0
        %850 = vmatpush1.msra.mxu0 0.0
        %851 = vmatprep.subr.mxu0 0.0
        %852 = vmatpush1.msra.mxu0 0.0
        %853 = vmatprep.subr.mxu0 0.0
        %854 = vmatpush1.msra.mxu0 0.0
        %855 = vmatprep.subr.mxu0 0.0
        %856 = vmatpush1.msra.mxu0 0.0
        %857 = vmatprep.subr.mxu0 0.0
        %858 = vmatpush1.msra.mxu0 0.0
        %859 = vmatprep.subr.mxu0 0.0
        %860 = vmatpush1.msra.mxu0 0.0
        %861 = vmatprep.subr.mxu0 0.0
        %862 = vmatpush1.msra.mxu0 0.0
        %863 = vmatprep.subr.mxu0 0.0
        %864 = vmatpush1.msra.mxu0 0.0
        %865 = vmatprep.subr.mxu0 0.0
        %866 = vmatpush1.msra.mxu0 0.0
        %867 = vmatprep.subr.mxu0 0.0
        %868 = vmatpush1.msra.mxu0 0.0
        %869 = vmatprep.subr.mxu0 0.0
        %870 = vmatpush1.msra.mxu0 0.0
        %871 = vmatprep.subr.mxu0 0.0
        %872 = vmatpush1.msra.mxu0 0.0
        %873 = vmatprep.subr.mxu0 0.0
        %874 = vmatpush1.msra.mxu0 0.0
        %875 = vmatprep.subr.mxu0 0.0
        %876 = vmatpush1.msra.mxu0 0.0
        %877 = vmatprep.subr.mxu0 0.0
        %878 = vmatpush1.msra.mxu0 0.0
        %879 = vmatprep.subr.mxu0 0.0
        %880 = vmatpush1.msra.mxu0 0.0
        %881 = vmatprep.subr.mxu0 0.0
        %882 = vmatpush1.msra.mxu0 0.0
        %883 = vmatprep.subr.mxu0 0.0
        %884 = vmatpush1.msra.mxu0 0.0
        %885 = vmatprep.subr.mxu0 0.0
        %886 = vmatpush1.msra.mxu0 0.0
        %887 = vmatprep.subr.mxu0 0.0
        %888 = vmatpush1.msra.mxu0 0.0
        %889 = vmatprep.subr.mxu0 0.0
        %890 = vmatpush1.msra.mxu0 0.0
        %891 = vmatprep.mubr.f32.mxu0 0.0
        %892 = vmatmul.mubr.f32.gmra.mrb[0].mxu0 %v825
        %v893 = vpop.f32.mrb[0].mxu0
        %v894 = vadd.f32 0.0, %v893
        %v895 = vpop.f32.mrb[0].mxu0
        %896 = vdwg.mxu0
        %v898 = vsel %vm741, %v754, 0
        %900 = vmatprep.subr.mxu0 0.0
        %901 = vmatpush1.msra.mxu0 %v428
        %902 = vmatprep.subr.mxu0 0.0
        %903 = vmatpush1.msra.mxu0 %v434
        %904 = vmatprep.subr.mxu0 0.0
        %905 = vmatpush1.msra.mxu0 0.0
        %906 = vmatprep.subr.mxu0 0.0
        %907 = vmatpush1.msra.mxu0 0.0
        %908 = vmatprep.subr.mxu0 0.0
        %909 = vmatpush1.msra.mxu0 0.0
        %910 = vmatprep.subr.mxu0 0.0
        %911 = vmatpush1.msra.mxu0 0.0
        %912 = vmatprep.subr.mxu0 0.0
        %913 = vmatpush1.msra.mxu0 0.0
        %914 = vmatprep.subr.mxu0 0.0
        %915 = vmatpush1.msra.mxu0 0.0
        %916 = vmatprep.subr.mxu0 0.0
        %917 = vmatpush1.msra.mxu0 0.0
        %918 = vmatprep.subr.mxu0 0.0
        %919 = vmatpush1.msra.mxu0 0.0
        %920 = vmatprep.subr.mxu0 0.0
        %921 = vmatpush1.msra.mxu0 0.0
        %922 = vmatprep.subr.mxu0 0.0
        %923 = vmatpush1.msra.mxu0 0.0
        %924 = vmatprep.subr.mxu0 0.0
        %925 = vmatpush1.msra.mxu0 0.0
        %926 = vmatprep.subr.mxu0 0.0
        %927 = vmatpush1.msra.mxu0 0.0
        %928 = vmatprep.subr.mxu0 0.0
        %929 = vmatpush1.msra.mxu0 0.0
        %930 = vmatprep.subr.mxu0 0.0
        %931 = vmatpush1.msra.mxu0 0.0
        %932 = vmatprep.subr.mxu0 0.0
        %933 = vmatpush1.msra.mxu0 0.0
        %934 = vmatprep.subr.mxu0 0.0
        %935 = vmatpush1.msra.mxu0 0.0
        %936 = vmatprep.subr.mxu0 0.0
        %937 = vmatpush1.msra.mxu0 0.0
        %938 = vmatprep.subr.mxu0 0.0
        %939 = vmatpush1.msra.mxu0 0.0
        %940 = vmatprep.subr.mxu0 0.0
        %941 = vmatpush1.msra.mxu0 0.0
        %942 = vmatprep.subr.mxu0 0.0
        %943 = vmatpush1.msra.mxu0 0.0
        %944 = vmatprep.subr.mxu0 0.0
        %945 = vmatpush1.msra.mxu0 0.0
        %946 = vmatprep.subr.mxu0 0.0
        %947 = vmatpush1.msra.mxu0 0.0
        %948 = vmatprep.subr.mxu0 0.0
        %949 = vmatpush1.msra.mxu0 0.0
        %950 = vmatprep.subr.mxu0 0.0
        %951 = vmatpush1.msra.mxu0 0.0
        %952 = vmatprep.subr.mxu0 0.0
        %953 = vmatpush1.msra.mxu0 0.0
        %954 = vmatprep.subr.mxu0 0.0
        %955 = vmatpush1.msra.mxu0 0.0
        %956 = vmatprep.subr.mxu0 0.0
        %957 = vmatpush1.msra.mxu0 0.0
        %958 = vmatprep.subr.mxu0 0.0
        %959 = vmatpush1.msra.mxu0 0.0
        %960 = vmatprep.subr.mxu0 0.0
        %961 = vmatpush1.msra.mxu0 0.0
        %962 = vmatprep.subr.mxu0 0.0
        %963 = vmatpush1.msra.mxu0 0.0
        %964 = vmatprep.mubr.f32.mxu0 0.0
        %965 = vmatmul.mubr.f32.gmra.mrb[0].mxu0 %v898
        %v966 = vpop.f32.mrb[0].mxu0
        %v967 = vadd.f32 %v894, %v966
        %v968 = vpop.f32.mrb[0].mxu0
        %969 = vdwg.mxu0
        %s970 = scalar_lea.vmem %s274, 16 [#allocation2]
        %v971 = vld [vmem:[%s970] sm:$0xff]
        %972 = vrot.lane.b32.xlu0 %v596, 126
        %v973 = vpop.permute.xlu0 %972
        %974 = vrot.lane.b32.xlu0 %v601, 126
        %v975 = vpop.permute.xlu0 %974
        %978 = vxpose.xlu0.b32.start [1/16] %v973, 128
        %979 = vxpose.xlu0.b32.cont [2/16] %v975, 128
        %980 = vxpose.xlu0.b32.cont [3/16] 0.0, 128
        %981 = vxpose.xlu0.b32.cont [4/16] 0.0, 128
        %982 = vxpose.xlu0.b32.cont [5/16] 0.0, 128
        %983 = vxpose.xlu0.b32.cont [6/16] 0.0, 128
        %984 = vxpose.xlu0.b32.cont [7/16] 0.0, 128
        %985 = vxpose.xlu0.b32.cont [8/16] 0.0, 128
        %986 = vxpose.xlu0.b32.cont [9/16] 0.0, 128
        %987 = vxpose.xlu0.b32.cont [10/16] 0.0, 128
        %988 = vxpose.xlu0.b32.cont [11/16] 0.0, 128
        %989 = vxpose.xlu0.b32.cont [12/16] 0.0, 128
        %990 = vxpose.xlu0.b32.cont [13/16] 0.0, 128
        %991 = vxpose.xlu0.b32.cont [14/16] 0.0, 128
        %992 = vxpose.xlu0.b32.cont [15/16] 0.0, 128
        %993 = vxpose.xlu0.b32.end [16/16] 0.0, 128
        %v994 = vpop.trf.xlu0
        %v995 = vpop.trf.xlu0
        %v996 = vpop.trf.xlu0
        %v997 = vpop.trf.xlu0
        %v998 = vpop.trf.xlu0
        %v999 = vpop.trf.xlu0
        %v1000 = vpop.trf.xlu0
        %v1001 = vpop.trf.xlu0
        %v1002 = vpop.trf.xlu0
        %v1003 = vpop.trf.xlu0
        %v1004 = vpop.trf.xlu0
        %v1005 = vpop.trf.xlu0
        %v1006 = vpop.trf.xlu0
        %v1007 = vpop.trf.xlu0
        %v1008 = vpop.trf.xlu0
        %v1009 = vpop.trf.xlu0
        %1010 = vset.pattern.permute.xlu0 2
        %1011 = vperm.xlu0 %1010, %v689
        %v1012 = vpop.permute.xlu0 %1011
        %v1014 = vlaneseq
        %v1015 = vshrl.u32 %v1014, 7
        %v1016 = vsub.s32 0, %v1015
        %v1017 = vrot.slane %v994, %v1016
        %v1018 = vadd.f32 %v1012, %v1017
        %v1019 = vadd.f32 %v1018, %v971
        %vm1020 = vcmp.gt.f32.partialorder %v1019, 0.0
        %v1021 = vmul.f32 %v1019, 0.2
        %v1022 = vsel %vm1020, %v1019, %v1021
        %v1023 = vsel %vm739, %v1022, -1e+30
        %v1024 = vsel %vm741, %v1023, -inf
        %1025 = vmax.xlane.f32.xlu0 %v1024
        %v1026 = vpop.xlane.xlu0 %1025
        %v1027 = vsub.f32 %v1023, %v1026
        %v1028 = vmul.f32 %v1027, 1.442695
        %v1029 = vpow.pop %v1028
        %v1030 = vmul.f32 %v1029, %v310
        %v1031 = vsel %vm741, %v1030, 0.0
        %1032 = vadd.xlane.f32.xlu0 %v1031
        %v1033 = vpop.xlane.xlu0 %1032
        %v1034 = vadd.f32 %v1033, 1e-30
        %v1035 = vrcp.pop %v1034
        %v1036 = vmul.f32 %v1030, %v1035
        %v1038 = vsel %vm741, %v1036, 0
        %1040 = vmatprep.subr.mxu0 0.0
        %1041 = vmatpush1.msra.mxu0 %v505
        %1042 = vmatprep.subr.mxu0 0.0
        %1043 = vmatpush1.msra.mxu0 %v510
        %1044 = vmatprep.subr.mxu0 0.0
        %1045 = vmatpush1.msra.mxu0 0.0
        %1046 = vmatprep.subr.mxu0 0.0
        %1047 = vmatpush1.msra.mxu0 0.0
        %1048 = vmatprep.subr.mxu0 0.0
        %1049 = vmatpush1.msra.mxu0 0.0
        %1050 = vmatprep.subr.mxu0 0.0
        %1051 = vmatpush1.msra.mxu0 0.0
        %1052 = vmatprep.subr.mxu0 0.0
        %1053 = vmatpush1.msra.mxu0 0.0
        %1054 = vmatprep.subr.mxu0 0.0
        %1055 = vmatpush1.msra.mxu0 0.0
        %1056 = vmatprep.subr.mxu0 0.0
        %1057 = vmatpush1.msra.mxu0 0.0
        %1058 = vmatprep.subr.mxu0 0.0
        %1059 = vmatpush1.msra.mxu0 0.0
        %1060 = vmatprep.subr.mxu0 0.0
        %1061 = vmatpush1.msra.mxu0 0.0
        %1062 = vmatprep.subr.mxu0 0.0
        %1063 = vmatpush1.msra.mxu0 0.0
        %1064 = vmatprep.subr.mxu0 0.0
        %1065 = vmatpush1.msra.mxu0 0.0
        %1066 = vmatprep.subr.mxu0 0.0
        %1067 = vmatpush1.msra.mxu0 0.0
        %1068 = vmatprep.subr.mxu0 0.0
        %1069 = vmatpush1.msra.mxu0 0.0
        %1070 = vmatprep.subr.mxu0 0.0
        %1071 = vmatpush1.msra.mxu0 0.0
        %1072 = vmatprep.subr.mxu0 0.0
        %1073 = vmatpush1.msra.mxu0 0.0
        %1074 = vmatprep.subr.mxu0 0.0
        %1075 = vmatpush1.msra.mxu0 0.0
        %1076 = vmatprep.subr.mxu0 0.0
        %1077 = vmatpush1.msra.mxu0 0.0
        %1078 = vmatprep.subr.mxu0 0.0
        %1079 = vmatpush1.msra.mxu0 0.0
        %1080 = vmatprep.subr.mxu0 0.0
        %1081 = vmatpush1.msra.mxu0 0.0
        %1082 = vmatprep.subr.mxu0 0.0
        %1083 = vmatpush1.msra.mxu0 0.0
        %1084 = vmatprep.subr.mxu0 0.0
        %1085 = vmatpush1.msra.mxu0 0.0
        %1086 = vmatprep.subr.mxu0 0.0
        %1087 = vmatpush1.msra.mxu0 0.0
        %1088 = vmatprep.subr.mxu0 0.0
        %1089 = vmatpush1.msra.mxu0 0.0
        %1090 = vmatprep.subr.mxu0 0.0
        %1091 = vmatpush1.msra.mxu0 0.0
        %1092 = vmatprep.subr.mxu0 0.0
        %1093 = vmatpush1.msra.mxu0 0.0
        %1094 = vmatprep.subr.mxu0 0.0
        %1095 = vmatpush1.msra.mxu0 0.0
        %1096 = vmatprep.subr.mxu0 0.0
        %1097 = vmatpush1.msra.mxu0 0.0
        %1098 = vmatprep.subr.mxu0 0.0
        %1099 = vmatpush1.msra.mxu0 0.0
        %1100 = vmatprep.subr.mxu0 0.0
        %1101 = vmatpush1.msra.mxu0 0.0
        %1102 = vmatprep.subr.mxu0 0.0
        %1103 = vmatpush1.msra.mxu0 0.0
        %1104 = vmatprep.mubr.f32.mxu0 0.0
        %1105 = vmatmul.mubr.f32.gmra.mrb[0].mxu0 %v1038
        %v1106 = vpop.f32.mrb[0].mxu0
        %v1107 = vadd.f32 0.0, %v1106
        %v1108 = vpop.f32.mrb[0].mxu0
        %1109 = vdwg.mxu0
        %v1110 = vadd.f32 %v967, %v1107
        %v1111 = vmul.f32 %v1110, 0.33333334
        %1112 = vst [vmem:[%s304] sm:$0xff] %v1111
        %s1113 = sand.u32 %s164, 1
        %s1114 = scalar_lea.sflag [#allocation4], %s1113
        %s1115 = sand.u32 %s164, 1
        %s1116 = smul.addr %s1115, 8
        %s1117 = scalar_lea.vmem [#allocation3], %s1116
        // Predicated region
        $region83: #{model_forward.3} parent=77 // pred_check
          %p1118 = pneg %p174
        $region84: #{model_forward.3} parent=77 // pred_check_branch
          %1120 = sbr.rel (%p1118) target = $region86
        $region85: #{model_forward.3} parent=77 // pred_region
          %s1122 = ssub.s32 128, 128
          %1123 = vsyncadd %s1114, %s1122
          %s1124 = smul.addr %s20, 128
          %s1125 = scalar_lea.hbm %s6, %s1124
          %s1127 = sshll.u32 %s1117, 4
          %s1128 = int_to_ptr.vmem [resolvable:$true] %s1127
          %1130 = dma.vmem_to_hbm [thread:$0]  %s1128, 128, %s1125, %s1114
        $region86: #{model_forward.3} parent=77 // pred_fallthru
          _
      $region78: #{model_forward.3} parent=5 // pred_fallthru
        _
      %p1131 = scmp.le.s32.totalorder 2, %s15
      // Predicated region
      $region87: #{model_forward.3} parent=5 // pred_check
        %p1132 = pneg %p1131
      $region88: #{model_forward.3} parent=5 // pred_check_branch
        %1134 = sbr.rel (%p1132) target = $region90
      $region89: #{model_forward.3} parent=5 // pred_region
        %s1135 = ssub.s32 %s15, 2
        // Predicated region
        $region91: #{model_forward.3} parent=89 // pred_check
          %p1136 = pneg %p180
        $region92: #{model_forward.3} parent=89 // pred_check_branch
          %1138 = sbr.rel (%p1136) target = $region94
        $region93: #{model_forward.3} parent=89 // pred_region
          %s1139 = sand.u32 %s165, 1
          %s1140 = scalar_lea.sflag [#allocation4], %s1139
          %s1141 = sand.u32 %s165, 1
          %s1142 = smul.addr %s1141, 8
          %s1143 = scalar_lea.vmem [#allocation3], %s1142
          %1144 = dma.done %s1140, 128
        $region94: #{model_forward.3} parent=89 // pred_fallthru
          _
      $region90: #{model_forward.3} parent=5 // pred_fallthru
        _
    $region6: #{model_forward.3} parent=1 // loop_footer
      %s19 = sadd.s32 1, %s15
    $region7: #{model_forward.3} parent=1 // loop_footer_branch
      %14 = sbr.rel target = $region3
    $region8: #{model_forward.3} parent=1 // loop_exit
      _
    %1145 = vsyncpa [#allocation4], 1
    %s1146 = scalar_lea.sflag [#allocation4], 1
    %1147 = vsyncpa %s1146, 1

// kernel: model_forward.2
$region0: #{model_forward.2}
  #allocation0 [shape = 'u32[]', space=smem, size = 0x4, offset = 0x4, fixed_abs, tag = 'smem constant byte address 0x4 - core index']
  #allocation1 [shape = 'u32[144,128]{1,0:T(1,128)}', space=vmem, size = 0x12000, scoped, tag = 'internal scratch']
  %s0 = inlined_call_operand.vmem [shape: f32[16,16,39], index: 0, kind: input, shape index: {}]
  %s1 = inlined_call_operand.vmem [shape: f32[16,16], index: 1, kind: input, shape index: {}]
  %s2 = inlined_call_operand.vmem [shape: f32[16,128], index: 2, kind: input, shape index: {}]
  %s3 = inlined_call_operand.vmem [shape: f32[128,384], index: 3, kind: input, shape index: {}]
  %s4 = inlined_call_operand.vmem [shape: f32[128,8], index: 4, kind: input, shape index: {}]
  %s5 = inlined_call_operand.vmem [shape: f32[128,8], index: 5, kind: input, shape index: {}]
  %s6 = inlined_call_operand.vmem [shape: f32[6,39], index: 6, kind: input, shape index: {}]
  %s7 = inlined_call_operand.vmem [shape: f32[16,128], index: 7, kind: output, shape index: {0}]
  %s8 = inlined_call_operand.vmem [shape: f32[3,16,16], index: 8, kind: output, shape index: {1}]
  %9 = xla_tuple %s7, %s8
  %s10 = sld [smem:[#allocation0]]
  $region103: #{model_forward.2} parent=0
    _
  %s12 = ssub.s32 1, %s10
  %s13 = scalar_select 0, %s12, %s10
  $region1: #{model_forward.2} parent=0
    #allocation2 [shape = 'u8[24576]{0}', space=vmem, size = 0x6000, scoped, tag = 'output window, operand 1']
    loop: start=0, step=1, limit=4
    $region2: #{model_forward.2} parent=1 // loop_pre_header
      _
    $region3: #{model_forward.2} parent=1 // loop_header
      %s15 = sphi 0, %s19
      %p16 = scmp.ge.s32.totalorder %s15, 4
      %s25 = sphi 0, %s27
      %s28 = sphi 0, %s25
      %s29 = sphi 0, %s28
      %s45 = sphi 0, %s29
      %s51 = sphi 0, %s53
      %s54 = sphi 0, %s51
      %s55 = sphi 0, %s54
      %s71 = sphi 0, %s55
      %s75 = sphi 0, %s75
      %s77 = sphi 0, %s75
      %s78 = sphi 0, %s77
      %s92 = sphi 0, %s78
      %s96 = sphi 0, %s96
      %s98 = sphi 0, %s96
      %s99 = sphi 0, %s98
      %s113 = sphi 0, %s99
      %s117 = sphi 0, %s117
      %s119 = sphi 0, %s117
      %s120 = sphi 0, %s119
      %s134 = sphi 0, %s120
      %s138 = sphi 0, %s138
      %s140 = sphi 0, %s138
      %s141 = sphi 0, %s140
      %s155 = sphi 0, %s141
      %s159 = sphi 0, %s159
      %s161 = sphi 0, %s159
      %s162 = sphi 0, %s161
      %s176 = sphi 0, %s162
      %s182 = sphi 0, %s184
      %s185 = sphi 0, %s182
      %s186 = sphi 0, %s185
      %s202 = sphi 0, %s186
      %s208 = sphi 0, %s210
      %s211 = sphi 0, %s208
      %s212 = sphi 0, %s211
      %s228 = sphi 0, %s212
    $region4: #{model_forward.2} parent=1 // loop_header_branch
      %18 = sbr.rel (%p16) target = $region8
    $region5: #{model_forward.2} parent=1 // loop_body
      %s20 = ssub.s32 %s15, 1
      %s21 = ssub.s32 %s15, 2
      %s22 = sadd.s32 %s15, 1
      %s23 = ssub.s32 %s15, %s22
      %p24 = scmp.eq.s32.totalorder %s23, 0
      %s26 = sadd.s32 %s25, 1
      %s27 = scalar_select %p24, %s25, %s26
      %p30 = pneg %p24
      %p31 = scmp.eq.s32.totalorder %s15, 1
      %p32 = por %p30, %p31
      %p33 = scmp.ne.s32.totalorder %s25, %s28
      %p34 = scmp.eq.s32.totalorder %s15, 0
      %p35 = por %p33, %p34
      %p36 = scmp.ne.s32.totalorder %s25, %s28
      %p37 = scmp.eq.s32.totalorder %s20, 1
      %p38 = por %p36, %p37
      %p39 = scmp.ne.s32.totalorder %s28, %s29
      %p40 = scmp.eq.s32.totalorder %s20, 0
      %p41 = por %p39, %p40
      %p42 = scmp.ne.s32.totalorder %s28, %s29
      %p43 = scmp.eq.s32.totalorder %s21, 1
      %p44 = por %p42, %p43
      %p46 = scmp.ne.s32.totalorder %s29, %s45
      %p47 = scmp.eq.s32.totalorder %s21, 0
      %p48 = por %p46, %p47
      %s49 = ssub.s32 %s15, %s22
      %p50 = scmp.eq.s32.totalorder %s49, 0
      %s52 = sadd.s32 %s51, 1
      %s53 = scalar_select %p50, %s51, %s52
      %p56 = pneg %p50
      %p57 = scmp.eq.s32.totalorder %s15, 1
      %p58 = por %p56, %p57
      %p59 = scmp.ne.s32.totalorder %s51, %s54
      %p60 = scmp.eq.s32.totalorder %s15, 0
      %p61 = por %p59, %p60
      %p62 = scmp.ne.s32.totalorder %s51, %s54
      %p63 = scmp.eq.s32.totalorder %s20, 1
      %p64 = por %p62, %p63
      %p65 = scmp.ne.s32.totalorder %s54, %s55
      %p66 = scmp.eq.s32.totalorder %s20, 0
      %p67 = por %p65, %p66
      %p68 = scmp.ne.s32.totalorder %s54, %s55
      %p69 = scmp.eq.s32.totalorder %s21, 1
      %p70 = por %p68, %p69
      %p72 = scmp.ne.s32.totalorder %s55, %s71
      %p73 = scmp.eq.s32.totalorder %s21, 0
      %p74 = por %p72, %p73
      %s76 = sadd.s32 %s75, 1
      %p79 = scmp.eq.s32.totalorder %s15, 1
      %p80 = scmp.ne.s32.totalorder %s75, %s77
      %p81 = scmp.eq.s32.totalorder %s15, 0
      %p82 = por %p80, %p81
      %p83 = scmp.ne.s32.totalorder %s75, %s77
      %p84 = scmp.eq.s32.totalorder %s20, 1
      %p85 = por %p83, %p84
      %p86 = scmp.ne.s32.totalorder %s77, %s78
      %p87 = scmp.eq.s32.totalorder %s20, 0
      %p88 = por %p86, %p87
      %p89 = scmp.ne.s32.totalorder %s77, %s78
      %p90 = scmp.eq.s32.totalorder %s21, 1
      %p91 = por %p89, %p90
      %p93 = scmp.ne.s32.totalorder %s78, %s92
      %p94 = scmp.eq.s32.totalorder %s21, 0
      %p95 = por %p93, %p94
      %s97 = sadd.s32 %s96, 1
      %p100 = scmp.eq.s32.totalorder %s15, 1
      %p101 = scmp.ne.s32.totalorder %s96, %s98
      %p102 = scmp.eq.s32.totalorder %s15, 0
      %p103 = por %p101, %p102
      %p104 = scmp.ne.s32.totalorder %s96, %s98
      %p105 = scmp.eq.s32.totalorder %s20, 1
      %p106 = por %p104, %p105
      %p107 = scmp.ne.s32.totalorder %s98, %s99
      %p108 = scmp.eq.s32.totalorder %s20, 0
      %p109 = por %p107, %p108
      %p110 = scmp.ne.s32.totalorder %s98, %s99
      %p111 = scmp.eq.s32.totalorder %s21, 1
      %p112 = por %p110, %p111
      %p114 = scmp.ne.s32.totalorder %s99, %s113
      %p115 = scmp.eq.s32.totalorder %s21, 0
      %p116 = por %p114, %p115
      %s118 = sadd.s32 %s117, 1
      %p121 = scmp.eq.s32.totalorder %s15, 1
      %p122 = scmp.ne.s32.totalorder %s117, %s119
      %p123 = scmp.eq.s32.totalorder %s15, 0
      %p124 = por %p122, %p123
      %p125 = scmp.ne.s32.totalorder %s117, %s119
      %p126 = scmp.eq.s32.totalorder %s20, 1
      %p127 = por %p125, %p126
      %p128 = scmp.ne.s32.totalorder %s119, %s120
      %p129 = scmp.eq.s32.totalorder %s20, 0
      %p130 = por %p128, %p129
      %p131 = scmp.ne.s32.totalorder %s119, %s120
      %p132 = scmp.eq.s32.totalorder %s21, 1
      %p133 = por %p131, %p132
      %p135 = scmp.ne.s32.totalorder %s120, %s134
      %p136 = scmp.eq.s32.totalorder %s21, 0
      %p137 = por %p135, %p136
      %s139 = sadd.s32 %s138, 1
      %p142 = scmp.eq.s32.totalorder %s15, 1
      %p143 = scmp.ne.s32.totalorder %s138, %s140
      %p144 = scmp.eq.s32.totalorder %s15, 0
      %p145 = por %p143, %p144
      %p146 = scmp.ne.s32.totalorder %s138, %s140
      %p147 = scmp.eq.s32.totalorder %s20, 1
      %p148 = por %p146, %p147
      %p149 = scmp.ne.s32.totalorder %s140, %s141
      %p150 = scmp.eq.s32.totalorder %s20, 0
      %p151 = por %p149, %p150
      %p152 = scmp.ne.s32.totalorder %s140, %s141
      %p153 = scmp.eq.s32.totalorder %s21, 1
      %p154 = por %p152, %p153
      %p156 = scmp.ne.s32.totalorder %s141, %s155
      %p157 = scmp.eq.s32.totalorder %s21, 0
      %p158 = por %p156, %p157
      %s160 = sadd.s32 %s159, 1
      %p163 = scmp.eq.s32.totalorder %s15, 1
      %p164 = scmp.ne.s32.totalorder %s159, %s161
      %p165 = scmp.eq.s32.totalorder %s15, 0
      %p166 = por %p164, %p165
      %p167 = scmp.ne.s32.totalorder %s159, %s161
      %p168 = scmp.eq.s32.totalorder %s20, 1
      %p169 = por %p167, %p168
      %p170 = scmp.ne.s32.totalorder %s161, %s162
      %p171 = scmp.eq.s32.totalorder %s20, 0
      %p172 = por %p170, %p171
      %p173 = scmp.ne.s32.totalorder %s161, %s162
      %p174 = scmp.eq.s32.totalorder %s21, 1
      %p175 = por %p173, %p174
      %p177 = scmp.ne.s32.totalorder %s162, %s176
      %p178 = scmp.eq.s32.totalorder %s21, 0
      %p179 = por %p177, %p178
      %s180 = ssub.s32 %s15, %s22
      %p181 = scmp.eq.s32.totalorder %s180, 0
      %s183 = sadd.s32 %s182, 1
      %s184 = scalar_select %p181, %s182, %s183
      %p187 = pneg %p181
      %p188 = scmp.eq.s32.totalorder %s15, 1
      %p189 = por %p187, %p188
      %p190 = scmp.ne.s32.totalorder %s182, %s185
      %p191 = scmp.eq.s32.totalorder %s15, 0
      %p192 = por %p190, %p191
      %p193 = scmp.ne.s32.totalorder %s182, %s185
      %p194 = scmp.eq.s32.totalorder %s20, 1
      %p195 = por %p193, %p194
      %p196 = scmp.ne.s32.totalorder %s185, %s186
      %p197 = scmp.eq.s32.totalorder %s20, 0
      %p198 = por %p196, %p197
      %p199 = scmp.ne.s32.totalorder %s185, %s186
      %p200 = scmp.eq.s32.totalorder %s21, 1
      %p201 = por %p199, %p200
      %p203 = scmp.ne.s32.totalorder %s186, %s202
      %p204 = scmp.eq.s32.totalorder %s21, 0
      %p205 = por %p203, %p204
      %s206 = ssub.s32 %s15, %s22
      %p207 = scmp.eq.s32.totalorder %s206, 0
      %s209 = sadd.s32 %s208, 1
      %s210 = scalar_select %p207, %s208, %s209
      %p213 = pneg %p207
      %p214 = scmp.eq.s32.totalorder %s15, 1
      %p215 = por %p213, %p214
      %p216 = scmp.ne.s32.totalorder %s208, %s211
      %p217 = scmp.eq.s32.totalorder %s15, 0
      %p218 = por %p216, %p217
      %p219 = scmp.ne.s32.totalorder %s208, %s211
      %p220 = scmp.eq.s32.totalorder %s20, 1
      %p221 = por %p219, %p220
      %p222 = scmp.ne.s32.totalorder %s211, %s212
      %p223 = scmp.eq.s32.totalorder %s20, 0
      %p224 = por %p222, %p223
      %p225 = scmp.ne.s32.totalorder %s211, %s212
      %p226 = scmp.eq.s32.totalorder %s21, 1
      %p227 = por %p225, %p226
      %p229 = scmp.ne.s32.totalorder %s212, %s228
      %p230 = scmp.eq.s32.totalorder %s21, 0
      %p231 = por %p229, %p230
      %p232 = scmp.le.s32.totalorder 1, %s15
      %p233 = scmp.lt.s32.totalorder %s15, 3
      %p234 = pnand %p232, %p233
      %p235 = pneg %p234
      // Predicated region
      $region9: #{model_forward.2} parent=5 // pred_check
        _
      $region10: #{model_forward.2} parent=5 // pred_check_branch
        %237 = sbr.rel (%p234) target = $region12
      $region11: #{model_forward.2} parent=5 // pred_region
        %s238 = ssub.s32 %s15, 1
        // Predicated region
        $region13: #{model_forward.2} parent=11 // pred_check
          %p239 = pneg %p88
        $region14: #{model_forward.2} parent=11 // pred_check_branch
          %241 = sbr.rel (%p239) target = $region16
        $region15: #{model_forward.2} parent=11 // pred_region
          _
        $region16: #{model_forward.2} parent=11 // pred_fallthru
          _
        // Predicated region
        $region17: #{model_forward.2} parent=11 // pred_check
          %p242 = pneg %p109
        $region18: #{model_forward.2} parent=11 // pred_check_branch
          %244 = sbr.rel (%p242) target = $region20
        $region19: #{model_forward.2} parent=11 // pred_region
          _
        $region20: #{model_forward.2} parent=11 // pred_fallthru
          _
        // Predicated region
        $region21: #{model_forward.2} parent=11 // pred_check
          %p245 = pneg %p130
        $region22: #{model_forward.2} parent=11 // pred_check_branch
          %247 = sbr.rel (%p245) target = $region24
        $region23: #{model_forward.2} parent=11 // pred_region
          _
        $region24: #{model_forward.2} parent=11 // pred_fallthru
          _
        // Predicated region
        $region25: #{model_forward.2} parent=11 // pred_check
          %p248 = pneg %p151
        $region26: #{model_forward.2} parent=11 // pred_check_branch
          %250 = sbr.rel (%p248) target = $region28
        $region27: #{model_forward.2} parent=11 // pred_region
          _
        $region28: #{model_forward.2} parent=11 // pred_fallthru
          _
        // Predicated region
        $region29: #{model_forward.2} parent=11 // pred_check
          %p251 = pneg %p172
        $region30: #{model_forward.2} parent=11 // pred_check_branch
          %253 = sbr.rel (%p251) target = $region32
        $region31: #{model_forward.2} parent=11 // pred_region
          _
        $region32: #{model_forward.2} parent=11 // pred_fallthru
          _
      $region12: #{model_forward.2} parent=5 // pred_fallthru
        _
      %p254 = scmp.lt.s32.totalorder %s15, 2
      // Predicated region
      $region33: #{model_forward.2} parent=5 // pred_check
        %p255 = pneg %p254
      $region34: #{model_forward.2} parent=5 // pred_check_branch
        %257 = sbr.rel (%p255) target = $region36
      $region35: #{model_forward.2} parent=5 // pred_region
        // Predicated region
        $region37: #{model_forward.2} parent=35 // pred_check
          %p258 = pneg %p35
        $region38: #{model_forward.2} parent=35 // pred_check_branch
          %260 = sbr.rel (%p258) target = $region40
        $region39: #{model_forward.2} parent=35 // pred_region
          %s261 = smul.u32 8, %s15
          %p262 = scmp.lt.s32.totalorder %s261, 15
          %s263 = scalar_select %p262, %s261, 15
          %s264 = smul.addr %s263, 2
          %s265 = smul.addr %s264, 8
          %s266 = scalar_lea.vmem %s0, %s265
          %s267 = smul.u32 8, %s15
        $region40: #{model_forward.2} parent=35 // pred_fallthru
          _
        // Predicated region
        $region41: #{model_forward.2} parent=35 // pred_check
          %p268 = pneg %p61
        $region42: #{model_forward.2} parent=35 // pred_check_branch
          %270 = sbr.rel (%p268) target = $region44
        $region43: #{model_forward.2} parent=35 // pred_region
          %p271 = scmp.lt.s32.totalorder %s15, 1
          %s272 = scalar_select %p271, %s15, 1
          %s273 = smul.addr %s272, 8
          %s274 = scalar_lea.vmem %s1, %s273
        $region44: #{model_forward.2} parent=35 // pred_fallthru
          _
      $region36: #{model_forward.2} parent=5 // pred_fallthru
        _
      %p275 = scmp.le.s32.totalorder 1, %s15
      %p276 = scmp.lt.s32.totalorder %s15, 3
      %p277 = pnand %p275, %p276
      %p278 = pneg %p277
      // Predicated region
      $region45: #{model_forward.2} parent=5 // pred_check
        _
      $region46: #{model_forward.2} parent=5 // pred_check_branch
        %280 = sbr.rel (%p277) target = $region48
      $region47: #{model_forward.2} parent=5 // pred_region
        %s281 = ssub.s32 %s15, 1
        %s282 = smul.u32 8, %s20
        %p283 = scmp.lt.s32.totalorder %s282, 15
        %s284 = scalar_select %p283, %s282, 15
        %s285 = smul.addr %s284, 2
        %s286 = smul.addr %s285, 8
        %s287 = scalar_lea.vmem %s0, %s286
        %p288 = pneg %p41
        %p289 = pneg %p38
        %p290 = scmp.lt.s32.totalorder %s20, 1
        %s291 = scalar_select %p290, %s20, 1
        %s292 = smul.addr %s291, 8
        %s293 = scalar_lea.vmem %s1, %s292
        %p294 = pneg %p67
        %p295 = pneg %p64
        %p296 = pneg %p88
        %p297 = pneg %p85
        %p298 = pneg %p109
        %p299 = pneg %p106
        %p300 = pneg %p130
        %p301 = pneg %p127
        %p302 = pneg %p151
        %p303 = pneg %p148
        %p304 = pneg %p172
        %p305 = pneg %p169
        %p306 = pneg %p198
        %p307 = pneg %p195
        %p308 = scmp.lt.s32.totalorder %s20, 1
        %s309 = scalar_select %p308, %s20, 1
        %s310 = smul.addr %s309, 8
        %s311 = scalar_lea.vmem %s7, %s310
        %p312 = pneg %p224
        %p313 = pneg %p221
        %s314 = sand.u32 %s211, 1
        %s315 = sand.u32 %s211, 1
        %s316 = smul.addr %s315, 24
        %s317 = scalar_lea.vmem [#allocation2], %s316
        %s318 = smul.u32 8, %s20
        %p319 = scmp.lt.s32.totalorder %s318, 15
        %s320 = scalar_select %p319, %s318, 15
        %s321 = smul.addr %s320, 2
        %s322 = smul.addr %s321, 8
        %s323 = scalar_lea.vmem %s0, %s322
        %s324 = smul.u32 8, %s20
        %p325 = scmp.lt.s32.totalorder %s20, 1
        %s326 = scalar_select %p325, %s20, 1
        %s327 = smul.addr %s326, 8
        %s328 = scalar_lea.vmem %s1, %s327
        %p329 = scmp.lt.s32.totalorder %s20, 1
        %s330 = scalar_select %p329, %s20, 1
        %s331 = smul.addr %s330, 8
        %s332 = scalar_lea.vmem %s7, %s331
        %s333 = smul.u32 %s20, 8
        %v334 = vld [vmem:[%s323] sm:$0xff]
        %v335 = vld [vmem:[%s323 + $0x8] sm:$0xff]
        %v336 = vld [vmem:[%s323 + $0x10] sm:$0xff]
        %v337 = vld [vmem:[%s323 + $0x18] sm:$0xff]
        %v338 = vld [vmem:[%s323 + $0x20] sm:$0xff]
        %v339 = vld [vmem:[%s323 + $0x28] sm:$0xff]
        %v340 = vld [vmem:[%s323 + $0x30] sm:$0xff]
        %v341 = vld [vmem:[%s323 + $0x38] sm:$0xff]
        %v342 = vld [vmem:[%s323 + $0x40] sm:$0xff]
        %v343 = vld [vmem:[%s323 + $0x48] sm:$0xff]
        %v344 = vld [vmem:[%s323 + $0x50] sm:$0xff]
        %v345 = vld [vmem:[%s323 + $0x58] sm:$0xff]
        %v346 = vld [vmem:[%s323 + $0x60] sm:$0xff]
        %v347 = vld [vmem:[%s323 + $0x68] sm:$0xff]
        %v348 = vld [vmem:[%s323 + $0x70] sm:$0xff]
        %v349 = vld [vmem:[%s323 + $0x78] sm:$0xff]
        %v350 = vld [vmem:[%s328] sm:$0xff]
        %v351 = vld [vmem:[%s2] sm:$0xff]
        %v352 = vld [vmem:[%s2 + $0x8] sm:$0xff]
        %v353 = vld [vmem:[%s6] sm:$0x3f]
        %v354 = vld [vmem:[%s3] sm:$0xff]
        %v355 = vld [vmem:[%s3 + $0x8] sm:$0xff]
        %v356 = vld [vmem:[%s3 + $0x10] sm:$0xff]
        %v357 = vld [vmem:[%s3 + $0x18] sm:$0xff]
        %v358 = vld [vmem:[%s3 + $0x20] sm:$0xff]
        %v359 = vld [vmem:[%s3 + $0x28] sm:$0xff]
        %v360 = vld [vmem:[%s3 + $0x30] sm:$0xff]
        %v361 = vld [vmem:[%s3 + $0x38] sm:$0xff]
        %v362 = vld [vmem:[%s3 + $0x40] sm:$0xff]
        %v363 = vld [vmem:[%s3 + $0x48] sm:$0xff]
        %v364 = vld [vmem:[%s3 + $0x50] sm:$0xff]
        %v365 = vld [vmem:[%s3 + $0x58] sm:$0xff]
        %v366 = vld [vmem:[%s3 + $0x60] sm:$0xff]
        %v367 = vld [vmem:[%s3 + $0x68] sm:$0xff]
        %v368 = vld [vmem:[%s3 + $0x70] sm:$0xff]
        %v369 = vld [vmem:[%s3 + $0x78] sm:$0xff]
        %v370 = vld [vmem:[%s3 + $0x80] sm:$0xff]
        %v371 = vld [vmem:[%s3 + $0x88] sm:$0xff]
        %v372 = vld [vmem:[%s3 + $0x90] sm:$0xff]
        %v373 = vld [vmem:[%s3 + $0x98] sm:$0xff]
        %v374 = vld [vmem:[%s3 + $0xa0] sm:$0xff]
        %v375 = vld [vmem:[%s3 + $0xa8] sm:$0xff]
        %v376 = vld [vmem:[%s3 + $0xb0] sm:$0xff]
        %v377 = vld [vmem:[%s3 + $0xb8] sm:$0xff]
        %v378 = vld [vmem:[%s3 + $0xc0] sm:$0xff]
        %v379 = vld [vmem:[%s3 + $0xc8] sm:$0xff]
        %v380 = vld [vmem:[%s3 + $0xd0] sm:$0xff]
        %v381 = vld [vmem:[%s3 + $0xd8] sm:$0xff]
        %v382 = vld [vmem:[%s3 + $0xe0] sm:$0xff]
        %v383 = vld [vmem:[%s3 + $0xe8] sm:$0xff]
        %v384 = vld [vmem:[%s3 + $0xf0] sm:$0xff]
        %v385 = vld [vmem:[%s3 + $0xf8] sm:$0xff]
        %v386 = vld [vmem:[%s3 + $0x100] sm:$0xff]
        %v387 = vld [vmem:[%s3 + $0x108] sm:$0xff]
        %v388 = vld [vmem:[%s3 + $0x110] sm:$0xff]
        %v389 = vld [vmem:[%s3 + $0x118] sm:$0xff]
        %v390 = vld [vmem:[%s3 + $0x120] sm:$0xff]
        %v391 = vld [vmem:[%s3 + $0x128] sm:$0xff]
        %v392 = vld [vmem:[%s3 + $0x130] sm:$0xff]
        %v393 = vld [vmem:[%s3 + $0x138] sm:$0xff]
        %v394 = vld [vmem:[%s3 + $0x140] sm:$0xff]
        %v395 = vld [vmem:[%s3 + $0x148] sm:$0xff]
        %v396 = vld [vmem:[%s3 + $0x150] sm:$0xff]
        %v397 = vld [vmem:[%s3 + $0x158] sm:$0xff]
        %v398 = vld [vmem:[%s3 + $0x160] sm:$0xff]
        %v399 = vld [vmem:[%s3 + $0x168] sm:$0xff]
        %v400 = vld [vmem:[%s3 + $0x170] sm:$0xff]
        %v401 = vld [vmem:[%s3 + $0x178] sm:$0xff]
        %402 = vmatprep.subr.mxu0 %v355
        %403 = vmatpush1.msra.mxu0 %v354
        %404 = vmatprep.subr.mxu0 %v358
        %405 = vmatpush1.msra.mxu0 %v357
        %406 = vmatprep.subr.mxu0 %v361
        %407 = vmatpush1.msra.mxu0 %v360
        %408 = vmatprep.subr.mxu0 %v364
        %409 = vmatpush1.msra.mxu0 %v363
        %410 = vmatprep.subr.mxu0 %v367
        %411 = vmatpush1.msra.mxu0 %v366
        %412 = vmatprep.subr.mxu0 %v370
        %413 = vmatpush1.msra.mxu0 %v369
        %414 = vmatprep.subr.mxu0 %v373
        %415 = vmatpush1.msra.mxu0 %v372
        %416 = vmatprep.subr.mxu0 %v376
        %417 = vmatpush1.msra.mxu0 %v375
        %418 = vmatprep.subr.mxu0 %v379
        %419 = vmatpush1.msra.mxu0 %v378
        %420 = vmatprep.subr.mxu0 %v382
        %421 = vmatpush1.msra.mxu0 %v381
        %422 = vmatprep.subr.mxu0 %v385
        %423 = vmatpush1.msra.mxu0 %v384
        %424 = vmatprep.subr.mxu0 %v388
        %425 = vmatpush1.msra.mxu0 %v387
        %426 = vmatprep.subr.mxu0 %v391
        %427 = vmatpush1.msra.mxu0 %v390
        %428 = vmatprep.subr.mxu0 %v394
        %429 = vmatpush1.msra.mxu0 %v393
        %430 = vmatprep.subr.mxu0 %v397
        %431 = vmatpush1.msra.mxu0 %v396
        %432 = vmatprep.subr.mxu0 %v400
        %433 = vmatpush1.msra.mxu0 %v399
        %434 = vmatprep.subr.mxu0 0.0
        %435 = vmatpush1.msra.mxu0 0.0
        %436 = vmatprep.subr.mxu0 0.0
        %437 = vmatpush1.msra.mxu0 0.0
        %438 = vmatprep.subr.mxu0 0.0
        %439 = vmatpush1.msra.mxu0 0.0
        %440 = vmatprep.subr.mxu0 0.0
        %441 = vmatpush1.msra.mxu0 0.0
        %442 = vmatprep.subr.mxu0 0.0
        %443 = vmatpush1.msra.mxu0 0.0
        %444 = vmatprep.subr.mxu0 0.0
        %445 = vmatpush1.msra.mxu0 0.0
        %446 = vmatprep.subr.mxu0 0.0
        %447 = vmatpush1.msra.mxu0 0.0
        %448 = vmatprep.subr.mxu0 0.0
        %449 = vmatpush1.msra.mxu0 0.0
        %450 = vmatprep.subr.mxu0 0.0
        %451 = vmatpush1.msra.mxu0 0.0
        %452 = vmatprep.subr.mxu0 0.0
        %453 = vmatpush1.msra.mxu0 0.0
        %454 = vmatprep.subr.mxu0 0.0
        %455 = vmatpush1.msra.mxu0 0.0
        %456 = vmatprep.subr.mxu0 0.0
        %457 = vmatpush1.msra.mxu0 0.0
        %458 = vmatprep.subr.mxu0 0.0
        %459 = vmatpush1.msra.mxu0 0.0
        %460 = vmatprep.subr.mxu0 0.0
        %461 = vmatpush1.msra.mxu0 0.0
        %462 = vmatprep.subr.mxu0 0.0
        %463 = vmatpush1.msra.mxu0 0.0
        %464 = vmatprep.subr.mxu0 0.0
        %465 = vmatpush1.msra.mxu0 0.0
        %466 = vmatprep.mubr.f32.mxu0 0.0
        %467 = vmatmul.mubr.f32.gmra.mrb[0].mxu0 %v351
        %v468 = vpop.f32.mrb[0].mxu0
        %v469 = vadd.f32 0.0, %v468
        %v470 = vpop.f32.mrb[0].mxu0
        %v471 = vadd.f32 0.0, %v470
        %472 = vmatprep.mubr.f32.mxu0 0.0
        %473 = vmatmul.mubr.f32.gmra.mrb[0].mxu0 %v352
        %v474 = vpop.f32.mrb[0].mxu0
        %v475 = vadd.f32 0.0, %v474
        %v476 = vpop.f32.mrb[0].mxu0
        %v477 = vadd.f32 0.0, %v476
        %478 = vdwg.mxu0
        %479 = vmatprep.subr.mxu0 0.0
        %480 = vmatpush1.msra.mxu0 %v356
        %481 = vmatprep.subr.mxu0 0.0
        %482 = vmatpush1.msra.mxu0 %v359
        %483 = vmatprep.subr.mxu0 0.0
        %484 = vmatpush1.msra.mxu0 %v362
        %485 = vmatprep.subr.mxu0 0.0
        %486 = vmatpush1.msra.mxu0 %v365
        %487 = vmatprep.subr.mxu0 0.0
        %488 = vmatpush1.msra.mxu0 %v368
        %489 = vmatprep.subr.mxu0 0.0
        %490 = vmatpush1.msra.mxu0 %v371
        %491 = vmatprep.subr.mxu0 0.0
        %492 = vmatpush1.msra.mxu0 %v374
        %493 = vmatprep.subr.mxu0 0.0
        %494 = vmatpush1.msra.mxu0 %v377
        %495 = vmatprep.subr.mxu0 0.0
        %496 = vmatpush1.msra.mxu0 %v380
        %497 = vmatprep.subr.mxu0 0.0
        %498 = vmatpush1.msra.mxu0 %v383
        %499 = vmatprep.subr.mxu0 0.0
        %500 = vmatpush1.msra.mxu0 %v386
        %501 = vmatprep.subr.mxu0 0.0
        %502 = vmatpush1.msra.mxu0 %v389
        %503 = vmatprep.subr.mxu0 0.0
        %504 = vmatpush1.msra.mxu0 %v392
        %505 = vmatprep.subr.mxu0 0.0
        %506 = vmatpush1.msra.mxu0 %v395
        %507 = vmatprep.subr.mxu0 0.0
        %508 = vmatpush1.msra.mxu0 %v398
        %509 = vmatprep.subr.mxu0 0.0
        %510 = vmatpush1.msra.mxu0 %v401
        %511 = vmatprep.subr.mxu0 0.0
        %512 = vmatpush1.msra.mxu0 0.0
        %513 = vmatprep.subr.mxu0 0.0
        %514 = vmatpush1.msra.mxu0 0.0
        %515 = vmatprep.subr.mxu0 0.0
        %516 = vmatpush1.msra.mxu0 0.0
        %517 = vmatprep.subr.mxu0 0.0
        %518 = vmatpush1.msra.mxu0 0.0
        %519 = vmatprep.subr.mxu0 0.0
        %520 = vmatpush1.msra.mxu0 0.0
        %521 = vmatprep.subr.mxu0 0.0
        %522 = vmatpush1.msra.mxu0 0.0
        %523 = vmatprep.subr.mxu0 0.0
        %524 = vmatpush1.msra.mxu0 0.0
        %525 = vmatprep.subr.mxu0 0.0
        %526 = vmatpush1.msra.mxu0 0.0
        %527 = vmatprep.subr.mxu0 0.0
        %528 = vmatpush1.msra.mxu0 0.0
        %529 = vmatprep.subr.mxu0 0.0
        %530 = vmatpush1.msra.mxu0 0.0
        %531 = vmatprep.subr.mxu0 0.0
        %532 = vmatpush1.msra.mxu0 0.0
        %533 = vmatprep.subr.mxu0 0.0
        %534 = vmatpush1.msra.mxu0 0.0
        %535 = vmatprep.subr.mxu0 0.0
        %536 = vmatpush1.msra.mxu0 0.0
        %537 = vmatprep.subr.mxu0 0.0
        %538 = vmatpush1.msra.mxu0 0.0
        %539 = vmatprep.subr.mxu0 0.0
        %540 = vmatpush1.msra.mxu0 0.0
        %541 = vmatprep.subr.mxu0 0.0
        %542 = vmatpush1.msra.mxu0 0.0
        %543 = vmatprep.mubr.f32.mxu0 0.0
        %544 = vmatmul.mubr.f32.gmra.mrb[0].mxu0 %v351
        %v545 = vpop.f32.mrb[0].mxu0
        %v546 = vadd.f32 0.0, %v545
        %v547 = vpop.f32.mrb[0].mxu0
        %548 = vmatprep.mubr.f32.mxu0 0.0
        %549 = vmatmul.mubr.f32.gmra.mrb[0].mxu0 %v352
        %v550 = vpop.f32.mrb[0].mxu0
        %v551 = vadd.f32 0.0, %v550
        %v552 = vpop.f32.mrb[0].mxu0
        %553 = vdwg.mxu0
        %v554 = vld [vmem:[%s4] sm:$0xff]
        %v555 = vld [vmem:[%s4 + $0x8] sm:$0xff]
        %v556 = vld [vmem:[%s4 + $0x10] sm:$0xff]
        %v557 = vld [vmem:[%s4 + $0x18] sm:$0xff]
        %v558 = vld [vmem:[%s4 + $0x20] sm:$0xff]
        %v559 = vld [vmem:[%s4 + $0x28] sm:$0xff]
        %v560 = vld [vmem:[%s4 + $0x30] sm:$0xff]
        %v561 = vld [vmem:[%s4 + $0x38] sm:$0xff]
        %v562 = vld [vmem:[%s4 + $0x40] sm:$0xff]
        %v563 = vld [vmem:[%s4 + $0x48] sm:$0xff]
        %v564 = vld [vmem:[%s4 + $0x50] sm:$0xff]
        %v565 = vld [vmem:[%s4 + $0x58] sm:$0xff]
        %v566 = vld [vmem:[%s4 + $0x60] sm:$0xff]
        %v567 = vld [vmem:[%s4 + $0x68] sm:$0xff]
        %v568 = vld [vmem:[%s4 + $0x70] sm:$0xff]
        %v569 = vld [vmem:[%s4 + $0x78] sm:$0xff]
        %570 = vmatprep.subr.mxu0 0.0
        %571 = vmatpush1.msra.mxu0 %v554
        %572 = vmatprep.subr.mxu0 0.0
        %573 = vmatpush1.msra.mxu0 %v555
        %574 = vmatprep.subr.mxu0 0.0
        %575 = vmatpush1.msra.mxu0 %v556
        %576 = vmatprep.subr.mxu0 0.0
        %577 = vmatpush1.msra.mxu0 %v557
        %578 = vmatprep.subr.mxu0 0.0
        %579 = vmatpush1.msra.mxu0 %v558
        %580 = vmatprep.subr.mxu0 0.0
        %581 = vmatpush1.msra.mxu0 %v559
        %582 = vmatprep.subr.mxu0 0.0
        %583 = vmatpush1.msra.mxu0 %v560
        %584 = vmatprep.subr.mxu0 0.0
        %585 = vmatpush1.msra.mxu0 %v561
        %586 = vmatprep.subr.mxu0 0.0
        %587 = vmatpush1.msra.mxu0 %v562
        %588 = vmatprep.subr.mxu0 0.0
        %589 = vmatpush1.msra.mxu0 %v563
        %590 = vmatprep.subr.mxu0 0.0
        %591 = vmatpush1.msra.mxu0 %v564
        %592 = vmatprep.subr.mxu0 0.0
        %593 = vmatpush1.msra.mxu0 %v565
        %594 = vmatprep.subr.mxu0 0.0
        %595 = vmatpush1.msra.mxu0 %v566
        %596 = vmatprep.subr.mxu0 0.0
        %597 = vmatpush1.msra.mxu0 %v567
        %598 = vmatprep.subr.mxu0 0.0
        %599 = vmatpush1.msra.mxu0 %v568
        %600 = vmatprep.subr.mxu0 0.0
        %601 = vmatpush1.msra.mxu0 %v569
        %602 = vmatprep.subr.mxu0 0.0
        %603 = vmatpush1.msra.mxu0 0.0
        %604 = vmatprep.subr.mxu0 0.0
        %605 = vmatpush1.msra.mxu0 0.0
        %606 = vmatprep.subr.mxu0 0.0
        %607 = vmatpush1.msra.mxu0 0.0
        %608 = vmatprep.subr.mxu0 0.0
        %609 = vmatpush1.msra.mxu0 0.0
        %610 = vmatprep.subr.mxu0 0.0
        %611 = vmatpush1.msra.mxu0 0.0
        %612 = vmatprep.subr.mxu0 0.0
        %613 = vmatpush1.msra.mxu0 0.0
        %614 = vmatprep.subr.mxu0 0.0
        %615 = vmatpush1.msra.mxu0 0.0
        %616 = vmatprep.subr.mxu0 0.0
        %617 = vmatpush1.msra.mxu0 0.0
        %618 = vmatprep.subr.mxu0 0.0
        %619 = vmatpush1.msra.mxu0 0.0
        %620 = vmatprep.subr.mxu0 0.0
        %621 = vmatpush1.msra.mxu0 0.0
        %622 = vmatprep.subr.mxu0 0.0
        %623 = vmatpush1.msra.mxu0 0.0
        %624 = vmatprep.subr.mxu0 0.0
        %625 = vmatpush1.msra.mxu0 0.0
        %626 = vmatprep.subr.mxu0 0.0
        %627 = vmatpush1.msra.mxu0 0.0
        %628 = vmatprep.subr.mxu0 0.0
        %629 = vmatpush1.msra.mxu0 0.0
        %630 = vmatprep.subr.mxu0 0.0
        %631 = vmatpush1.msra.mxu0 0.0
        %632 = vmatprep.subr.mxu0 0.0
        %633 = vmatpush1.msra.mxu0 0.0
        %634 = vmatprep.mubr.f32.mxu0 0.0
        %635 = vmatmul.mubr.f32.gmra.mrb[0].mxu0 %v351
        %v636 = vpop.f32.mrb[0].mxu0
        %v637 = vadd.f32 0.0, %v636
        %v638 = vpop.f32.mrb[0].mxu0
        %639 = vmatprep.mubr.f32.mxu0 0.0
        %640 = vmatmul.mubr.f32.gmra.mrb[0].mxu0 %v352
        %v641 = vpop.f32.mrb[0].mxu0
        %v642 = vadd.f32 0.0, %v641
        %v643 = vpop.f32.mrb[0].mxu0
        %644 = vdwg.mxu0
        %s645 = scalar_lea.vmem %s2, %s333
        %v646 = vld [vmem:[%s645] sm:$0xff]
        %v647 = vld [vmem:[%s5] sm:$0xff]
        %v648 = vld [vmem:[%s5 + $0x8] sm:$0xff]
        %v649 = vld [vmem:[%s5 + $0x10] sm:$0xff]
        %v650 = vld [vmem:[%s5 + $0x18] sm:$0xff]
        %v651 = vld [vmem:[%s5 + $0x20] sm:$0xff]
        %v652 = vld [vmem:[%s5 + $0x28] sm:$0xff]
        %v653 = vld [vmem:[%s5 + $0x30] sm:$0xff]
        %v654 = vld [vmem:[%s5 + $0x38] sm:$0xff]
        %v655 = vld [vmem:[%s5 + $0x40] sm:$0xff]
        %v656 = vld [vmem:[%s5 + $0x48] sm:$0xff]
        %v657 = vld [vmem:[%s5 + $0x50] sm:$0xff]
        %v658 = vld [vmem:[%s5 + $0x58] sm:$0xff]
        %v659 = vld [vmem:[%s5 + $0x60] sm:$0xff]
        %v660 = vld [vmem:[%s5 + $0x68] sm:$0xff]
        %v661 = vld [vmem:[%s5 + $0x70] sm:$0xff]
        %v662 = vld [vmem:[%s5 + $0x78] sm:$0xff]
        %663 = vmatprep.subr.mxu0 0.0
        %664 = vmatpush1.msra.mxu0 %v647
        %665 = vmatprep.subr.mxu0 0.0
        %666 = vmatpush1.msra.mxu0 %v648
        %667 = vmatprep.subr.mxu0 0.0
        %668 = vmatpush1.msra.mxu0 %v649
        %669 = vmatprep.subr.mxu0 0.0
        %670 = vmatpush1.msra.mxu0 %v650
        %671 = vmatprep.subr.mxu0 0.0
        %672 = vmatpush1.msra.mxu0 %v651
        %673 = vmatprep.subr.mxu0 0.0
        %674 = vmatpush1.msra.mxu0 %v652
        %675 = vmatprep.subr.mxu0 0.0
        %676 = vmatpush1.msra.mxu0 %v653
        %677 = vmatprep.subr.mxu0 0.0
        %678 = vmatpush1.msra.mxu0 %v654
        %679 = vmatprep.subr.mxu0 0.0
        %680 = vmatpush1.msra.mxu0 %v655
        %681 = vmatprep.subr.mxu0 0.0
        %682 = vmatpush1.msra.mxu0 %v656
        %683 = vmatprep.subr.mxu0 0.0
        %684 = vmatpush1.msra.mxu0 %v657
        %685 = vmatprep.subr.mxu0 0.0
        %686 = vmatpush1.msra.mxu0 %v658
        %687 = vmatprep.subr.mxu0 0.0
        %688 = vmatpush1.msra.mxu0 %v659
        %689 = vmatprep.subr.mxu0 0.0
        %690 = vmatpush1.msra.mxu0 %v660
        %691 = vmatprep.subr.mxu0 0.0
        %692 = vmatpush1.msra.mxu0 %v661
        %693 = vmatprep.subr.mxu0 0.0
        %694 = vmatpush1.msra.mxu0 %v662
        %695 = vmatprep.subr.mxu0 0.0
        %696 = vmatpush1.msra.mxu0 0.0
        %697 = vmatprep.subr.mxu0 0.0
        %698 = vmatpush1.msra.mxu0 0.0
        %699 = vmatprep.subr.mxu0 0.0
        %700 = vmatpush1.msra.mxu0 0.0
        %701 = vmatprep.subr.mxu0 0.0
        %702 = vmatpush1.msra.mxu0 0.0
        %703 = vmatprep.subr.mxu0 0.0
        %704 = vmatpush1.msra.mxu0 0.0
        %705 = vmatprep.subr.mxu0 0.0
        %706 = vmatpush1.msra.mxu0 0.0
        %707 = vmatprep.subr.mxu0 0.0
        %708 = vmatpush1.msra.mxu0 0.0
        %709 = vmatprep.subr.mxu0 0.0
        %710 = vmatpush1.msra.mxu0 0.0
        %711 = vmatprep.subr.mxu0 0.0
        %712 = vmatpush1.msra.mxu0 0.0
        %713 = vmatprep.subr.mxu0 0.0
        %714 = vmatpush1.msra.mxu0 0.0
        %715 = vmatprep.subr.mxu0 0.0
        %716 = vmatpush1.msra.mxu0 0.0
        %717 = vmatprep.subr.mxu0 0.0
        %718 = vmatpush1.msra.mxu0 0.0
        %719 = vmatprep.subr.mxu0 0.0
        %720 = vmatpush1.msra.mxu0 0.0
        %721 = vmatprep.subr.mxu0 0.0
        %722 = vmatpush1.msra.mxu0 0.0
        %723 = vmatprep.subr.mxu0 0.0
        %724 = vmatpush1.msra.mxu0 0.0
        %725 = vmatprep.subr.mxu0 0.0
        %726 = vmatpush1.msra.mxu0 0.0
        %727 = vmatprep.mubr.f32.mxu0 0.0
        %728 = vmatmul.mubr.f32.gmra.mrb[0].mxu0 %v646
        %v729 = vpop.f32.mrb[0].mxu0
        %v730 = vadd.f32 0.0, %v729
        %v731 = vpop.f32.mrb[0].mxu0
        %732 = vdwg.mxu0
        %v733 = vlaneseq
        %v734 = vshrl.u32 %v733, 7
        %v735 = vsub.s32 0, %v734
        %v736 = vrot.slane %v353, %v735
        %v737 = vmul.f32 %v334, %v736
        %v738 = vmul.f32 %v335, %v736
        %v739 = vmul.f32 %v336, %v736
        %v740 = vmul.f32 %v337, %v736
        %v741 = vmul.f32 %v338, %v736
        %v742 = vmul.f32 %v339, %v736
        %v743 = vmul.f32 %v340, %v736
        %v744 = vmul.f32 %v341, %v736
        %v745 = vmul.f32 %v342, %v736
        %v746 = vmul.f32 %v343, %v736
        %v747 = vmul.f32 %v344, %v736
        %v748 = vmul.f32 %v345, %v736
        %v749 = vmul.f32 %v346, %v736
        %v750 = vmul.f32 %v347, %v736
        %v751 = vmul.f32 %v348, %v736
        %v752 = vmul.f32 %v349, %v736
        %vm753 = vcmask 318464
        %v754 = vsel %vm753, %v737, 0.0
        %755 = vadd.xlane.f32.xlu0 %v754
        %v756 = vpop.xlane.xlu0 %755
        %v757 = vsel %vm753, %v738, 0.0
        %758 = vadd.xlane.f32.xlu0 %v757
        %v759 = vpop.xlane.xlu0 %758
        %v760 = vsel %vm753, %v739, 0.0
        %761 = vadd.xlane.f32.xlu0 %v760
        %v762 = vpop.xlane.xlu0 %761
        %v763 = vsel %vm753, %v740, 0.0
        %764 = vadd.xlane.f32.xlu0 %v763
        %v765 = vpop.xlane.xlu0 %764
        %v766 = vsel %vm753, %v741, 0.0
        %767 = vadd.xlane.f32.xlu0 %v766
        %v768 = vpop.xlane.xlu0 %767
        %v769 = vsel %vm753, %v742, 0.0
        %770 = vadd.xlane.f32.xlu0 %v769
        %v771 = vpop.xlane.xlu0 %770
        %v772 = vsel %vm753, %v743, 0.0
        %773 = vadd.xlane.f32.xlu0 %v772
        %v774 = vpop.xlane.xlu0 %773
        %v775 = vsel %vm753, %v744, 0.0
        %776 = vadd.xlane.f32.xlu0 %v775
        %v777 = vpop.xlane.xlu0 %776
        %v778 = vsel %vm753, %v745, 0.0
        %779 = vadd.xlane.f32.xlu0 %v778
        %v780 = vpop.xlane.xlu0 %779
        %v781 = vsel %vm753, %v746, 0.0
        %782 = vadd.xlane.f32.xlu0 %v781
        %v783 = vpop.xlane.xlu0 %782
        %v784 = vsel %vm753, %v747, 0.0
        %785 = vadd.xlane.f32.xlu0 %v784
        %v786 = vpop.xlane.xlu0 %785
        %v787 = vsel %vm753, %v748, 0.0
        %788 = vadd.xlane.f32.xlu0 %v787
        %v789 = vpop.xlane.xlu0 %788
        %v790 = vsel %vm753, %v749, 0.0
        %791 = vadd.xlane.f32.xlu0 %v790
        %v792 = vpop.xlane.xlu0 %791
        %v793 = vsel %vm753, %v750, 0.0
        %794 = vadd.xlane.f32.xlu0 %v793
        %v795 = vpop.xlane.xlu0 %794
        %v796 = vsel %vm753, %v751, 0.0
        %797 = vadd.xlane.f32.xlu0 %v796
        %v798 = vpop.xlane.xlu0 %797
        %v799 = vsel %vm753, %v752, 0.0
        %800 = vadd.xlane.f32.xlu0 %v799
        %v801 = vpop.xlane.xlu0 %800
        %v802 = vlaneseq
        %v803 = vshrl.u32 %v802, 7
        %v804 = vsub.s32 3, %v803
        %v805 = vrot.slane %v353, %v804
        %v806 = vmul.f32 %v334, %v805
        %v807 = vmul.f32 %v335, %v805
        %v808 = vmul.f32 %v336, %v805
        %v809 = vmul.f32 %v337, %v805
        %v810 = vmul.f32 %v338, %v805
        %v811 = vmul.f32 %v339, %v805
        %v812 = vmul.f32 %v340, %v805
        %v813 = vmul.f32 %v341, %v805
        %v814 = vmul.f32 %v342, %v805
        %v815 = vmul.f32 %v343, %v805
        %v816 = vmul.f32 %v344, %v805
        %v817 = vmul.f32 %v345, %v805
        %v818 = vmul.f32 %v346, %v805
        %v819 = vmul.f32 %v347, %v805
        %v820 = vmul.f32 %v348, %v805
        %v821 = vmul.f32 %v349, %v805
        %v822 = vsel %vm753, %v806, 0.0
        %823 = vadd.xlane.f32.xlu0 %v822
        %v824 = vpop.xlane.xlu0 %823
        %v825 = vsel %vm753, %v807, 0.0
        %826 = vadd.xlane.f32.xlu0 %v825
        %v827 = vpop.xlane.xlu0 %826
        %v828 = vsel %vm753, %v808, 0.0
        %829 = vadd.xlane.f32.xlu0 %v828
        %v830 = vpop.xlane.xlu0 %829
        %v831 = vsel %vm753, %v809, 0.0
        %832 = vadd.xlane.f32.xlu0 %v831
        %v833 = vpop.xlane.xlu0 %832
        %v834 = vsel %vm753, %v810, 0.0
        %835 = vadd.xlane.f32.xlu0 %v834
        %v836 = vpop.xlane.xlu0 %835
        %v837 = vsel %vm753, %v811, 0.0
        %838 = vadd.xlane.f32.xlu0 %v837
        %v839 = vpop.xlane.xlu0 %838
        %v840 = vsel %vm753, %v812, 0.0
        %841 = vadd.xlane.f32.xlu0 %v840
        %v842 = vpop.xlane.xlu0 %841
        %v843 = vsel %vm753, %v813, 0.0
        %844 = vadd.xlane.f32.xlu0 %v843
        %v845 = vpop.xlane.xlu0 %844
        %v846 = vsel %vm753, %v814, 0.0
        %847 = vadd.xlane.f32.xlu0 %v846
        %v848 = vpop.xlane.xlu0 %847
        %v849 = vsel %vm753, %v815, 0.0
        %850 = vadd.xlane.f32.xlu0 %v849
        %v851 = vpop.xlane.xlu0 %850
        %v852 = vsel %vm753, %v816, 0.0
        %853 = vadd.xlane.f32.xlu0 %v852
        %v854 = vpop.xlane.xlu0 %853
        %v855 = vsel %vm753, %v817, 0.0
        %856 = vadd.xlane.f32.xlu0 %v855
        %v857 = vpop.xlane.xlu0 %856
        %v858 = vsel %vm753, %v818, 0.0
        %859 = vadd.xlane.f32.xlu0 %v858
        %v860 = vpop.xlane.xlu0 %859
        %v861 = vsel %vm753, %v819, 0.0
        %862 = vadd.xlane.f32.xlu0 %v861
        %v863 = vpop.xlane.xlu0 %862
        %v864 = vsel %vm753, %v820, 0.0
        %865 = vadd.xlane.f32.xlu0 %v864
        %v866 = vpop.xlane.xlu0 %865
        %v867 = vsel %vm753, %v821, 0.0
        %868 = vadd.xlane.f32.xlu0 %v867
        %v869 = vpop.xlane.xlu0 %868
        %v886 = vlaneseq
        %v887 = vand.u32 %v886, 127
        %v888 = vlaneseq
        %v889 = vshrl.u32 %v888, 7
        %v890 = vsub.s32 %v887, %v889
        %v891 = vrot.slane %v824, %v890
        %v892 = vadd.s32 %v887, 4294967288
        %v893 = vlaneseq
        %v894 = vshrl.u32 %v893, 7
        %v895 = vsub.s32 %v892, %v894
        %v896 = vrot.slane %v827, %v895
        %vm897 = vcmask 130112
        %v898 = vsel %vm897, %v896, %v891
        %v899 = vlaneseq
        %v900 = vshrl.u32 %v899, 7
        %v901 = vsub.s32 %v887, %v900
        %v902 = vrot.slane %v830, %v901
        %v903 = vlaneseq
        %v904 = vshrl.u32 %v903, 7
        %v905 = vsub.s32 %v892, %v904
        %v906 = vrot.slane %v833, %v905
        %v907 = vsel %vm897, %v906, %v902
        %v908 = vlaneseq
        %v909 = vshrl.u32 %v908, 7
        %v910 = vsub.s32 %v887, %v909
        %v911 = vrot.slane %v836, %v910
        %v912 = vlaneseq
        %v913 = vshrl.u32 %v912, 7
        %v914 = vsub.s32 %v892, %v913
        %v915 = vrot.slane %v839, %v914
        %v916 = vsel %vm897, %v915, %v911
        %v917 = vlaneseq
        %v918 = vshrl.u32 %v917, 7
        %v919 = vsub.s32 %v887, %v918
        %v920 = vrot.slane %v842, %v919
        %v921 = vlaneseq
        %v922 = vshrl.u32 %v921, 7
        %v923 = vsub.s32 %v892, %v922
        %v924 = vrot.slane %v845, %v923
        %v925 = vsel %vm897, %v924, %v920
        %v926 = vlaneseq
        %v927 = vshrl.u32 %v926, 7
        %v928 = vsub.s32 %v887, %v927
        %v929 = vrot.slane %v848, %v928
        %v930 = vlaneseq
        %v931 = vshrl.u32 %v930, 7
        %v932 = vsub.s32 %v892, %v931
        %v933 = vrot.slane %v851, %v932
        %v934 = vsel %vm897, %v933, %v929
        %v935 = vlaneseq
        %v936 = vshrl.u32 %v935, 7
        %v937 = vsub.s32 %v887, %v936
        %v938 = vrot.slane %v854, %v937
        %v939 = vlaneseq
        %v940 = vshrl.u32 %v939, 7
        %v941 = vsub.s32 %v892, %v940
        %v942 = vrot.slane %v857, %v941
        %v943 = vsel %vm897, %v942, %v938
        %v944 = vlaneseq
        %v945 = vshrl.u32 %v944, 7
        %v946 = vsub.s32 %v887, %v945
        %v947 = vrot.slane %v860, %v946
        %v948 = vlaneseq
        %v949 = vshrl.u32 %v948, 7
        %v950 = vsub.s32 %v892, %v949
        %v951 = vrot.slane %v863, %v950
        %v952 = vsel %vm897, %v951, %v947
        %v953 = vlaneseq
        %v954 = vshrl.u32 %v953, 7
        %v955 = vsub.s32 %v887, %v954
        %v956 = vrot.slane %v866, %v955
        %v957 = vlaneseq
        %v958 = vshrl.u32 %v957, 7
        %v959 = vsub.s32 %v892, %v958
        %v960 = vrot.slane %v869, %v959
        %v961 = vsel %vm897, %v960, %v956
        %vm962 = vcmask 1041409
        %v963 = vsel %vm962, %v907, %v898
        %vm964 = vcmask 1042434
        %v965 = vsel %vm964, %v916, %v963
        %vm966 = vcmask 1043459
        %v967 = vsel %vm966, %v925, %v965
        %vm968 = vcmask 1044484
        %v969 = vsel %vm968, %v934, %v967
        %vm970 = vcmask 1045509
        %v971 = vsel %vm970, %v943, %v969
        %vm972 = vcmask 1046534
        %v973 = vsel %vm972, %v952, %v971
        %vm974 = vcmask 1047559
        %v975 = vsel %vm974, %v961, %v973
        %vm977 = vcmask 130048
        %978 = vst.msk [vmem:[%s317] sm:$0xff] %vm977, %v975
        %979 = vxpose.xlu0.b32.start [1/16] %v637, 128
        %980 = vxpose.xlu0.b32.cont [2/16] %v642, 128
        %981 = vxpose.xlu0.b32.cont [3/16] 0.0, 128
        %982 = vxpose.xlu0.b32.cont [4/16] 0.0, 128
        %983 = vxpose.xlu0.b32.cont [5/16] 0.0, 128
        %984 = vxpose.xlu0.b32.cont [6/16] 0.0, 128
        %985 = vxpose.xlu0.b32.cont [7/16] 0.0, 128
        %986 = vxpose.xlu0.b32.cont [8/16] 0.0, 128
        %987 = vxpose.xlu0.b32.cont [9/16] 0.0, 128
        %988 = vxpose.xlu0.b32.cont [10/16] 0.0, 128
        %989 = vxpose.xlu0.b32.cont [11/16] 0.0, 128
        %990 = vxpose.xlu0.b32.cont [12/16] 0.0, 128
        %991 = vxpose.xlu0.b32.cont [13/16] 0.0, 128
        %992 = vxpose.xlu0.b32.cont [14/16] 0.0, 128
        %993 = vxpose.xlu0.b32.cont [15/16] 0.0, 128
        %994 = vxpose.xlu0.b32.end [16/16] 0.0, 128
        %v995 = vpop.trf.xlu0
        %v996 = vpop.trf.xlu0
        %v997 = vpop.trf.xlu0
        %v998 = vpop.trf.xlu0
        %v999 = vpop.trf.xlu0
        %v1000 = vpop.trf.xlu0
        %v1001 = vpop.trf.xlu0
        %v1002 = vpop.trf.xlu0
        %v1003 = vpop.trf.xlu0
        %v1004 = vpop.trf.xlu0
        %v1005 = vpop.trf.xlu0
        %v1006 = vpop.trf.xlu0
        %v1007 = vpop.trf.xlu0
        %v1008 = vpop.trf.xlu0
        %v1009 = vpop.trf.xlu0
        %v1010 = vpop.trf.xlu0
        %1012 = vset.pattern.permute.xlu0 0
        %1013 = vperm.xlu0 %1012, %v730
        %v1014 = vpop.permute.xlu0 %1013
        %v1016 = vlaneseq
        %v1017 = vshrl.u32 %v1016, 7
        %v1018 = vsub.s32 0, %v1017
        %v1019 = vrot.slane %v995, %v1018
        %v1020 = vadd.f32 %v1014, %v1019
        %v1037 = vlaneseq
        %v1038 = vshrl.u32 %v1037, 7
        %v1039 = vsub.s32 %v887, %v1038
        %v1040 = vrot.slane %v756, %v1039
        %v1041 = vlaneseq
        %v1042 = vshrl.u32 %v1041, 7
        %v1043 = vsub.s32 %v892, %v1042
        %v1044 = vrot.slane %v759, %v1043
        %v1045 = vsel %vm897, %v1044, %v1040
        %v1046 = vlaneseq
        %v1047 = vshrl.u32 %v1046, 7
        %v1048 = vsub.s32 %v887, %v1047
        %v1049 = vrot.slane %v762, %v1048
        %v1050 = vlaneseq
        %v1051 = vshrl.u32 %v1050, 7
        %v1052 = vsub.s32 %v892, %v1051
        %v1053 = vrot.slane %v765, %v1052
        %v1054 = vsel %vm897, %v1053, %v1049
        %v1055 = vlaneseq
        %v1056 = vshrl.u32 %v1055, 7
        %v1057 = vsub.s32 %v887, %v1056
        %v1058 = vrot.slane %v768, %v1057
        %v1059 = vlaneseq
        %v1060 = vshrl.u32 %v1059, 7
        %v1061 = vsub.s32 %v892, %v1060
        %v1062 = vrot.slane %v771, %v1061
        %v1063 = vsel %vm897, %v1062, %v1058
        %v1064 = vlaneseq
        %v1065 = vshrl.u32 %v1064, 7
        %v1066 = vsub.s32 %v887, %v1065
        %v1067 = vrot.slane %v774, %v1066
        %v1068 = vlaneseq
        %v1069 = vshrl.u32 %v1068, 7
        %v1070 = vsub.s32 %v892, %v1069
        %v1071 = vrot.slane %v777, %v1070
        %v1072 = vsel %vm897, %v1071, %v1067
        %v1073 = vlaneseq
        %v1074 = vshrl.u32 %v1073, 7
        %v1075 = vsub.s32 %v887, %v1074
        %v1076 = vrot.slane %v780, %v1075
        %v1077 = vlaneseq
        %v1078 = vshrl.u32 %v1077, 7
        %v1079 = vsub.s32 %v892, %v1078
        %v1080 = vrot.slane %v783, %v1079
        %v1081 = vsel %vm897, %v1080, %v1076
        %v1082 = vlaneseq
        %v1083 = vshrl.u32 %v1082, 7
        %v1084 = vsub.s32 %v887, %v1083
        %v1085 = vrot.slane %v786, %v1084
        %v1086 = vlaneseq
        %v1087 = vshrl.u32 %v1086, 7
        %v1088 = vsub.s32 %v892, %v1087
        %v1089 = vrot.slane %v789, %v1088
        %v1090 = vsel %vm897, %v1089, %v1085
        %v1091 = vlaneseq
        %v1092 = vshrl.u32 %v1091, 7
        %v1093 = vsub.s32 %v887, %v1092
        %v1094 = vrot.slane %v792, %v1093
        %v1095 = vlaneseq
        %v1096 = vshrl.u32 %v1095, 7
        %v1097 = vsub.s32 %v892, %v1096
        %v1098 = vrot.slane %v795, %v1097
        %v1099 = vsel %vm897, %v1098, %v1094
        %v1100 = vlaneseq
        %v1101 = vshrl.u32 %v1100, 7
        %v1102 = vsub.s32 %v887, %v1101
        %v1103 = vrot.slane %v798, %v1102
        %v1104 = vlaneseq
        %v1105 = vshrl.u32 %v1104, 7
        %v1106 = vsub.s32 %v892, %v1105
        %v1107 = vrot.slane %v801, %v1106
        %v1108 = vsel %vm897, %v1107, %v1103
        %v1109 = vsel %vm962, %v1054, %v1045
        %v1110 = vsel %vm964, %v1063, %v1109
        %v1111 = vsel %vm966, %v1072, %v1110
        %v1112 = vsel %vm968, %v1081, %v1111
        %v1113 = vsel %vm970, %v1090, %v1112
        %v1114 = vsel %vm972, %v1099, %v1113
        %v1115 = vsel %vm974, %v1108, %v1114
        %v1117 = vadd.f32 %v1020, %v1115
        %vm1118 = vcmp.gt.f32.partialorder %v1117, 0.0
        %v1119 = vmul.f32 %v1117, 0.2
        %v1120 = vsel %vm1118, %v1117, %v1119
        %vm1121 = vcmp.gt.f32.partialorder %v350, 0.0
        %v1122 = vsel %vm1121, %v1120, -1e+30
        %v1123 = vsel %vm977, %v1122, -inf
        %1124 = vmax.xlane.f32.xlu0 %v1123
        %v1125 = vpop.xlane.xlu0 %1124
        %v1126 = vsub.f32 %v1122, %v1125
        %v1127 = vmul.f32 %v1126, 1.442695
        %v1128 = vpow.pop %v1127
        %v1129 = vmul.f32 %v1128, %v350
        %v1130 = vsel %vm977, %v1129, 0.0
        %1131 = vadd.xlane.f32.xlu0 %v1130
        %v1132 = vpop.xlane.xlu0 %1131
        %v1133 = vadd.f32 %v1132, 1e-30
        %v1134 = vrcp.pop %v1133
        %v1135 = vmul.f32 %v1129, %v1134
        %v1136 = vlaneseq
        %v1137 = vshrl.u32 %v1136, 7
        %v1138 = vsub.s32 1, %v1137
        %v1139 = vrot.slane %v353, %v1138
        %v1140 = vmul.f32 %v334, %v1139
        %v1141 = vmul.f32 %v335, %v1139
        %v1142 = vmul.f32 %v336, %v1139
        %v1143 = vmul.f32 %v337, %v1139
        %v1144 = vmul.f32 %v338, %v1139
        %v1145 = vmul.f32 %v339, %v1139
        %v1146 = vmul.f32 %v340, %v1139
        %v1147 = vmul.f32 %v341, %v1139
        %v1148 = vmul.f32 %v342, %v1139
        %v1149 = vmul.f32 %v343, %v1139
        %v1150 = vmul.f32 %v344, %v1139
        %v1151 = vmul.f32 %v345, %v1139
        %v1152 = vmul.f32 %v346, %v1139
        %v1153 = vmul.f32 %v347, %v1139
        %v1154 = vmul.f32 %v348, %v1139
        %v1155 = vmul.f32 %v349, %v1139
        %v1156 = vsel %vm753, %v1140, 0.0
        %1157 = vadd.xlane.f32.xlu0 %v1156
        %v1158 = vpop.xlane.xlu0 %1157
        %v1159 = vsel %vm753, %v1141, 0.0
        %1160 = vadd.xlane.f32.xlu0 %v1159
        %v1161 = vpop.xlane.xlu0 %1160
        %v1162 = vsel %vm753, %v1142, 0.0
        %1163 = vadd.xlane.f32.xlu0 %v1162
        %v1164 = vpop.xlane.xlu0 %1163
        %v1165 = vsel %vm753, %v1143, 0.0
        %1166 = vadd.xlane.f32.xlu0 %v1165
        %v1167 = vpop.xlane.xlu0 %1166
        %v1168 = vsel %vm753, %v1144, 0.0
        %1169 = vadd.xlane.f32.xlu0 %v1168
        %v1170 = vpop.xlane.xlu0 %1169
        %v1171 = vsel %vm753, %v1145, 0.0
        %1172 = vadd.xlane.f32.xlu0 %v1171
        %v1173 = vpop.xlane.xlu0 %1172
        %v1174 = vsel %vm753, %v1146, 0.0
        %1175 = vadd.xlane.f32.xlu0 %v1174
        %v1176 = vpop.xlane.xlu0 %1175
        %v1177 = vsel %vm753, %v1147, 0.0
        %1178 = vadd.xlane.f32.xlu0 %v1177
        %v1179 = vpop.xlane.xlu0 %1178
        %v1180 = vsel %vm753, %v1148, 0.0
        %1181 = vadd.xlane.f32.xlu0 %v1180
        %v1182 = vpop.xlane.xlu0 %1181
        %v1183 = vsel %vm753, %v1149, 0.0
        %1184 = vadd.xlane.f32.xlu0 %v1183
        %v1185 = vpop.xlane.xlu0 %1184
        %v1186 = vsel %vm753, %v1150, 0.0
        %1187 = vadd.xlane.f32.xlu0 %v1186
        %v1188 = vpop.xlane.xlu0 %1187
        %v1189 = vsel %vm753, %v1151, 0.0
        %1190 = vadd.xlane.f32.xlu0 %v1189
        %v1191 = vpop.xlane.xlu0 %1190
        %v1192 = vsel %vm753, %v1152, 0.0
        %1193 = vadd.xlane.f32.xlu0 %v1192
        %v1194 = vpop.xlane.xlu0 %1193
        %v1195 = vsel %vm753, %v1153, 0.0
        %1196 = vadd.xlane.f32.xlu0 %v1195
        %v1197 = vpop.xlane.xlu0 %1196
        %v1198 = vsel %vm753, %v1154, 0.0
        %1199 = vadd.xlane.f32.xlu0 %v1198
        %v1200 = vpop.xlane.xlu0 %1199
        %v1201 = vsel %vm753, %v1155, 0.0
        %1202 = vadd.xlane.f32.xlu0 %v1201
        %v1203 = vpop.xlane.xlu0 %1202
        %v1204 = vlaneseq
        %v1205 = vshrl.u32 %v1204, 7
        %v1206 = vsub.s32 4, %v1205
        %v1207 = vrot.slane %v353, %v1206
        %v1208 = vmul.f32 %v334, %v1207
        %v1209 = vmul.f32 %v335, %v1207
        %v1210 = vmul.f32 %v336, %v1207
        %v1211 = vmul.f32 %v337, %v1207
        %v1212 = vmul.f32 %v338, %v1207
        %v1213 = vmul.f32 %v339, %v1207
        %v1214 = vmul.f32 %v340, %v1207
        %v1215 = vmul.f32 %v341, %v1207
        %v1216 = vmul.f32 %v342, %v1207
        %v1217 = vmul.f32 %v343, %v1207
        %v1218 = vmul.f32 %v344, %v1207
        %v1219 = vmul.f32 %v345, %v1207
        %v1220 = vmul.f32 %v346, %v1207
        %v1221 = vmul.f32 %v347, %v1207
        %v1222 = vmul.f32 %v348, %v1207
        %v1223 = vmul.f32 %v349, %v1207
        %v1224 = vsel %vm753, %v1208, 0.0
        %1225 = vadd.xlane.f32.xlu0 %v1224
        %v1226 = vpop.xlane.xlu0 %1225
        %v1227 = vsel %vm753, %v1209, 0.0
        %1228 = vadd.xlane.f32.xlu0 %v1227
        %v1229 = vpop.xlane.xlu0 %1228
        %v1230 = vsel %vm753, %v1210, 0.0
        %1231 = vadd.xlane.f32.xlu0 %v1230
        %v1232 = vpop.xlane.xlu0 %1231
        %v1233 = vsel %vm753, %v1211, 0.0
        %1234 = vadd.xlane.f32.xlu0 %v1233
        %v1235 = vpop.xlane.xlu0 %1234
        %v1236 = vsel %vm753, %v1212, 0.0
        %1237 = vadd.xlane.f32.xlu0 %v1236
        %v1238 = vpop.xlane.xlu0 %1237
        %v1239 = vsel %vm753, %v1213, 0.0
        %1240 = vadd.xlane.f32.xlu0 %v1239
        %v1241 = vpop.xlane.xlu0 %1240
        %v1242 = vsel %vm753, %v1214, 0.0
        %1243 = vadd.xlane.f32.xlu0 %v1242
        %v1244 = vpop.xlane.xlu0 %1243
        %v1245 = vsel %vm753, %v1215, 0.0
        %1246 = vadd.xlane.f32.xlu0 %v1245
        %v1247 = vpop.xlane.xlu0 %1246
        %v1248 = vsel %vm753, %v1216, 0.0
        %1249 = vadd.xlane.f32.xlu0 %v1248
        %v1250 = vpop.xlane.xlu0 %1249
        %v1251 = vsel %vm753, %v1217, 0.0
        %1252 = vadd.xlane.f32.xlu0 %v1251
        %v1253 = vpop.xlane.xlu0 %1252
        %v1254 = vsel %vm753, %v1218, 0.0
        %1255 = vadd.xlane.f32.xlu0 %v1254
        %v1256 = vpop.xlane.xlu0 %1255
        %v1257 = vsel %vm753, %v1219, 0.0
        %1258 = vadd.xlane.f32.xlu0 %v1257
        %v1259 = vpop.xlane.xlu0 %1258
        %v1260 = vsel %vm753, %v1220, 0.0
        %1261 = vadd.xlane.f32.xlu0 %v1260
        %v1262 = vpop.xlane.xlu0 %1261
        %v1263 = vsel %vm753, %v1221, 0.0
        %1264 = vadd.xlane.f32.xlu0 %v1263
        %v1265 = vpop.xlane.xlu0 %1264
        %v1266 = vsel %vm753, %v1222, 0.0
        %1267 = vadd.xlane.f32.xlu0 %v1266
        %v1268 = vpop.xlane.xlu0 %1267
        %v1269 = vsel %vm753, %v1223, 0.0
        %1270 = vadd.xlane.f32.xlu0 %v1269
        %v1271 = vpop.xlane.xlu0 %1270
        %v1288 = vlaneseq
        %v1289 = vshrl.u32 %v1288, 7
        %v1290 = vsub.s32 %v887, %v1289
        %v1291 = vrot.slane %v1226, %v1290
        %v1292 = vlaneseq
        %v1293 = vshrl.u32 %v1292, 7
        %v1294 = vsub.s32 %v892, %v1293
        %v1295 = vrot.slane %v1229, %v1294
        %v1296 = vsel %vm897, %v1295, %v1291
        %v1297 = vlaneseq
        %v1298 = vshrl.u32 %v1297, 7
        %v1299 = vsub.s32 %v887, %v1298
        %v1300 = vrot.slane %v1232, %v1299
        %v1301 = vlaneseq
        %v1302 = vshrl.u32 %v1301, 7
        %v1303 = vsub.s32 %v892, %v1302
        %v1304 = vrot.slane %v1235, %v1303
        %v1305 = vsel %vm897, %v1304, %v1300
        %v1306 = vlaneseq
        %v1307 = vshrl.u32 %v1306, 7
        %v1308 = vsub.s32 %v887, %v1307
        %v1309 = vrot.slane %v1238, %v1308
        %v1310 = vlaneseq
        %v1311 = vshrl.u32 %v1310, 7
        %v1312 = vsub.s32 %v892, %v1311
        %v1313 = vrot.slane %v1241, %v1312
        %v1314 = vsel %vm897, %v1313, %v1309
        %v1315 = vlaneseq
        %v1316 = vshrl.u32 %v1315, 7
        %v1317 = vsub.s32 %v887, %v1316
        %v1318 = vrot.slane %v1244, %v1317
        %v1319 = vlaneseq
        %v1320 = vshrl.u32 %v1319, 7
        %v1321 = vsub.s32 %v892, %v1320
        %v1322 = vrot.slane %v1247, %v1321
        %v1323 = vsel %vm897, %v1322, %v1318
        %v1324 = vlaneseq
        %v1325 = vshrl.u32 %v1324, 7
        %v1326 = vsub.s32 %v887, %v1325
        %v1327 = vrot.slane %v1250, %v1326
        %v1328 = vlaneseq
        %v1329 = vshrl.u32 %v1328, 7
        %v1330 = vsub.s32 %v892, %v1329
        %v1331 = vrot.slane %v1253, %v1330
        %v1332 = vsel %vm897, %v1331, %v1327
        %v1333 = vlaneseq
        %v1334 = vshrl.u32 %v1333, 7
        %v1335 = vsub.s32 %v887, %v1334
        %v1336 = vrot.slane %v1256, %v1335
        %v1337 = vlaneseq
        %v1338 = vshrl.u32 %v1337, 7
        %v1339 = vsub.s32 %v892, %v1338
        %v1340 = vrot.slane %v1259, %v1339
        %v1341 = vsel %vm897, %v1340, %v1336
        %v1342 = vlaneseq
        %v1343 = vshrl.u32 %v1342, 7
        %v1344 = vsub.s32 %v887, %v1343
        %v1345 = vrot.slane %v1262, %v1344
        %v1346 = vlaneseq
        %v1347 = vshrl.u32 %v1346, 7
        %v1348 = vsub.s32 %v892, %v1347
        %v1349 = vrot.slane %v1265, %v1348
        %v1350 = vsel %vm897, %v1349, %v1345
        %v1351 = vlaneseq
        %v1352 = vshrl.u32 %v1351, 7
        %v1353 = vsub.s32 %v887, %v1352
        %v1354 = vrot.slane %v1268, %v1353
        %v1355 = vlaneseq
        %v1356 = vshrl.u32 %v1355, 7
        %v1357 = vsub.s32 %v892, %v1356
        %v1358 = vrot.slane %v1271, %v1357
        %v1359 = vsel %vm897, %v1358, %v1354
        %v1360 = vsel %vm962, %v1305, %v1296
        %v1361 = vsel %vm964, %v1314, %v1360
        %v1362 = vsel %vm966, %v1323, %v1361
        %v1363 = vsel %vm968, %v1332, %v1362
        %v1364 = vsel %vm970, %v1341, %v1363
        %v1365 = vsel %vm972, %v1350, %v1364
        %v1366 = vsel %vm974, %v1359, %v1365
        %s1368 = scalar_lea.vmem %s317, 8 [#allocation2]
        %1369 = vst.msk [vmem:[%s1368] sm:$0xff] %vm977, %v1366
        %1372 = vrot.lane.b32.xlu0 %v637, 127
        %v1373 = vpop.permute.xlu0 %1372
        %1374 = vrot.lane.b32.xlu0 %v642, 127
        %v1375 = vpop.permute.xlu0 %1374
        %1378 = vxpose.xlu0.b32.start [1/16] %v1373, 128
        %1379 = vxpose.xlu0.b32.cont [2/16] %v1375, 128
        %1380 = vxpose.xlu0.b32.cont [3/16] 0.0, 128
        %1381 = vxpose.xlu0.b32.cont [4/16] 0.0, 128
        %1382 = vxpose.xlu0.b32.cont [5/16] 0.0, 128
        %1383 = vxpose.xlu0.b32.cont [6/16] 0.0, 128
        %1384 = vxpose.xlu0.b32.cont [7/16] 0.0, 128
        %1385 = vxpose.xlu0.b32.cont [8/16] 0.0, 128
        %1386 = vxpose.xlu0.b32.cont [9/16] 0.0, 128
        %1387 = vxpose.xlu0.b32.cont [10/16] 0.0, 128
        %1388 = vxpose.xlu0.b32.cont [11/16] 0.0, 128
        %1389 = vxpose.xlu0.b32.cont [12/16] 0.0, 128
        %1390 = vxpose.xlu0.b32.cont [13/16] 0.0, 128
        %1391 = vxpose.xlu0.b32.cont [14/16] 0.0, 128
        %1392 = vxpose.xlu0.b32.cont [15/16] 0.0, 128
        %1393 = vxpose.xlu0.b32.end [16/16] 0.0, 128
        %v1394 = vpop.trf.xlu0
        %v1395 = vpop.trf.xlu0
        %v1396 = vpop.trf.xlu0
        %v1397 = vpop.trf.xlu0
        %v1398 = vpop.trf.xlu0
        %v1399 = vpop.trf.xlu0
        %v1400 = vpop.trf.xlu0
        %v1401 = vpop.trf.xlu0
        %v1402 = vpop.trf.xlu0
        %v1403 = vpop.trf.xlu0
        %v1404 = vpop.trf.xlu0
        %v1405 = vpop.trf.xlu0
        %v1406 = vpop.trf.xlu0
        %v1407 = vpop.trf.xlu0
        %v1408 = vpop.trf.xlu0
        %v1409 = vpop.trf.xlu0
        %1410 = vset.pattern.permute.xlu0 1
        %1411 = vperm.xlu0 %1410, %v730
        %v1412 = vpop.permute.xlu0 %1411
        %v1414 = vlaneseq
        %v1415 = vshrl.u32 %v1414, 7
        %v1416 = vsub.s32 0, %v1415
        %v1417 = vrot.slane %v1394, %v1416
        %v1418 = vadd.f32 %v1412, %v1417
        %v1435 = vlaneseq
        %v1436 = vshrl.u32 %v1435, 7
        %v1437 = vsub.s32 %v887, %v1436
        %v1438 = vrot.slane %v1158, %v1437
        %v1439 = vlaneseq
        %v1440 = vshrl.u32 %v1439, 7
        %v1441 = vsub.s32 %v892, %v1440
        %v1442 = vrot.slane %v1161, %v1441
        %v1443 = vsel %vm897, %v1442, %v1438
        %v1444 = vlaneseq
        %v1445 = vshrl.u32 %v1444, 7
        %v1446 = vsub.s32 %v887, %v1445
        %v1447 = vrot.slane %v1164, %v1446
        %v1448 = vlaneseq
        %v1449 = vshrl.u32 %v1448, 7
        %v1450 = vsub.s32 %v892, %v1449
        %v1451 = vrot.slane %v1167, %v1450
        %v1452 = vsel %vm897, %v1451, %v1447
        %v1453 = vlaneseq
        %v1454 = vshrl.u32 %v1453, 7
        %v1455 = vsub.s32 %v887, %v1454
        %v1456 = vrot.slane %v1170, %v1455
        %v1457 = vlaneseq
        %v1458 = vshrl.u32 %v1457, 7
        %v1459 = vsub.s32 %v892, %v1458
        %v1460 = vrot.slane %v1173, %v1459
        %v1461 = vsel %vm897, %v1460, %v1456
        %v1462 = vlaneseq
        %v1463 = vshrl.u32 %v1462, 7
        %v1464 = vsub.s32 %v887, %v1463
        %v1465 = vrot.slane %v1176, %v1464
        %v1466 = vlaneseq
        %v1467 = vshrl.u32 %v1466, 7
        %v1468 = vsub.s32 %v892, %v1467
        %v1469 = vrot.slane %v1179, %v1468
        %v1470 = vsel %vm897, %v1469, %v1465
        %v1471 = vlaneseq
        %v1472 = vshrl.u32 %v1471, 7
        %v1473 = vsub.s32 %v887, %v1472
        %v1474 = vrot.slane %v1182, %v1473
        %v1475 = vlaneseq
        %v1476 = vshrl.u32 %v1475, 7
        %v1477 = vsub.s32 %v892, %v1476
        %v1478 = vrot.slane %v1185, %v1477
        %v1479 = vsel %vm897, %v1478, %v1474
        %v1480 = vlaneseq
        %v1481 = vshrl.u32 %v1480, 7
        %v1482 = vsub.s32 %v887, %v1481
        %v1483 = vrot.slane %v1188, %v1482
        %v1484 = vlaneseq
        %v1485 = vshrl.u32 %v1484, 7
        %v1486 = vsub.s32 %v892, %v1485
        %v1487 = vrot.slane %v1191, %v1486
        %v1488 = vsel %vm897, %v1487, %v1483
        %v1489 = vlaneseq
        %v1490 = vshrl.u32 %v1489, 7
        %v1491 = vsub.s32 %v887, %v1490
        %v1492 = vrot.slane %v1194, %v1491
        %v1493 = vlaneseq
        %v1494 = vshrl.u32 %v1493, 7
        %v1495 = vsub.s32 %v892, %v1494
        %v1496 = vrot.slane %v1197, %v1495
        %v1497 = vsel %vm897, %v1496, %v1492
        %v1498 = vlaneseq
        %v1499 = vshrl.u32 %v1498, 7
        %v1500 = vsub.s32 %v887, %v1499
        %v1501 = vrot.slane %v1200, %v1500
        %v1502 = vlaneseq
        %v1503 = vshrl.u32 %v1502, 7
        %v1504 = vsub.s32 %v892, %v1503
        %v1505 = vrot.slane %v1203, %v1504
        %v1506 = vsel %vm897, %v1505, %v1501
        %v1507 = vsel %vm962, %v1452, %v1443
        %v1508 = vsel %vm964, %v1461, %v1507
        %v1509 = vsel %vm966, %v1470, %v1508
        %v1510 = vsel %vm968, %v1479, %v1509
        %v1511 = vsel %vm970, %v1488, %v1510
        %v1512 = vsel %vm972, %v1497, %v1511
        %v1513 = vsel %vm974, %v1506, %v1512
        %v1515 = vadd.f32 %v1418, %v1513
        %vm1516 = vcmp.gt.f32.partialorder %v1515, 0.0
        %v1517 = vmul.f32 %v1515, 0.2
        %v1518 = vsel %vm1516, %v1515, %v1517
        %v1519 = vsel %vm1121, %v1518, -1e+30
        %v1520 = vsel %vm977, %v1519, -inf
        %1521 = vmax.xlane.f32.xlu0 %v1520
        %v1522 = vpop.xlane.xlu0 %1521
        %v1523 = vsub.f32 %v1519, %v1522
        %v1524 = vmul.f32 %v1523, 1.442695
        %v1525 = vpow.pop %v1524
        %v1526 = vmul.f32 %v1525, %v350
        %v1527 = vsel %vm977, %v1526, 0.0
        %1528 = vadd.xlane.f32.xlu0 %v1527
        %v1529 = vpop.xlane.xlu0 %1528
        %v1530 = vadd.f32 %v1529, 1e-30
        %v1531 = vrcp.pop %v1530
        %v1532 = vmul.f32 %v1526, %v1531
        %v1534 = vsel %vm977, %v1532, 0
        %1536 = vmatprep.subr.mxu0 0.0
        %1537 = vmatpush1.msra.mxu0 %v471
        %1538 = vmatprep.subr.mxu0 0.0
        %1539 = vmatpush1.msra.mxu0 %v477
        %1540 = vmatprep.subr.mxu0 0.0
        %1541 = vmatpush1.msra.mxu0 0.0
        %1542 = vmatprep.subr.mxu0 0.0
        %1543 = vmatpush1.msra.mxu0 0.0
        %1544 = vmatprep.subr.mxu0 0.0
        %1545 = vmatpush1.msra.mxu0 0.0
        %1546 = vmatprep.subr.mxu0 0.0
        %1547 = vmatpush1.msra.mxu0 0.0
        %1548 = vmatprep.subr.mxu0 0.0
        %1549 = vmatpush1.msra.mxu0 0.0
        %1550 = vmatprep.subr.mxu0 0.0
        %1551 = vmatpush1.msra.mxu0 0.0
        %1552 = vmatprep.subr.mxu0 0.0
        %1553 = vmatpush1.msra.mxu0 0.0
        %1554 = vmatprep.subr.mxu0 0.0
        %1555 = vmatpush1.msra.mxu0 0.0
        %1556 = vmatprep.subr.mxu0 0.0
        %1557 = vmatpush1.msra.mxu0 0.0
        %1558 = vmatprep.subr.mxu0 0.0
        %1559 = vmatpush1.msra.mxu0 0.0
        %1560 = vmatprep.subr.mxu0 0.0
        %1561 = vmatpush1.msra.mxu0 0.0
        %1562 = vmatprep.subr.mxu0 0.0
        %1563 = vmatpush1.msra.mxu0 0.0
        %1564 = vmatprep.subr.mxu0 0.0
        %1565 = vmatpush1.msra.mxu0 0.0
        %1566 = vmatprep.subr.mxu0 0.0
        %1567 = vmatpush1.msra.mxu0 0.0
        %1568 = vmatprep.subr.mxu0 0.0
        %1569 = vmatpush1.msra.mxu0 0.0
        %1570 = vmatprep.subr.mxu0 0.0
        %1571 = vmatpush1.msra.mxu0 0.0
        %1572 = vmatprep.subr.mxu0 0.0
        %1573 = vmatpush1.msra.mxu0 0.0
        %1574 = vmatprep.subr.mxu0 0.0
        %1575 = vmatpush1.msra.mxu0 0.0
        %1576 = vmatprep.subr.mxu0 0.0
        %1577 = vmatpush1.msra.mxu0 0.0
        %1578 = vmatprep.subr.mxu0 0.0
        %1579 = vmatpush1.msra.mxu0 0.0
        %1580 = vmatprep.subr.mxu0 0.0
        %1581 = vmatpush1.msra.mxu0 0.0
        %1582 = vmatprep.subr.mxu0 0.0
        %1583 = vmatpush1.msra.mxu0 0.0
        %1584 = vmatprep.subr.mxu0 0.0
        %1585 = vmatpush1.msra.mxu0 0.0
        %1586 = vmatprep.subr.mxu0 0.0
        %1587 = vmatpush1.msra.mxu0 0.0
        %1588 = vmatprep.subr.mxu0 0.0
        %1589 = vmatpush1.msra.mxu0 0.0
        %1590 = vmatprep.subr.mxu0 0.0
        %1591 = vmatpush1.msra.mxu0 0.0
        %1592 = vmatprep.subr.mxu0 0.0
        %1593 = vmatpush1.msra.mxu0 0.0
        %1594 = vmatprep.subr.mxu0 0.0
        %1595 = vmatpush1.msra.mxu0 0.0
        %1596 = vmatprep.subr.mxu0 0.0
        %1597 = vmatpush1.msra.mxu0 0.0
        %1598 = vmatprep.subr.mxu0 0.0
        %1599 = vmatpush1.msra.mxu0 0.0
        %1600 = vmatprep.mubr.f32.mxu0 0.0
        %1601 = vmatmul.mubr.f32.gmra.mrb[0].mxu0 %v1534
        %v1602 = vpop.f32.mrb[0].mxu0
        %v1603 = vadd.f32 0.0, %v1602
        %v1604 = vpop.f32.mrb[0].mxu0
        %1605 = vdwg.mxu0
        %v1607 = vsel %vm977, %v1135, 0
        %1609 = vmatprep.subr.mxu0 0.0
        %1610 = vmatpush1.msra.mxu0 %v469
        %1611 = vmatprep.subr.mxu0 0.0
        %1612 = vmatpush1.msra.mxu0 %v475
        %1613 = vmatprep.subr.mxu0 0.0
        %1614 = vmatpush1.msra.mxu0 0.0
        %1615 = vmatprep.subr.mxu0 0.0
        %1616 = vmatpush1.msra.mxu0 0.0
        %1617 = vmatprep.subr.mxu0 0.0
        %1618 = vmatpush1.msra.mxu0 0.0
        %1619 = vmatprep.subr.mxu0 0.0
        %1620 = vmatpush1.msra.mxu0 0.0
        %1621 = vmatprep.subr.mxu0 0.0
        %1622 = vmatpush1.msra.mxu0 0.0
        %1623 = vmatprep.subr.mxu0 0.0
        %1624 = vmatpush1.msra.mxu0 0.0
        %1625 = vmatprep.subr.mxu0 0.0
        %1626 = vmatpush1.msra.mxu0 0.0
        %1627 = vmatprep.subr.mxu0 0.0
        %1628 = vmatpush1.msra.mxu0 0.0
        %1629 = vmatprep.subr.mxu0 0.0
        %1630 = vmatpush1.msra.mxu0 0.0
        %1631 = vmatprep.subr.mxu0 0.0
        %1632 = vmatpush1.msra.mxu0 0.0
        %1633 = vmatprep.subr.mxu0 0.0
        %1634 = vmatpush1.msra.mxu0 0.0
        %1635 = vmatprep.subr.mxu0 0.0
        %1636 = vmatpush1.msra.mxu0 0.0
        %1637 = vmatprep.subr.mxu0 0.0
        %1638 = vmatpush1.msra.mxu0 0.0
        %1639 = vmatprep.subr.mxu0 0.0
        %1640 = vmatpush1.msra.mxu0 0.0
        %1641 = vmatprep.subr.mxu0 0.0
        %1642 = vmatpush1.msra.mxu0 0.0
        %1643 = vmatprep.subr.mxu0 0.0
        %1644 = vmatpush1.msra.mxu0 0.0
        %1645 = vmatprep.subr.mxu0 0.0
        %1646 = vmatpush1.msra.mxu0 0.0
        %1647 = vmatprep.subr.mxu0 0.0
        %1648 = vmatpush1.msra.mxu0 0.0
        %1649 = vmatprep.subr.mxu0 0.0
        %1650 = vmatpush1.msra.mxu0 0.0
        %1651 = vmatprep.subr.mxu0 0.0
        %1652 = vmatpush1.msra.mxu0 0.0
        %1653 = vmatprep.subr.mxu0 0.0
        %1654 = vmatpush1.msra.mxu0 0.0
        %1655 = vmatprep.subr.mxu0 0.0
        %1656 = vmatpush1.msra.mxu0 0.0
        %1657 = vmatprep.subr.mxu0 0.0
        %1658 = vmatpush1.msra.mxu0 0.0
        %1659 = vmatprep.subr.mxu0 0.0
        %1660 = vmatpush1.msra.mxu0 0.0
        %1661 = vmatprep.subr.mxu0 0.0
        %1662 = vmatpush1.msra.mxu0 0.0
        %1663 = vmatprep.subr.mxu0 0.0
        %1664 = vmatpush1.msra.mxu0 0.0
        %1665 = vmatprep.subr.mxu0 0.0
        %1666 = vmatpush1.msra.mxu0 0.0
        %1667 = vmatprep.subr.mxu0 0.0
        %1668 = vmatpush1.msra.mxu0 0.0
        %1669 = vmatprep.subr.mxu0 0.0
        %1670 = vmatpush1.msra.mxu0 0.0
        %1671 = vmatprep.subr.mxu0 0.0
        %1672 = vmatpush1.msra.mxu0 0.0
        %1673 = vmatprep.mubr.f32.mxu0 0.0
        %1674 = vmatmul.mubr.f32.gmra.mrb[0].mxu0 %v1607
        %v1675 = vpop.f32.mrb[0].mxu0
        %v1676 = vadd.f32 %v1603, %v1675
        %v1677 = vpop.f32.mrb[0].mxu0
        %1678 = vdwg.mxu0
        %v1679 = vlaneseq
        %v1680 = vshrl.u32 %v1679, 7
        %v1681 = vsub.s32 2, %v1680
        %v1682 = vrot.slane %v353, %v1681
        %v1683 = vmul.f32 %v334, %v1682
        %v1684 = vmul.f32 %v335, %v1682
        %v1685 = vmul.f32 %v336, %v1682
        %v1686 = vmul.f32 %v337, %v1682
        %v1687 = vmul.f32 %v338, %v1682
        %v1688 = vmul.f32 %v339, %v1682
        %v1689 = vmul.f32 %v340, %v1682
        %v1690 = vmul.f32 %v341, %v1682
        %v1691 = vmul.f32 %v342, %v1682
        %v1692 = vmul.f32 %v343, %v1682
        %v1693 = vmul.f32 %v344, %v1682
        %v1694 = vmul.f32 %v345, %v1682
        %v1695 = vmul.f32 %v346, %v1682
        %v1696 = vmul.f32 %v347, %v1682
        %v1697 = vmul.f32 %v348, %v1682
        %v1698 = vmul.f32 %v349, %v1682
        %v1699 = vsel %vm753, %v1683, 0.0
        %1700 = vadd.xlane.f32.xlu0 %v1699
        %v1701 = vpop.xlane.xlu0 %1700
        %v1702 = vsel %vm753, %v1684, 0.0
        %1703 = vadd.xlane.f32.xlu0 %v1702
        %v1704 = vpop.xlane.xlu0 %1703
        %v1705 = vsel %vm753, %v1685, 0.0
        %1706 = vadd.xlane.f32.xlu0 %v1705
        %v1707 = vpop.xlane.xlu0 %1706
        %v1708 = vsel %vm753, %v1686, 0.0
        %1709 = vadd.xlane.f32.xlu0 %v1708
        %v1710 = vpop.xlane.xlu0 %1709
        %v1711 = vsel %vm753, %v1687, 0.0
        %1712 = vadd.xlane.f32.xlu0 %v1711
        %v1713 = vpop.xlane.xlu0 %1712
        %v1714 = vsel %vm753, %v1688, 0.0
        %1715 = vadd.xlane.f32.xlu0 %v1714
        %v1716 = vpop.xlane.xlu0 %1715
        %v1717 = vsel %vm753, %v1689, 0.0
        %1718 = vadd.xlane.f32.xlu0 %v1717
        %v1719 = vpop.xlane.xlu0 %1718
        %v1720 = vsel %vm753, %v1690, 0.0
        %1721 = vadd.xlane.f32.xlu0 %v1720
        %v1722 = vpop.xlane.xlu0 %1721
        %v1723 = vsel %vm753, %v1691, 0.0
        %1724 = vadd.xlane.f32.xlu0 %v1723
        %v1725 = vpop.xlane.xlu0 %1724
        %v1726 = vsel %vm753, %v1692, 0.0
        %1727 = vadd.xlane.f32.xlu0 %v1726
        %v1728 = vpop.xlane.xlu0 %1727
        %v1729 = vsel %vm753, %v1693, 0.0
        %1730 = vadd.xlane.f32.xlu0 %v1729
        %v1731 = vpop.xlane.xlu0 %1730
        %v1732 = vsel %vm753, %v1694, 0.0
        %1733 = vadd.xlane.f32.xlu0 %v1732
        %v1734 = vpop.xlane.xlu0 %1733
        %v1735 = vsel %vm753, %v1695, 0.0
        %1736 = vadd.xlane.f32.xlu0 %v1735
        %v1737 = vpop.xlane.xlu0 %1736
        %v1738 = vsel %vm753, %v1696, 0.0
        %1739 = vadd.xlane.f32.xlu0 %v1738
        %v1740 = vpop.xlane.xlu0 %1739
        %v1741 = vsel %vm753, %v1697, 0.0
        %1742 = vadd.xlane.f32.xlu0 %v1741
        %v1743 = vpop.xlane.xlu0 %1742
        %v1744 = vsel %vm753, %v1698, 0.0
        %1745 = vadd.xlane.f32.xlu0 %v1744
        %v1746 = vpop.xlane.xlu0 %1745
        %v1747 = vlaneseq
        %v1748 = vshrl.u32 %v1747, 7
        %v1749 = vsub.s32 5, %v1748
        %v1750 = vrot.slane %v353, %v1749
        %v1751 = vmul.f32 %v334, %v1750
        %v1752 = vmul.f32 %v335, %v1750
        %v1753 = vmul.f32 %v336, %v1750
        %v1754 = vmul.f32 %v337, %v1750
        %v1755 = vmul.f32 %v338, %v1750
        %v1756 = vmul.f32 %v339, %v1750
        %v1757 = vmul.f32 %v340, %v1750
        %v1758 = vmul.f32 %v341, %v1750
        %v1759 = vmul.f32 %v342, %v1750
        %v1760 = vmul.f32 %v343, %v1750
        %v1761 = vmul.f32 %v344, %v1750
        %v1762 = vmul.f32 %v345, %v1750
        %v1763 = vmul.f32 %v346, %v1750
        %v1764 = vmul.f32 %v347, %v1750
        %v1765 = vmul.f32 %v348, %v1750
        %v1766 = vmul.f32 %v349, %v1750
        %v1767 = vsel %vm753, %v1751, 0.0
        %1768 = vadd.xlane.f32.xlu0 %v1767
        %v1769 = vpop.xlane.xlu0 %1768
        %v1770 = vsel %vm753, %v1752, 0.0
        %1771 = vadd.xlane.f32.xlu0 %v1770
        %v1772 = vpop.xlane.xlu0 %1771
        %v1773 = vsel %vm753, %v1753, 0.0
        %1774 = vadd.xlane.f32.xlu0 %v1773
        %v1775 = vpop.xlane.xlu0 %1774
        %v1776 = vsel %vm753, %v1754, 0.0
        %1777 = vadd.xlane.f32.xlu0 %v1776
        %v1778 = vpop.xlane.xlu0 %1777
        %v1779 = vsel %vm753, %v1755, 0.0
        %1780 = vadd.xlane.f32.xlu0 %v1779
        %v1781 = vpop.xlane.xlu0 %1780
        %v1782 = vsel %vm753, %v1756, 0.0
        %1783 = vadd.xlane.f32.xlu0 %v1782
        %v1784 = vpop.xlane.xlu0 %1783
        %v1785 = vsel %vm753, %v1757, 0.0
        %1786 = vadd.xlane.f32.xlu0 %v1785
        %v1787 = vpop.xlane.xlu0 %1786
        %v1788 = vsel %vm753, %v1758, 0.0
        %1789 = vadd.xlane.f32.xlu0 %v1788
        %v1790 = vpop.xlane.xlu0 %1789
        %v1791 = vsel %vm753, %v1759, 0.0
        %1792 = vadd.xlane.f32.xlu0 %v1791
        %v1793 = vpop.xlane.xlu0 %1792
        %v1794 = vsel %vm753, %v1760, 0.0
        %1795 = vadd.xlane.f32.xlu0 %v1794
        %v1796 = vpop.xlane.xlu0 %1795
        %v1797 = vsel %vm753, %v1761, 0.0
        %1798 = vadd.xlane.f32.xlu0 %v1797
        %v1799 = vpop.xlane.xlu0 %1798
        %v1800 = vsel %vm753, %v1762, 0.0
        %1801 = vadd.xlane.f32.xlu0 %v1800
        %v1802 = vpop.xlane.xlu0 %1801
        %v1803 = vsel %vm753, %v1763, 0.0
        %1804 = vadd.xlane.f32.xlu0 %v1803
        %v1805 = vpop.xlane.xlu0 %1804
        %v1806 = vsel %vm753, %v1764, 0.0
        %1807 = vadd.xlane.f32.xlu0 %v1806
        %v1808 = vpop.xlane.xlu0 %1807
        %v1809 = vsel %vm753, %v1765, 0.0
        %1810 = vadd.xlane.f32.xlu0 %v1809
        %v1811 = vpop.xlane.xlu0 %1810
        %v1812 = vsel %vm753, %v1766, 0.0
        %1813 = vadd.xlane.f32.xlu0 %v1812
        %v1814 = vpop.xlane.xlu0 %1813
        %v1831 = vlaneseq
        %v1832 = vshrl.u32 %v1831, 7
        %v1833 = vsub.s32 %v887, %v1832
        %v1834 = vrot.slane %v1769, %v1833
        %v1835 = vlaneseq
        %v1836 = vshrl.u32 %v1835, 7
        %v1837 = vsub.s32 %v892, %v1836
        %v1838 = vrot.slane %v1772, %v1837
        %v1839 = vsel %vm897, %v1838, %v1834
        %v1840 = vlaneseq
        %v1841 = vshrl.u32 %v1840, 7
        %v1842 = vsub.s32 %v887, %v1841
        %v1843 = vrot.slane %v1775, %v1842
        %v1844 = vlaneseq
        %v1845 = vshrl.u32 %v1844, 7
        %v1846 = vsub.s32 %v892, %v1845
        %v1847 = vrot.slane %v1778, %v1846
        %v1848 = vsel %vm897, %v1847, %v1843
        %v1849 = vlaneseq
        %v1850 = vshrl.u32 %v1849, 7
        %v1851 = vsub.s32 %v887, %v1850
        %v1852 = vrot.slane %v1781, %v1851
        %v1853 = vlaneseq
        %v1854 = vshrl.u32 %v1853, 7
        %v1855 = vsub.s32 %v892, %v1854
        %v1856 = vrot.slane %v1784, %v1855
        %v1857 = vsel %vm897, %v1856, %v1852
        %v1858 = vlaneseq
        %v1859 = vshrl.u32 %v1858, 7
        %v1860 = vsub.s32 %v887, %v1859
        %v1861 = vrot.slane %v1787, %v1860
        %v1862 = vlaneseq
        %v1863 = vshrl.u32 %v1862, 7
        %v1864 = vsub.s32 %v892, %v1863
        %v1865 = vrot.slane %v1790, %v1864
        %v1866 = vsel %vm897, %v1865, %v1861
        %v1867 = vlaneseq
        %v1868 = vshrl.u32 %v1867, 7
        %v1869 = vsub.s32 %v887, %v1868
        %v1870 = vrot.slane %v1793, %v1869
        %v1871 = vlaneseq
        %v1872 = vshrl.u32 %v1871, 7
        %v1873 = vsub.s32 %v892, %v1872
        %v1874 = vrot.slane %v1796, %v1873
        %v1875 = vsel %vm897, %v1874, %v1870
        %v1876 = vlaneseq
        %v1877 = vshrl.u32 %v1876, 7
        %v1878 = vsub.s32 %v887, %v1877
        %v1879 = vrot.slane %v1799, %v1878
        %v1880 = vlaneseq
        %v1881 = vshrl.u32 %v1880, 7
        %v1882 = vsub.s32 %v892, %v1881
        %v1883 = vrot.slane %v1802, %v1882
        %v1884 = vsel %vm897, %v1883, %v1879
        %v1885 = vlaneseq
        %v1886 = vshrl.u32 %v1885, 7
        %v1887 = vsub.s32 %v887, %v1886
        %v1888 = vrot.slane %v1805, %v1887
        %v1889 = vlaneseq
        %v1890 = vshrl.u32 %v1889, 7
        %v1891 = vsub.s32 %v892, %v1890
        %v1892 = vrot.slane %v1808, %v1891
        %v1893 = vsel %vm897, %v1892, %v1888
        %v1894 = vlaneseq
        %v1895 = vshrl.u32 %v1894, 7
        %v1896 = vsub.s32 %v887, %v1895
        %v1897 = vrot.slane %v1811, %v1896
        %v1898 = vlaneseq
        %v1899 = vshrl.u32 %v1898, 7
        %v1900 = vsub.s32 %v892, %v1899
        %v1901 = vrot.slane %v1814, %v1900
        %v1902 = vsel %vm897, %v1901, %v1897
        %v1903 = vsel %vm962, %v1848, %v1839
        %v1904 = vsel %vm964, %v1857, %v1903
        %v1905 = vsel %vm966, %v1866, %v1904
        %v1906 = vsel %vm968, %v1875, %v1905
        %v1907 = vsel %vm970, %v1884, %v1906
        %v1908 = vsel %vm972, %v1893, %v1907
        %v1909 = vsel %vm974, %v1902, %v1908
        %s1911 = scalar_lea.vmem %s317, 16 [#allocation2]
        %1912 = vst.msk [vmem:[%s1911] sm:$0xff] %vm977, %v1909
        %1913 = vrot.lane.b32.xlu0 %v637, 126
        %v1914 = vpop.permute.xlu0 %1913
        %1915 = vrot.lane.b32.xlu0 %v642, 126
        %v1916 = vpop.permute.xlu0 %1915
        %1919 = vxpose.xlu0.b32.start [1/16] %v1914, 128
        %1920 = vxpose.xlu0.b32.cont [2/16] %v1916, 128
        %1921 = vxpose.xlu0.b32.cont [3/16] 0.0, 128
        %1922 = vxpose.xlu0.b32.cont [4/16] 0.0, 128
        %1923 = vxpose.xlu0.b32.cont [5/16] 0.0, 128
        %1924 = vxpose.xlu0.b32.cont [6/16] 0.0, 128
        %1925 = vxpose.xlu0.b32.cont [7/16] 0.0, 128
        %1926 = vxpose.xlu0.b32.cont [8/16] 0.0, 128
        %1927 = vxpose.xlu0.b32.cont [9/16] 0.0, 128
        %1928 = vxpose.xlu0.b32.cont [10/16] 0.0, 128
        %1929 = vxpose.xlu0.b32.cont [11/16] 0.0, 128
        %1930 = vxpose.xlu0.b32.cont [12/16] 0.0, 128
        %1931 = vxpose.xlu0.b32.cont [13/16] 0.0, 128
        %1932 = vxpose.xlu0.b32.cont [14/16] 0.0, 128
        %1933 = vxpose.xlu0.b32.cont [15/16] 0.0, 128
        %1934 = vxpose.xlu0.b32.end [16/16] 0.0, 128
        %v1935 = vpop.trf.xlu0
        %v1936 = vpop.trf.xlu0
        %v1937 = vpop.trf.xlu0
        %v1938 = vpop.trf.xlu0
        %v1939 = vpop.trf.xlu0
        %v1940 = vpop.trf.xlu0
        %v1941 = vpop.trf.xlu0
        %v1942 = vpop.trf.xlu0
        %v1943 = vpop.trf.xlu0
        %v1944 = vpop.trf.xlu0
        %v1945 = vpop.trf.xlu0
        %v1946 = vpop.trf.xlu0
        %v1947 = vpop.trf.xlu0
        %v1948 = vpop.trf.xlu0
        %v1949 = vpop.trf.xlu0
        %v1950 = vpop.trf.xlu0
        %1951 = vset.pattern.permute.xlu0 2
        %1952 = vperm.xlu0 %1951, %v730
        %v1953 = vpop.permute.xlu0 %1952
        %v1955 = vlaneseq
        %v1956 = vshrl.u32 %v1955, 7
        %v1957 = vsub.s32 0, %v1956
        %v1958 = vrot.slane %v1935, %v1957
        %v1959 = vadd.f32 %v1953, %v1958
        %v1976 = vlaneseq
        %v1977 = vshrl.u32 %v1976, 7
        %v1978 = vsub.s32 %v887, %v1977
        %v1979 = vrot.slane %v1701, %v1978
        %v1980 = vlaneseq
        %v1981 = vshrl.u32 %v1980, 7
        %v1982 = vsub.s32 %v892, %v1981
        %v1983 = vrot.slane %v1704, %v1982
        %v1984 = vsel %vm897, %v1983, %v1979
        %v1985 = vlaneseq
        %v1986 = vshrl.u32 %v1985, 7
        %v1987 = vsub.s32 %v887, %v1986
        %v1988 = vrot.slane %v1707, %v1987
        %v1989 = vlaneseq
        %v1990 = vshrl.u32 %v1989, 7
        %v1991 = vsub.s32 %v892, %v1990
        %v1992 = vrot.slane %v1710, %v1991
        %v1993 = vsel %vm897, %v1992, %v1988
        %v1994 = vlaneseq
        %v1995 = vshrl.u32 %v1994, 7
        %v1996 = vsub.s32 %v887, %v1995
        %v1997 = vrot.slane %v1713, %v1996
        %v1998 = vlaneseq
        %v1999 = vshrl.u32 %v1998, 7
        %v2000 = vsub.s32 %v892, %v1999
        %v2001 = vrot.slane %v1716, %v2000
        %v2002 = vsel %vm897, %v2001, %v1997
        %v2003 = vlaneseq
        %v2004 = vshrl.u32 %v2003, 7
        %v2005 = vsub.s32 %v887, %v2004
        %v2006 = vrot.slane %v1719, %v2005
        %v2007 = vlaneseq
        %v2008 = vshrl.u32 %v2007, 7
        %v2009 = vsub.s32 %v892, %v2008
        %v2010 = vrot.slane %v1722, %v2009
        %v2011 = vsel %vm897, %v2010, %v2006
        %v2012 = vlaneseq
        %v2013 = vshrl.u32 %v2012, 7
        %v2014 = vsub.s32 %v887, %v2013
        %v2015 = vrot.slane %v1725, %v2014
        %v2016 = vlaneseq
        %v2017 = vshrl.u32 %v2016, 7
        %v2018 = vsub.s32 %v892, %v2017
        %v2019 = vrot.slane %v1728, %v2018
        %v2020 = vsel %vm897, %v2019, %v2015
        %v2021 = vlaneseq
        %v2022 = vshrl.u32 %v2021, 7
        %v2023 = vsub.s32 %v887, %v2022
        %v2024 = vrot.slane %v1731, %v2023
        %v2025 = vlaneseq
        %v2026 = vshrl.u32 %v2025, 7
        %v2027 = vsub.s32 %v892, %v2026
        %v2028 = vrot.slane %v1734, %v2027
        %v2029 = vsel %vm897, %v2028, %v2024
        %v2030 = vlaneseq
        %v2031 = vshrl.u32 %v2030, 7
        %v2032 = vsub.s32 %v887, %v2031
        %v2033 = vrot.slane %v1737, %v2032
        %v2034 = vlaneseq
        %v2035 = vshrl.u32 %v2034, 7
        %v2036 = vsub.s32 %v892, %v2035
        %v2037 = vrot.slane %v1740, %v2036
        %v2038 = vsel %vm897, %v2037, %v2033
        %v2039 = vlaneseq
        %v2040 = vshrl.u32 %v2039, 7
        %v2041 = vsub.s32 %v887, %v2040
        %v2042 = vrot.slane %v1743, %v2041
        %v2043 = vlaneseq
        %v2044 = vshrl.u32 %v2043, 7
        %v2045 = vsub.s32 %v892, %v2044
        %v2046 = vrot.slane %v1746, %v2045
        %v2047 = vsel %vm897, %v2046, %v2042
        %v2048 = vsel %vm962, %v1993, %v1984
        %v2049 = vsel %vm964, %v2002, %v2048
        %v2050 = vsel %vm966, %v2011, %v2049
        %v2051 = vsel %vm968, %v2020, %v2050
        %v2052 = vsel %vm970, %v2029, %v2051
        %v2053 = vsel %vm972, %v2038, %v2052
        %v2054 = vsel %vm974, %v2047, %v2053
        %v2056 = vadd.f32 %v1959, %v2054
        %vm2057 = vcmp.gt.f32.partialorder %v2056, 0.0
        %v2058 = vmul.f32 %v2056, 0.2
        %v2059 = vsel %vm2057, %v2056, %v2058
        %v2060 = vsel %vm1121, %v2059, -1e+30
        %v2061 = vsel %vm977, %v2060, -inf
        %2062 = vmax.xlane.f32.xlu0 %v2061
        %v2063 = vpop.xlane.xlu0 %2062
        %v2064 = vsub.f32 %v2060, %v2063
        %v2065 = vmul.f32 %v2064, 1.442695
        %v2066 = vpow.pop %v2065
        %v2067 = vmul.f32 %v2066, %v350
        %v2068 = vsel %vm977, %v2067, 0.0
        %2069 = vadd.xlane.f32.xlu0 %v2068
        %v2070 = vpop.xlane.xlu0 %2069
        %v2071 = vadd.f32 %v2070, 1e-30
        %v2072 = vrcp.pop %v2071
        %v2073 = vmul.f32 %v2067, %v2072
        %v2075 = vsel %vm977, %v2073, 0
        %2077 = vmatprep.subr.mxu0 0.0
        %2078 = vmatpush1.msra.mxu0 %v546
        %2079 = vmatprep.subr.mxu0 0.0
        %2080 = vmatpush1.msra.mxu0 %v551
        %2081 = vmatprep.subr.mxu0 0.0
        %2082 = vmatpush1.msra.mxu0 0.0
        %2083 = vmatprep.subr.mxu0 0.0
        %2084 = vmatpush1.msra.mxu0 0.0
        %2085 = vmatprep.subr.mxu0 0.0
        %2086 = vmatpush1.msra.mxu0 0.0
        %2087 = vmatprep.subr.mxu0 0.0
        %2088 = vmatpush1.msra.mxu0 0.0
        %2089 = vmatprep.subr.mxu0 0.0
        %2090 = vmatpush1.msra.mxu0 0.0
        %2091 = vmatprep.subr.mxu0 0.0
        %2092 = vmatpush1.msra.mxu0 0.0
        %2093 = vmatprep.subr.mxu0 0.0
        %2094 = vmatpush1.msra.mxu0 0.0
        %2095 = vmatprep.subr.mxu0 0.0
        %2096 = vmatpush1.msra.mxu0 0.0
        %2097 = vmatprep.subr.mxu0 0.0
        %2098 = vmatpush1.msra.mxu0 0.0
        %2099 = vmatprep.subr.mxu0 0.0
        %2100 = vmatpush1.msra.mxu0 0.0
        %2101 = vmatprep.subr.mxu0 0.0
        %2102 = vmatpush1.msra.mxu0 0.0
        %2103 = vmatprep.subr.mxu0 0.0
        %2104 = vmatpush1.msra.mxu0 0.0
        %2105 = vmatprep.subr.mxu0 0.0
        %2106 = vmatpush1.msra.mxu0 0.0
        %2107 = vmatprep.subr.mxu0 0.0
        %2108 = vmatpush1.msra.mxu0 0.0
        %2109 = vmatprep.subr.mxu0 0.0
        %2110 = vmatpush1.msra.mxu0 0.0
        %2111 = vmatprep.subr.mxu0 0.0
        %2112 = vmatpush1.msra.mxu0 0.0
        %2113 = vmatprep.subr.mxu0 0.0
        %2114 = vmatpush1.msra.mxu0 0.0
        %2115 = vmatprep.subr.mxu0 0.0
        %2116 = vmatpush1.msra.mxu0 0.0
        %2117 = vmatprep.subr.mxu0 0.0
        %2118 = vmatpush1.msra.mxu0 0.0
        %2119 = vmatprep.subr.mxu0 0.0
        %2120 = vmatpush1.msra.mxu0 0.0
        %2121 = vmatprep.subr.mxu0 0.0
        %2122 = vmatpush1.msra.mxu0 0.0
        %2123 = vmatprep.subr.mxu0 0.0
        %2124 = vmatpush1.msra.mxu0 0.0
        %2125 = vmatprep.subr.mxu0 0.0
        %2126 = vmatpush1.msra.mxu0 0.0
        %2127 = vmatprep.subr.mxu0 0.0
        %2128 = vmatpush1.msra.mxu0 0.0
        %2129 = vmatprep.subr.mxu0 0.0
        %2130 = vmatpush1.msra.mxu0 0.0
        %2131 = vmatprep.subr.mxu0 0.0
        %2132 = vmatpush1.msra.mxu0 0.0
        %2133 = vmatprep.subr.mxu0 0.0
        %2134 = vmatpush1.msra.mxu0 0.0
        %2135 = vmatprep.subr.mxu0 0.0
        %2136 = vmatpush1.msra.mxu0 0.0
        %2137 = vmatprep.subr.mxu0 0.0
        %2138 = vmatpush1.msra.mxu0 0.0
        %2139 = vmatprep.subr.mxu0 0.0
        %2140 = vmatpush1.msra.mxu0 0.0
        %2141 = vmatprep.mubr.f32.mxu0 0.0
        %2142 = vmatmul.mubr.f32.gmra.mrb[0].mxu0 %v2075
        %v2143 = vpop.f32.mrb[0].mxu0
        %v2144 = vadd.f32 0.0, %v2143
        %v2145 = vpop.f32.mrb[0].mxu0
        %2146 = vdwg.mxu0
        %v2147 = vadd.f32 %v1676, %v2144
        %v2148 = vmul.f32 %v2147, 0.33333334
        %2149 = vst [vmem:[%s332] sm:$0xff] %v2148
        %p2150 = scmp.lt.s32.totalorder %s20, 1
        %s2151 = scalar_select %p2150, %s20, 1
        %s2152 = smul.addr %s2151, 8
        %s2153 = scalar_lea.vmem %s7, %s2152
        %s2154 = sand.u32 %s211, 1
        %s2155 = sand.u32 %s211, 1
        %s2156 = smul.addr %s2155, 24
        %s2157 = scalar_lea.vmem [#allocation2], %s2156
        // Predicated region
        $region49: #{model_forward.2} parent=47 // pred_check
          %p2158 = pneg %p195
        $region50: #{model_forward.2} parent=47 // pred_check_branch
          %2160 = sbr.rel (%p2158) target = $region52
        $region51: #{model_forward.2} parent=47 // pred_region
          _
        $region52: #{model_forward.2} parent=47 // pred_fallthru
          _
        // Predicated region
        $region53: #{model_forward.2} parent=47 // pred_check
          %p2161 = pneg %p221
        $region54: #{model_forward.2} parent=47 // pred_check_branch
          %2163 = sbr.rel (%p2161) target = $region56
        $region55: #{model_forward.2} parent=47 // pred_region
          %s2164 = smul.addr %s20, 8
          %s2165 = scalar_lea.vmem %s8, %s2164
          // Predicated region
          $region57: #{model_forward.2} parent=55 // pred_check
            _
          $region58: #{model_forward.2} parent=55 // pred_check_branch
            %2167 = sbr.rel (0) target = $region60
          $region59: #{model_forward.2} parent=55 // pred_region
            // Predicated region
            $region61: #{model_forward.2} parent=59 // pred_check
              _
            $region62: #{model_forward.2} parent=59 // pred_check_branch
              %2169 = sbr.rel (0) target = $region64
            $region63: #{model_forward.2} parent=59 // pred_region
              // Predicated region
              $region76: #{model_forward.2} parent=63 // pred_check
                _
              $region77: #{model_forward.2} parent=63 // pred_check_branch
                %2188 = sbr.rel (0) target = $region79
              $region78: #{model_forward.2} parent=63 // pred_region
                loop: start=0, step=1, limit=1
                $region80: #{model_forward.2} parent=78 // loop_pre_header
                  _
                $region81: #{model_forward.2} parent=78 // loop_header
                  %s2190 = sphi 0, %s2194
                  %p2191 = scmp.ge.s32.totalorder %s2190, 1
                  %s2195 = sphi %s2157, %s2157
                  %s2196 = sphi %s2165, %s2165
                $region82: #{model_forward.2} parent=78 // loop_header_branch
                  %2193 = sbr.rel (%p2191) target = $region86
                $region83: #{model_forward.2} parent=78 // loop_body
                  %v2197 = vld [vmem:[%s2195] sm:$0xff]
                  %2198 = vst [vmem:[%s2196] sm:$0xff] %v2197
                  %v2199 = vld [vmem:[%s2195 + $0x8] sm:$0xff]
                  %2200 = vst [vmem:[%s2196 + $0x10] sm:$0xff] %v2199
                  %v2201 = vld [vmem:[%s2195 + $0x10] sm:$0xff]
                  %2202 = vst [vmem:[%s2196 + $0x20] sm:$0xff] %v2201
                $region84: #{model_forward.2} parent=78 // loop_footer
                  %s2194 = sadd.s32 1, %s2190
                $region85: #{model_forward.2} parent=78 // loop_footer_branch
                  %2189 = sbr.rel target = $region81
                $region86: #{model_forward.2} parent=78 // loop_exit
                  _
              $region79: #{model_forward.2} parent=63 // pred_fallthru
                _
              // Predicated region
              $region87: #{model_forward.2} parent=63 // pred_check
                _
              $region88: #{model_forward.2} parent=63 // pred_check_branch
                %2204 = sbr.rel target = $region90
              $region89: #{model_forward.2} parent=63 // pred_region
                _
              $region90: #{model_forward.2} parent=63 // pred_fallthru
                _
            $region64: #{model_forward.2} parent=59 // pred_fallthru
              _
            // Predicated region
            $region65: #{model_forward.2} parent=59 // pred_check
              _
            $region66: #{model_forward.2} parent=59 // pred_check_branch
              %2171 = sbr.rel target = $region68
            $region67: #{model_forward.2} parent=59 // pred_region
              loop: start=0, step=1, limit=1
              $region69: #{model_forward.2} parent=67 // loop_pre_header
                _
              $region70: #{model_forward.2} parent=67 // loop_header
                %s2174 = sphi 0, %s2178
                %p2175 = scmp.ge.s32.totalorder %s2174, 1
                %s2179 = sphi %s2157, %s2157
                %s2180 = sphi %s2165, %s2165
              $region71: #{model_forward.2} parent=67 // loop_header_branch
                %2177 = sbr.rel (%p2175) target = $region75
              $region72: #{model_forward.2} parent=67 // loop_body
                %v2181 = vld [vmem:[%s2179] sm:$0xff]
                %2182 = vst [vmem:[%s2180] sm:$0xff] %v2181
                %v2183 = vld [vmem:[%s2179 + $0x8] sm:$0xff]
                %2184 = vst [vmem:[%s2180 + $0x10] sm:$0xff] %v2183
                %v2185 = vld [vmem:[%s2179 + $0x10] sm:$0xff]
                %2186 = vst [vmem:[%s2180 + $0x20] sm:$0xff] %v2185
              $region73: #{model_forward.2} parent=67 // loop_footer
                %s2178 = sadd.s32 1, %s2174
              $region74: #{model_forward.2} parent=67 // loop_footer_branch
                %2173 = sbr.rel target = $region70
              $region75: #{model_forward.2} parent=67 // loop_exit
                _
            $region68: #{model_forward.2} parent=59 // pred_fallthru
              _
          $region60: #{model_forward.2} parent=55 // pred_fallthru
            _
          %2205 = vnop
        $region56: #{model_forward.2} parent=47 // pred_fallthru
          _
      $region48: #{model_forward.2} parent=5 // pred_fallthru
        _
      %p2206 = scmp.le.s32.totalorder 2, %s15
      // Predicated region
      $region91: #{model_forward.2} parent=5 // pred_check
        %p2207 = pneg %p2206
      $region92: #{model_forward.2} parent=5 // pred_check_branch
        %2209 = sbr.rel (%p2207) target = $region94
      $region93: #{model_forward.2} parent=5 // pred_region
        %s2210 = ssub.s32 %s15, 2
        // Predicated region
        $region95: #{model_forward.2} parent=93 // pred_check
          %p2211 = pneg %p201
        $region96: #{model_forward.2} parent=93 // pred_check_branch
          %2213 = sbr.rel (%p2211) target = $region98
        $region97: #{model_forward.2} parent=93 // pred_region
          %p2214 = scmp.lt.s32.totalorder %s21, 1
          %s2215 = scalar_select %p2214, %s21, 1
          %s2216 = smul.addr %s2215, 8
          %s2217 = scalar_lea.vmem %s7, %s2216
        $region98: #{model_forward.2} parent=93 // pred_fallthru
          _
        // Predicated region
        $region99: #{model_forward.2} parent=93 // pred_check
          %p2218 = pneg %p227
        $region100: #{model_forward.2} parent=93 // pred_check_branch
          %2220 = sbr.rel (%p2218) target = $region102
        $region101: #{model_forward.2} parent=93 // pred_region
          %s2221 = sand.u32 %s212, 1
          %s2222 = sand.u32 %s212, 1
          %s2223 = smul.addr %s2222, 24
          %s2224 = scalar_lea.vmem [#allocation2], %s2223
        $region102: #{model_forward.2} parent=93 // pred_fallthru
          _
      $region94: #{model_forward.2} parent=5 // pred_fallthru
        _
    $region6: #{model_forward.2} parent=1 // loop_footer
      %s19 = sadd.s32 1, %s15
    $region7: #{model_forward.2} parent=1 // loop_footer_branch
      %14 = sbr.rel target = $region3
    $region8: #{model_forward.2} parent=1 // loop_exit
      _

</llo_original>
